<compile_context>
chip_gen: v6e
topology: v6e:2x2x1
jax: 0.10.0
libtpu: 0.0.40
codegen_flags: <defaults>
</compile_context>

<pallas_src>
import jax
import jax.numpy as jnp
from jax.experimental import pallas as pl
from jax.experimental.pallas import tpu as pltpu

EPS = 1e-5    # PyTorch BatchNorm2d default
LANE = 128


# --------------------------------- kernels ----------------------------------
def _conv1_stats_kernel(x_ref, w1_ref, h1_ref, st_ref):
    """1x1 conv on a (tile, Cin_p) row tile; bf16 h1 out + one (2, Cmid_p) stats store."""
    h = jnp.dot(x_ref[...].astype(w1_ref.dtype), w1_ref[...],
                preferred_element_type=jnp.float32)
    h1_ref[...] = h.astype(h1_ref.dtype)
    st_ref[0] = jnp.concatenate(
        [jnp.sum(h, axis=0, keepdims=True),
         jnp.sum(h * h, axis=0, keepdims=True)], axis=0)


def _conv3x3_stats_kernel(h1_ref, s1_ref, t1_ref, w2_ref,
                          h2_ref, st_ref, pad_ref, col_ref):
    """Per image: BN1+ReLU, 3x3 conv via zero-halo padded scratch + im2col + one MXU
    matmul; emit per-image BN2 partial sums.  Output written directly as (H*W, C)."""
    _, H, W, C = h1_ref.shape
    HW = H * W

    # Zero only the 1-pixel halo; interior is fully overwritten every step.
    pad_ref[0:1, :, :] = jnp.zeros((1, W + 2, C), pad_ref.dtype)
    pad_ref[H + 1:H + 2, :, :] = jnp.zeros((1, W + 2, C), pad_ref.dtype)
    pad_ref[1:H + 1, 0:1, :] = jnp.zeros((H, 1, C), pad_ref.dtype)
    pad_ref[1:H + 1, W + 1:W + 2, :] = jnp.zeros((H, 1, C), pad_ref.dtype)

    sc = s1_ref[...].reshape(1, 1, C)
    sh = t1_ref[...].reshape(1, 1, C)
    y = jnp.maximum(h1_ref[0].astype(jnp.float32) * sc + sh, 0.0)   # BN1 + ReLU (f32)
    pad_ref[1:H + 1, 1:W + 1, :] = y.astype(pad_ref.dtype)

    # im2col: 9 static, lane-aligned (C is a 128-multiple) slices -> (H*W, 9*C) slab.
    for k in range(9):
        ky, kx = k // 3, k % 3
        col_ref[:, k * C:(k + 1) * C] = (
            pad_ref[ky:ky + H, kx:kx + W, :].reshape(HW, C))

    h2 = jnp.dot(col_ref[...], w2_ref[...], preferred_element_type=jnp.float32)
    h2_ref[0] = h2.astype(h2_ref.dtype)             # already (H*W, C): no reshape
    st_ref[0] = jnp.concatenate(
        [jnp.sum(h2, axis=0, keepdims=True),
         jnp.sum(h2 * h2, axis=0, keepdims=True)], axis=0)


def _conv3_stats_kernel(h2_ref, s2_ref, t2_ref, w3_ref, st_ref):
    """BN2+ReLU then 1x1 expansion conv on a row tile; BN3 partial stats only
    (conv3 output is recomputed in the finalize kernel -> no HBM writeback)."""
    z = jnp.maximum(h2_ref[...].astype(jnp.float32) * s2_ref[...] + t2_ref[...], 0.0)
    h3 = jnp.dot(z.astype(w3_ref.dtype), w3_ref[...],
                 preferred_element_type=jnp.float32)
    st_ref[0] = jnp.concatenate(
        [jnp.sum(h3, axis=0, keepdims=True),
         jnp.sum(h3 * h3, axis=0, keepdims=True)], axis=0)


def _finalize_kernel(h2_ref, x_ref, s2_ref, t2_ref, w3_ref, s3_ref, t3_ref, o_ref):
    """Recompute conv3, apply BN3, add identity, final ReLU."""
    z = jnp.maximum(h2_ref[...].astype(jnp.float32) * s2_ref[...] + t2_ref[...], 0.0)
    h3 = jnp.dot(z.astype(w3_ref.dtype), w3_ref[...],
                 preferred_element_type=jnp.float32)
    o_ref[...] = jnp.maximum(h3 * s3_ref[...] + t3_ref[...] + x_ref[...], 0.0
                             ).astype(o_ref.dtype)


# --------------------------------- helpers ----------------------------------
def _round_up(n, m):
    return ((n + m - 1) // m) * m


def _pad_last(a, target):
    pad = target - a.shape[-1]
    if pad == 0:
        return a
    return jnp.pad(a, [(0, 0)] * (a.ndim - 1) + [(0, pad)])


def _pick_row_tile(nrows, cap=1024):
    """Largest multiple-of-8 divisor of nrows <= cap (sublane-aligned blocks)."""
    cap = min(cap, nrows)
    for t in range(cap - cap % 8, 7, -8):
        if nrows % t == 0:
            return t
    # TODO(synk): no 8-aligned divisor (odd N*H*W) -> single whole-tensor block;
    # pad NHW for production sizes.
    return nrows


def _vmem_budget():
    """~75% of physical VMEM (leaves headroom for compiler scratch / double-buffers)."""
    try:
        cap = int(getattr(pltpu.get_tpu_info(), "vmem_capacity_bytes", 0))
    except Exception:
        cap = 0
    if cap <= 0:
        cap = 64 << 20   # conservative fallback (v7x-sized)
    return (cap * 3) // 4


def _compiler_params(block_bytes, scratch_bytes=0):
    need = 2 * block_bytes + scratch_bytes + (8 << 20)   # double-buffer + headroom
    return pltpu.CompilerParams(
        dimension_semantics=("parallel",),
        vmem_limit_bytes=int(min(max(need, 32 << 20), _vmem_budget())))


def _bn_scale_shift(partials, gamma_p, beta_p, count):
    """Fold (sum, sumsq) partials into per-channel scale/shift: y = z*scale + shift.
    gamma/beta are zero-padded, so padded channels get scale=shift=0 (stay zero)."""
    s = jnp.sum(partials[:, 0, :], axis=0)
    ss = jnp.sum(partials[:, 1, :], axis=0)
    mean = s / count
    var = jnp.maximum(ss / count - mean * mean, 0.0)  # biased (training-mode) variance
    # TODO(synk): switch to centered/Welford partial sums for very large N*H*W to
    # avoid E[z^2]-E[z]^2 cancellation.
    scale = gamma_p.astype(jnp.float32) * jax.lax.rsqrt(var + EPS)
    shift = beta_p.astype(jnp.float32) - mean * scale
    return scale.reshape(1, -1), shift.reshape(1, -1)


# --------------------------------- wrappers ---------------------------------
def bottleneck_block_nhwc(x_nhwc, params, *, mm_dtype=jnp.bfloat16, row_tile=None):
    """x_nhwc: (N, H, W, Cin) f32.  Returns (N, H, W, Cin) f32."""
    w1, g1, b1, w2, g2, b2, w3, g3, b3 = params
    N, H, W, Cin = x_nhwc.shape
    Cmid = w1.shape[0]
    Cout = w3.shape[0]
    assert Cout == Cin, "identity residual requires in_channels == out_channels * 4"

    NHW = N * H * W
    tile = row_tile if row_tile is not None else _pick_row_tile(NHW)
    assert NHW % tile == 0, "row tile must divide N*H*W"
    nt = NHW // tile
    f32 = jnp.float32
    isz = 4
    mm_sz = jnp.dtype(mm_dtype).itemsize

    # Lane-dense channel widths (multiples of 128); padded channels are exact zeros.
    Cin_p = _round_up(Cin, LANE)
    Cmid_p = _round_up(Cmid, LANE)
    Cout_p = _round_up(Cout, LANE)

    x2d = _pad_last(x_nhwc.reshape(NHW, Cin).astype(f32), Cin_p)      # (NHW, Cin_p) f32

    # PyTorch (Cout, Cin, kh, kw) conv weights -> zero-padded matmul layouts (one time).
    w1k = jnp.zeros((Cin_p, Cmid_p), mm_dtype).at[:Cin, :Cmid].set(
        jnp.transpose(w1[:, :, 0, 0], (1, 0)).astype(mm_dtype))        # (Cin_p, Cmid_p)
    w2k = jnp.zeros((3, 3, Cmid_p, Cmid_p), mm_dtype).at[:, :, :Cmid, :Cmid].set(
        jnp.transpose(w2, (2, 3, 1, 0)).astype(mm_dtype)
    ).reshape(9 * Cmid_p, Cmid_p)                                      # (9*Cmid_p, Cmid_p)
    w3k = jnp.zeros((Cmid_p, Cout_p), mm_dtype).at[:Cmid, :Cout].set(
        jnp.transpose(w3[:, :, 0, 0], (1, 0)).astype(mm_dtype))        # (Cmid_p, Cout_p)

    g1p, b1p = _pad_last(g1.astype(f32), Cmid_p), _pad_last(b1.astype(f32), Cmid_p)
    g2p, b2p = _pad_last(g2.astype(f32), Cmid_p), _pad_last(b2.astype(f32), Cmid_p)
    g3p, b3p = _pad_last(g3.astype(f32), Cout_p), _pad_last(b3.astype(f32), Cout_p)

    # ---- stage 1: conv1 (1x1) + BN1 partial stats, row-tiled; bf16 h1 to HBM ----
    blk1 = tile * (Cin_p * isz + Cmid_p * mm_sz) + Cin_p * Cmid_p * mm_sz
    h1, st1 = pl.pallas_call(
        _conv1_stats_kernel,
        out_shape=(jax.ShapeDtypeStruct((NHW, Cmid_p), mm_dtype),
                   jax.ShapeDtypeStruct((nt, 2, Cmid_p), f32)),
        grid=(nt,),
        in_specs=[pl.BlockSpec((tile, Cin_p), lambda i: (i, 0)),
                  pl.BlockSpec((Cin_p, Cmid_p), lambda i: (0, 0))],
        out_specs=(pl.BlockSpec((tile, Cmid_p), lambda i: (i, 0)),
                   pl.BlockSpec((1, 2, Cmid_p), lambda i: (i, 0, 0))),
        compiler_params=_compiler_params(blk1),
        cost_estimate=pl.CostEstimate(
            flops=2 * NHW * Cin_p * Cmid_p, transcendentals=0,
            bytes_accessed=NHW * (Cin_p * isz + Cmid_p * mm_sz)),
    )(x2d, w1k)
    s1, t1 = _bn_scale_shift(st1, g1p, b1p, NHW)

    # ---- stage 2: BN1+ReLU, conv2 (3x3 via halo scratch + im2col), BN2 stats ----
    # TODO(synk): on v7x / large Cmid, strip-tile this stage over H for deeper
    # pipelining instead of grid=(N,).
    h1_4d = h1.reshape(N, H, W, Cmid_p)
    scratch2 = ((H + 2) * (W + 2) * Cmid_p + H * W * 9 * Cmid_p) * mm_sz
    blk2 = 2 * H * W * Cmid_p * mm_sz + 9 * Cmid_p * Cmid_p * mm_sz
    h2, st2 = pl.pallas_call(
        _conv3x3_stats_kernel,
        out_shape=(jax.ShapeDtypeStruct((N, H * W, Cmid_p), mm_dtype),
                   jax.ShapeDtypeStruct((N, 2, Cmid_p), f32)),
        grid=(N,),
        in_specs=[pl.BlockSpec((1, H, W, Cmid_p), lambda n: (n, 0, 0, 0)),
                  pl.BlockSpec((1, Cmid_p), lambda n: (0, 0)),
                  pl.BlockSpec((1, Cmid_p), lambda n: (0, 0)),
                  pl.BlockSpec((9 * Cmid_p, Cmid_p), lambda n: (0, 0))],
        out_specs=(pl.BlockSpec((1, H * W, Cmid_p), lambda n: (n, 0, 0)),
                   pl.BlockSpec((1, 2, Cmid_p), lambda n: (n, 0, 0))),
        scratch_shapes=[pltpu.VMEM((H + 2, W + 2, Cmid_p), mm_dtype),
                        pltpu.VMEM((H * W, 9 * Cmid_p), mm_dtype)],
        compiler_params=_compiler_params(blk2, scratch2),
        cost_estimate=pl.CostEstimate(
            flops=2 * NHW * 9 * Cmid_p * Cmid_p, transcendentals=0,
            bytes_accessed=2 * NHW * Cmid_p * mm_sz),
    )(h1_4d, s1, t1, w2k)
    s2, t2 = _bn_scale_shift(st2, g2p, b2p, NHW)

    # ---- stage 3: BN2+ReLU, conv3 (1x1) -> BN3 partial stats only ----
    h2_2d = h2.reshape(NHW, Cmid_p)
    blk3 = tile * Cmid_p * mm_sz + Cmid_p * Cout_p * mm_sz
    st3 = pl.pallas_call(
        _conv3_stats_kernel,
        out_shape=jax.ShapeDtypeStruct((nt, 2, Cout_p), f32),
        grid=(nt,),
        in_specs=[pl.BlockSpec((tile, Cmid_p), lambda i: (i, 0)),
                  pl.BlockSpec((1, Cmid_p), lambda i: (0, 0)),
                  pl.BlockSpec((1, Cmid_p), lambda i: (0, 0)),
                  pl.BlockSpec((Cmid_p, Cout_p), lambda i: (0, 0))],
        out_specs=pl.BlockSpec((1, 2, Cout_p), lambda i: (i, 0, 0)),
        compiler_params=_compiler_params(blk3),
        cost_estimate=pl.CostEstimate(
            flops=2 * NHW * Cmid_p * Cout_p, transcendentals=0,
            bytes_accessed=NHW * Cmid_p * mm_sz),
    )(h2_2d, s2, t2, w3k)
    s3, t3 = _bn_scale_shift(st3, g3p, b3p, NHW)

    # ---- stage 4: recompute conv3, BN3, residual add, final ReLU ----
    blk4 = tile * (Cmid_p * mm_sz + Cin_p * isz + Cout_p * isz) + Cmid_p * Cout_p * mm_sz
    out2d = pl.pallas_call(
        _finalize_kernel,
        out_shape=jax.ShapeDtypeStruct((NHW, Cout_p), f32),
        grid=(nt,),
        in_specs=[pl.BlockSpec((tile, Cmid_p), lambda i: (i, 0)),
                  pl.BlockSpec((tile, Cin_p), lambda i: (i, 0)),
                  pl.BlockSpec((1, Cmid_p), lambda i: (0, 0)),
                  pl.BlockSpec((1, Cmid_p), lambda i: (0, 0)),
                  pl.BlockSpec((Cmid_p, Cout_p), lambda i: (0, 0)),
                  pl.BlockSpec((1, Cout_p), lambda i: (0, 0)),
                  pl.BlockSpec((1, Cout_p), lambda i: (0, 0))],
        out_specs=pl.BlockSpec((tile, Cout_p), lambda i: (i, 0)),
        compiler_params=_compiler_params(blk4),
        cost_estimate=pl.CostEstimate(
            flops=2 * NHW * Cmid_p * Cout_p, transcendentals=0,
            bytes_accessed=NHW * (Cmid_p * mm_sz + (Cin_p + Cout_p) * isz)),
    )(h2_2d, x2d, s2, t2, w3k, s3, t3)

    return out2d[:, :Cout].reshape(N, H, W, Cout)


def bottleneck_block(x_nchw, params, *, mm_dtype=jnp.bfloat16, row_tile=None):
    """PyTorch-layout entry point: (N, Cin, H, W) -> (N, Cin, H, W).

    NOTE: for best performance keep activations NHWC end-to-end and call
    bottleneck_block_nhwc directly (skips the two HBM transpose round trips).
    """
    x = jnp.transpose(x_nchw, (0, 2, 3, 1))
    y = bottleneck_block_nhwc(x, params, mm_dtype=mm_dtype, row_tile=row_tile)
    return jnp.transpose(y, (0, 3, 1, 2))


# ----------------------------- pure-JAX reference ----------------------------
def _ref_forward(x, params):
    w1, g1, b1, w2, g2, b2, w3, g3, b3 = params

    def conv(x, w, pad):
        return jax.lax.conv_general_dilated(
            x, w, (1, 1), [(pad, pad), (pad, pad)],
            dimension_numbers=("NCHW", "OIHW", "NCHW"),
            precision=jax.lax.Precision.HIGHEST)

    def bn(x, g, b):
        mean = x.mean(axis=(0, 2, 3), keepdims=True)
        var = ((x - mean) ** 2).mean(axis=(0, 2, 3), keepdims=True)
        return (x - mean) / jnp.sqrt(var + EPS) * g.reshape(1, -1, 1, 1) \
            + b.reshape(1, -1, 1, 1)

    out = jax.nn.relu(bn(conv(x, w1, 0), g1, b1))
    out = jax.nn.relu(bn(conv(out, w2, 1), g2, b2))
    out = bn(conv(out, w3, 0), g3, b3)
    return jax.nn.relu(out + x)


if __name__ == "__main__":
    # Small config: in_channels=16, out_channels=4 (expansion 4 -> 16), stride=1,
    # downsample=None, batch=2, spatial 8x8.  row_tile=64 -> 2 grid steps per
    # row-tiled stage to exercise the pipeline.
    N, Cin, H, W = 2, 16, 8, 8
    Cmid = 4
    Cout = Cmid * 4  # == Cin

    key = jax.random.PRNGKey(0)
    ks = jax.random.split(key, 10)
    x = jax.random.normal(ks[0], (N, Cin, H, W), jnp.float32)
    w1 = jax.random.normal(ks[1], (Cmid, Cin, 1, 1), jnp.float32) * 0.2
    w2 = jax.random.normal(ks[2], (Cmid, Cmid, 3, 3), jnp.float32) * 0.2
    w3 = jax.random.normal(ks[3], (Cout, Cmid, 1, 1), jnp.float32) * 0.2
    g1 = 1.0 + 0.1 * jax.random.normal(ks[4], (Cmid,), jnp.float32)
    b1 = 0.1 * jax.random.normal(ks[5], (Cmid,), jnp.float32)
    g2 = 1.0 + 0.1 * jax.random.normal(ks[6], (Cmid,), jnp.float32)
    b2 = 0.1 * jax.random.normal(ks[7], (Cmid,), jnp.float32)
    g3 = 1.0 + 0.1 * jax.random.normal(ks[8], (Cout,), jnp.float32)
    b3 = 0.1 * jax.random.normal(ks[9], (Cout,), jnp.float32)
    params = (w1, g1, b1, w2, g2, b2, w3, g3, b3)

    fwd = jax.jit(lambda xx, pp: bottleneck_block(xx, pp, row_tile=64))
    y = jax.block_until_ready(fwd(x, params))

    y_ref = _ref_forward(x, params)
    assert y.shape == (N, Cin, H, W)
    max_diff = float(jnp.max(jnp.abs(y - y_ref)))
    # bf16 matmul operands AND bf16 HBM intermediates (h1/h2) vs f32-HIGHEST reference.
    assert jnp.allclose(y, y_ref, atol=8e-2, rtol=8e-2), f"max abs diff {max_diff}"

    print("KERNEL_OK")
</pallas_src>

<mosaic_0001>
module attributes {stable_mosaic.version = 11 : i64} {
  func.func @_conv1_stats_kernel(%arg0: i32, %arg1: memref<64x128xf32, #tpu.memory_space<vmem>>, %arg2: memref<128x128xbf16, #tpu.memory_space<vmem>>, %arg3: memref<64x128xbf16, #tpu.memory_space<vmem>>, %arg4: memref<1x2x128xf32, #tpu.memory_space<vmem>>) attributes {dimension_semantics = [#tpu.dimension_semantics<parallel>], iteration_bounds = array<i64: 2>, scalar_prefetch = 0 : i64, scratch_operands = 0 : i64, tpu.core_type = #tpu.core_type<tc>, window_params = [{transform_indices = @transform_0, window_bounds = array<i64: 64, 128>}, {pipeline_mode = #tpu.pipeline_mode<synchronous>, transform_indices = @transform_1, window_bounds = array<i64: 128, 128>}, {transform_indices = @transform_2, window_bounds = array<i64: 64, 128>}, {transform_indices = @transform_3, window_bounds = array<i64: 1, 2, 128>}]} {
    %c0 = arith.constant 0 : index
    %c0_0 = arith.constant 0 : index
    %0 = vector.load %arg1[%c0, %c0_0] : memref<64x128xf32, #tpu.memory_space<vmem>>, vector<64x128xf32>
    %1 = arith.truncf %0 : vector<64x128xf32> to vector<64x128xbf16>
    %c0_1 = arith.constant 0 : index
    %c0_2 = arith.constant 0 : index
    %2 = vector.load %arg2[%c0_1, %c0_2] : memref<128x128xbf16, #tpu.memory_space<vmem>>, vector<128x128xbf16>
    %cst = arith.constant dense<0.000000e+00> : vector<64x128xf32>
    %3 = tpu.matmul %1, %2, %cst {dimension_numbers = #tpu.dot_dimension_numbers<[1], [0], [0], [1], [0, 0, 1, 1], [], []>} : vector<64x128xbf16>, vector<128x128xbf16>, vector<64x128xf32> -> vector<64x128xf32>
    %4 = arith.truncf %3 : vector<64x128xf32> to vector<64x128xbf16>
    %c0_3 = arith.constant 0 : index
    %c0_4 = arith.constant 0 : index
    %5 = vector.load %arg3[%c0_3, %c0_4] : memref<64x128xbf16, #tpu.memory_space<vmem>>, vector<64x128xbf16>
    tpu.vector_store %arg3[%c0_3, %c0_4], %4 {strides = array<i32>} : memref<64x128xbf16, #tpu.memory_space<vmem>>, vector<64x128xbf16>,
    %cst_5 = arith.constant dense<0.000000e+00> : vector<128xf32>
    %6 = vector.multi_reduction <add>, %3, %cst_5 [0] : vector<64x128xf32> to vector<128xf32>
    %7 = vector.shape_cast %6 : vector<128xf32> to vector<1x128xf32>
    %8 = arith.mulf %3, %3 : vector<64x128xf32>
    %cst_6 = arith.constant dense<0.000000e+00> : vector<128xf32>
    %9 = vector.multi_reduction <add>, %8, %cst_6 [0] : vector<64x128xf32> to vector<128xf32>
    %10 = vector.shape_cast %9 : vector<128xf32> to vector<1x128xf32>
    %11 = tpu.concatenate %7, %10 in 0 : vector<1x128xf32>, vector<1x128xf32> -> vector<2x128xf32>
    %c0_7 = arith.constant 0 : index
    %c0_8 = arith.constant 0 : index
    %c0_9 = arith.constant 0 : index
    %12 = vector.load %arg4[%c0_7, %c0_8, %c0_9] : memref<1x2x128xf32, #tpu.memory_space<vmem>>, vector<1x2x128xf32>
    %13 = vector.shape_cast %12 : vector<1x2x128xf32> to vector<2x128xf32>
    %14 = vector.shape_cast %11 : vector<2x128xf32> to vector<1x2x128xf32>
    tpu.vector_store %arg4[%c0_7, %c0_8, %c0_9], %14 {strides = array<i32>} : memref<1x2x128xf32, #tpu.memory_space<vmem>>, vector<1x2x128xf32>,
    return
  }
  func.func @transform_0(%arg0: i32) -> (i32, i32) {
    %c0_i32 = arith.constant 0 : i32
    %c0_i32_0 = arith.constant 0 : i32
    return %arg0, %c0_i32 : i32, i32
  }
  func.func @transform_1(%arg0: i32) -> (i32, i32) {
    %c0_i32 = arith.constant 0 : i32
    %c0_i32_0 = arith.constant 0 : i32
    %c0_i32_1 = arith.constant 0 : i32
    return %c0_i32, %c0_i32_0 : i32, i32
  }
  func.func @transform_2(%arg0: i32) -> (i32, i32) {
    %c0_i32 = arith.constant 0 : i32
    %c0_i32_0 = arith.constant 0 : i32
    return %arg0, %c0_i32 : i32, i32
  }
  func.func @transform_3(%arg0: i32) -> (i32, i32, i32) {
    %c0_i32 = arith.constant 0 : i32
    %c0_i32_0 = arith.constant 0 : i32
    %c0_i32_1 = arith.constant 0 : i32
    return %arg0, %c0_i32, %c0_i32_0 : i32, i32, i32
  }
}

module attributes {stable_mosaic.version = 11 : i64} {
  func.func @_conv3x3_stats_kernel(%arg0: i32, %arg1: memref<1x8x8x128xbf16, #tpu.memory_space<vmem>>, %arg2: memref<1x128xf32, #tpu.memory_space<vmem>>, %arg3: memref<1x128xf32, #tpu.memory_space<vmem>>, %arg4: memref<1152x128xbf16, #tpu.memory_space<vmem>>, %arg5: memref<1x64x128xbf16, #tpu.memory_space<vmem>>, %arg6: memref<1x2x128xf32, #tpu.memory_space<vmem>>, %arg7: memref<10x10x128xbf16, #tpu.memory_space<vmem>>, %arg8: memref<64x1152xbf16, #tpu.memory_space<vmem>>) attributes {dimension_semantics = [#tpu.dimension_semantics<parallel>], iteration_bounds = array<i64: 2>, scalar_prefetch = 0 : i64, scratch_operands = 2 : i64, tpu.core_type = #tpu.core_type<tc>, window_params = [{transform_indices = @transform_0, window_bounds = array<i64: 1, 8, 8, 128>}, {pipeline_mode = #tpu.pipeline_mode<synchronous>, transform_indices = @transform_1, window_bounds = array<i64: 1, 128>}, {pipeline_mode = #tpu.pipeline_mode<synchronous>, transform_indices = @transform_2, window_bounds = array<i64: 1, 128>}, {pipeline_mode = #tpu.pipeline_mode<synchronous>, transform_indices = @transform_3, window_bounds = array<i64: 1152, 128>}, {transform_indices = @transform_4, window_bounds = array<i64: 1, 64, 128>}, {transform_indices = @transform_5, window_bounds = array<i64: 1, 2, 128>}]} {
    %cst = arith.constant 0.000000e+00 : bf16
    %0 = vector.broadcast %cst : bf16 to vector<1x10x128xbf16>
    %c0 = arith.constant 0 : index
    %c0_0 = arith.constant 0 : index
    %c0_1 = arith.constant 0 : index
    %1 = vector.load %arg7[%c0, %c0_0, %c0_1] : memref<10x10x128xbf16, #tpu.memory_space<vmem>>, vector<1x10x128xbf16>
    tpu.vector_store %arg7[%c0, %c0_0, %c0_1], %0 {strides = array<i32>} : memref<10x10x128xbf16, #tpu.memory_space<vmem>>, vector<1x10x128xbf16>,
    %cst_2 = arith.constant 0.000000e+00 : bf16
    %2 = vector.broadcast %cst_2 : bf16 to vector<1x10x128xbf16>
    %c9 = arith.constant 9 : index
    %c0_3 = arith.constant 0 : index
    %c0_4 = arith.constant 0 : index
    %3 = vector.load %arg7[%c9, %c0_3, %c0_4] : memref<10x10x128xbf16, #tpu.memory_space<vmem>>, vector<1x10x128xbf16>
    tpu.vector_store %arg7[%c9, %c0_3, %c0_4], %2 {strides = array<i32>} : memref<10x10x128xbf16, #tpu.memory_space<vmem>>, vector<1x10x128xbf16>,
    %cst_5 = arith.constant 0.000000e+00 : bf16
    %4 = vector.broadcast %cst_5 : bf16 to vector<8x1x128xbf16>
    %c1 = arith.constant 1 : index
    %c0_6 = arith.constant 0 : index
    %c0_7 = arith.constant 0 : index
    %5 = vector.load %arg7[%c1, %c0_6, %c0_7] : memref<10x10x128xbf16, #tpu.memory_space<vmem>>, vector<8x1x128xbf16>
    tpu.vector_store %arg7[%c1, %c0_6, %c0_7], %4 {strides = array<i32>} : memref<10x10x128xbf16, #tpu.memory_space<vmem>>, vector<8x1x128xbf16>,
    %cst_8 = arith.constant 0.000000e+00 : bf16
    %6 = vector.broadcast %cst_8 : bf16 to vector<8x1x128xbf16>
    %c1_9 = arith.constant 1 : index
    %c9_10 = arith.constant 9 : index
    %c0_11 = arith.constant 0 : index
    %7 = vector.load %arg7[%c1_9, %c9_10, %c0_11] : memref<10x10x128xbf16, #tpu.memory_space<vmem>>, vector<8x1x128xbf16>
    tpu.vector_store %arg7[%c1_9, %c9_10, %c0_11], %6 {strides = array<i32>} : memref<10x10x128xbf16, #tpu.memory_space<vmem>>, vector<8x1x128xbf16>,
    %c0_12 = arith.constant 0 : index
    %c0_13 = arith.constant 0 : index
    %8 = vector.load %arg2[%c0_12, %c0_13] : memref<1x128xf32, #tpu.memory_space<vmem>>, vector<1x128xf32>
    %9 = vector.shape_cast %8 : vector<1x128xf32> to vector<1x1x128xf32>
    %c0_14 = arith.constant 0 : index
    %c0_15 = arith.constant 0 : index
    %10 = vector.load %arg3[%c0_14, %c0_15] : memref<1x128xf32, #tpu.memory_space<vmem>>, vector<1x128xf32>
    %11 = vector.shape_cast %10 : vector<1x128xf32> to vector<1x1x128xf32>
    %c0_16 = arith.constant 0 : index
    %c0_17 = arith.constant 0 : index
    %c0_18 = arith.constant 0 : index
    %c0_19 = arith.constant 0 : index
    %12 = vector.load %arg1[%c0_16, %c0_17, %c0_18, %c0_19] : memref<1x8x8x128xbf16, #tpu.memory_space<vmem>>, vector<1x8x8x128xbf16>
    %13 = vector.shape_cast %12 : vector<1x8x8x128xbf16> to vector<8x8x128xbf16>
    %14 = arith.extf %13 : vector<8x8x128xbf16> to vector<8x8x128xf32>
    %15 = vector.broadcast %9 : vector<1x1x128xf32> to vector<8x8x128xf32>
    %16 = arith.mulf %14, %15 : vector<8x8x128xf32>
    %17 = vector.broadcast %11 : vector<1x1x128xf32> to vector<8x8x128xf32>
    %18 = arith.addf %16, %17 : vector<8x8x128xf32>
    %cst_20 = arith.constant 0.000000e+00 : f32
    %19 = vector.broadcast %cst_20 : f32 to vector<8x8x128xf32>
    %20 = arith.maximumf %18, %19 : vector<8x8x128xf32>
    %21 = arith.truncf %20 : vector<8x8x128xf32> to vector<8x8x128xbf16>
    %c1_21 = arith.constant 1 : index
    %c1_22 = arith.constant 1 : index
    %c0_23 = arith.constant 0 : index
    %22 = vector.load %arg7[%c1_21, %c1_22, %c0_23] : memref<10x10x128xbf16, #tpu.memory_space<vmem>>, vector<8x8x128xbf16>
    tpu.vector_store %arg7[%c1_21, %c1_22, %c0_23], %21 {strides = array<i32>} : memref<10x10x128xbf16, #tpu.memory_space<vmem>>, vector<8x8x128xbf16>,
    %c0_24 = arith.constant 0 : index
    %c0_25 = arith.constant 0 : index
    %c0_26 = arith.constant 0 : index
    %23 = vector.load %arg7[%c0_24, %c0_25, %c0_26] : memref<10x10x128xbf16, #tpu.memory_space<vmem>>, vector<8x8x128xbf16>
    %24 = vector.shape_cast %23 : vector<8x8x128xbf16> to vector<64x128xbf16>
    %c0_27 = arith.constant 0 : index
    %c0_28 = arith.constant 0 : index
    %25 = vector.load %arg8[%c0_27, %c0_28] : memref<64x1152xbf16, #tpu.memory_space<vmem>>, vector<64x128xbf16>
    tpu.vector_store %arg8[%c0_27, %c0_28], %24 {strides = array<i32>} : memref<64x1152xbf16, #tpu.memory_space<vmem>>, vector<64x128xbf16>,
    %c0_29 = arith.constant 0 : index
    %c1_30 = arith.constant 1 : index
    %c0_31 = arith.constant 0 : index
    %26 = vector.load %arg7[%c0_29, %c1_30, %c0_31] : memref<10x10x128xbf16, #tpu.memory_space<vmem>>, vector<8x8x128xbf16>
    %27 = vector.shape_cast %26 : vector<8x8x128xbf16> to vector<64x128xbf16>
    %c0_32 = arith.constant 0 : index
    %c128 = arith.constant 128 : index
    %28 = vector.load %arg8[%c0_32, %c128] : memref<64x1152xbf16, #tpu.memory_space<vmem>>, vector<64x128xbf16>
    tpu.vector_store %arg8[%c0_32, %c128], %27 {strides = array<i32>} : memref<64x1152xbf16, #tpu.memory_space<vmem>>, vector<64x128xbf16>,
    %c0_33 = arith.constant 0 : index
    %c2 = arith.constant 2 : index
    %c0_34 = arith.constant 0 : index
    %29 = vector.load %arg7[%c0_33, %c2, %c0_34] : memref<10x10x128xbf16, #tpu.memory_space<vmem>>, vector<8x8x128xbf16>
    %30 = vector.shape_cast %29 : vector<8x8x128xbf16> to vector<64x128xbf16>
    %c0_35 = arith.constant 0 : index
    %c256 = arith.constant 256 : index
    %31 = vector.load %arg8[%c0_35, %c256] : memref<64x1152xbf16, #tpu.memory_space<vmem>>, vector<64x128xbf16>
    tpu.vector_store %arg8[%c0_35, %c256], %30 {strides = array<i32>} : memref<64x1152xbf16, #tpu.memory_space<vmem>>, vector<64x128xbf16>,
    %c1_36 = arith.constant 1 : index
    %c0_37 = arith.constant 0 : index
    %c0_38 = arith.constant 0 : index
    %32 = vector.load %arg7[%c1_36, %c0_37, %c0_38] : memref<10x10x128xbf16, #tpu.memory_space<vmem>>, vector<8x8x128xbf16>
    %33 = vector.shape_cast %32 : vector<8x8x128xbf16> to vector<64x128xbf16>
    %c0_39 = arith.constant 0 : index
    %c384 = arith.constant 384 : index
    %34 = vector.load %arg8[%c0_39, %c384] : memref<64x1152xbf16, #tpu.memory_space<vmem>>, vector<64x128xbf16>
    tpu.vector_store %arg8[%c0_39, %c384], %33 {strides = array<i32>} : memref<64x1152xbf16, #tpu.memory_space<vmem>>, vector<64x128xbf16>,
    %c1_40 = arith.constant 1 : index
    %c1_41 = arith.constant 1 : index
    %c0_42 = arith.constant 0 : index
    %35 = vector.load %arg7[%c1_40, %c1_41, %c0_42] : memref<10x10x128xbf16, #tpu.memory_space<vmem>>, vector<8x8x128xbf16>
    %36 = vector.shape_cast %35 : vector<8x8x128xbf16> to vector<64x128xbf16>
    %c0_43 = arith.constant 0 : index
    %c512 = arith.constant 512 : index
    %37 = vector.load %arg8[%c0_43, %c512] : memref<64x1152xbf16, #tpu.memory_space<vmem>>, vector<64x128xbf16>
    tpu.vector_store %arg8[%c0_43, %c512], %36 {strides = array<i32>} : memref<64x1152xbf16, #tpu.memory_space<vmem>>, vector<64x128xbf16>,
    %c1_44 = arith.constant 1 : index
    %c2_45 = arith.constant 2 : index
    %c0_46 = arith.constant 0 : index
    %38 = vector.load %arg7[%c1_44, %c2_45, %c0_46] : memref<10x10x128xbf16, #tpu.memory_space<vmem>>, vector<8x8x128xbf16>
    %39 = vector.shape_cast %38 : vector<8x8x128xbf16> to vector<64x128xbf16>
    %c0_47 = arith.constant 0 : index
    %c640 = arith.constant 640 : index
    %40 = vector.load %arg8[%c0_47, %c640] : memref<64x1152xbf16, #tpu.memory_space<vmem>>, vector<64x128xbf16>
    tpu.vector_store %arg8[%c0_47, %c640], %39 {strides = array<i32>} : memref<64x1152xbf16, #tpu.memory_space<vmem>>, vector<64x128xbf16>,
    %c2_48 = arith.constant 2 : index
    %c0_49 = arith.constant 0 : index
    %c0_50 = arith.constant 0 : index
    %41 = vector.load %arg7[%c2_48, %c0_49, %c0_50] : memref<10x10x128xbf16, #tpu.memory_space<vmem>>, vector<8x8x128xbf16>
    %42 = vector.shape_cast %41 : vector<8x8x128xbf16> to vector<64x128xbf16>
    %c0_51 = arith.constant 0 : index
    %c768 = arith.constant 768 : index
    %43 = vector.load %arg8[%c0_51, %c768] : memref<64x1152xbf16, #tpu.memory_space<vmem>>, vector<64x128xbf16>
    tpu.vector_store %arg8[%c0_51, %c768], %42 {strides = array<i32>} : memref<64x1152xbf16, #tpu.memory_space<vmem>>, vector<64x128xbf16>,
    %c2_52 = arith.constant 2 : index
    %c1_53 = arith.constant 1 : index
    %c0_54 = arith.constant 0 : index
    %44 = vector.load %arg7[%c2_52, %c1_53, %c0_54] : memref<10x10x128xbf16, #tpu.memory_space<vmem>>, vector<8x8x128xbf16>
    %45 = vector.shape_cast %44 : vector<8x8x128xbf16> to vector<64x128xbf16>
    %c0_55 = arith.constant 0 : index
    %c896 = arith.constant 896 : index
    %46 = vector.load %arg8[%c0_55, %c896] : memref<64x1152xbf16, #tpu.memory_space<vmem>>, vector<64x128xbf16>
    tpu.vector_store %arg8[%c0_55, %c896], %45 {strides = array<i32>} : memref<64x1152xbf16, #tpu.memory_space<vmem>>, vector<64x128xbf16>,
    %c2_56 = arith.constant 2 : index
    %c2_57 = arith.constant 2 : index
    %c0_58 = arith.constant 0 : index
    %47 = vector.load %arg7[%c2_56, %c2_57, %c0_58] : memref<10x10x128xbf16, #tpu.memory_space<vmem>>, vector<8x8x128xbf16>
    %48 = vector.shape_cast %47 : vector<8x8x128xbf16> to vector<64x128xbf16>
    %c0_59 = arith.constant 0 : index
    %c1024 = arith.constant 1024 : index
    %49 = vector.load %arg8[%c0_59, %c1024] : memref<64x1152xbf16, #tpu.memory_space<vmem>>, vector<64x128xbf16>
    tpu.vector_store %arg8[%c0_59, %c1024], %48 {strides = array<i32>} : memref<64x1152xbf16, #tpu.memory_space<vmem>>, vector<64x128xbf16>,
    %c0_60 = arith.constant 0 : index
    %c0_61 = arith.constant 0 : index
    %50 = vector.load %arg8[%c0_60, %c0_61] : memref<64x1152xbf16, #tpu.memory_space<vmem>>, vector<64x1152xbf16>
    %c0_62 = arith.constant 0 : index
    %c0_63 = arith.constant 0 : index
    %51 = vector.load %arg4[%c0_62, %c0_63] : memref<1152x128xbf16, #tpu.memory_space<vmem>>, vector<1152x128xbf16>
    %cst_64 = arith.constant dense<0.000000e+00> : vector<64x128xf32>
    %52 = tpu.matmul %50, %51, %cst_64 {dimension_numbers = #tpu.dot_dimension_numbers<[1], [0], [0], [1], [0, 0, 1, 1], [], []>} : vector<64x1152xbf16>, vector<1152x128xbf16>, vector<64x128xf32> -> vector<64x128xf32>
    %53 = arith.truncf %52 : vector<64x128xf32> to vector<64x128xbf16>
    %c0_65 = arith.constant 0 : index
    %c0_66 = arith.constant 0 : index
    %c0_67 = arith.constant 0 : index
    %54 = vector.load %arg5[%c0_65, %c0_66, %c0_67] : memref<1x64x128xbf16, #tpu.memory_space<vmem>>, vector<1x64x128xbf16>
    %55 = vector.shape_cast %54 : vector<1x64x128xbf16> to vector<64x128xbf16>
    %56 = vector.shape_cast %53 : vector<64x128xbf16> to vector<1x64x128xbf16>
    tpu.vector_store %arg5[%c0_65, %c0_66, %c0_67], %56 {strides = array<i32>} : memref<1x64x128xbf16, #tpu.memory_space<vmem>>, vector<1x64x128xbf16>,
    %cst_68 = arith.constant dense<0.000000e+00> : vector<128xf32>
    %57 = vector.multi_reduction <add>, %52, %cst_68 [0] : vector<64x128xf32> to vector<128xf32>
    %58 = vector.shape_cast %57 : vector<128xf32> to vector<1x128xf32>
    %59 = arith.mulf %52, %52 : vector<64x128xf32>
    %cst_69 = arith.constant dense<0.000000e+00> : vector<128xf32>
    %60 = vector.multi_reduction <add>, %59, %cst_69 [0] : vector<64x128xf32> to vector<128xf32>
    %61 = vector.shape_cast %60 : vector<128xf32> to vector<1x128xf32>
    %62 = tpu.concatenate %58, %61 in 0 : vector<1x128xf32>, vector<1x128xf32> -> vector<2x128xf32>
    %c0_70 = arith.constant 0 : index
    %c0_71 = arith.constant 0 : index
    %c0_72 = arith.constant 0 : index
    %63 = vector.load %arg6[%c0_70, %c0_71, %c0_72] : memref<1x2x128xf32, #tpu.memory_space<vmem>>, vector<1x2x128xf32>
    %64 = vector.shape_cast %63 : vector<1x2x128xf32> to vector<2x128xf32>
    %65 = vector.shape_cast %62 : vector<2x128xf32> to vector<1x2x128xf32>
    tpu.vector_store %arg6[%c0_70, %c0_71, %c0_72], %65 {strides = array<i32>} : memref<1x2x128xf32, #tpu.memory_space<vmem>>, vector<1x2x128xf32>,
    return
  }
  func.func @transform_0(%arg0: i32) -> (i32, i32, i32, i32) {
    %c0_i32 = arith.constant 0 : i32
    %c0_i32_0 = arith.constant 0 : i32
    %c0_i32_1 = arith.constant 0 : i32
    %c0_i32_2 = arith.constant 0 : i32
    return %arg0, %c0_i32, %c0_i32_0, %c0_i32_1 : i32, i32, i32, i32
  }
  func.func @transform_1(%arg0: i32) -> (i32, i32) {
    %c0_i32 = arith.constant 0 : i32
    %c0_i32_0 = arith.constant 0 : i32
    %c0_i32_1 = arith.constant 0 : i32
    return %c0_i32, %c0_i32_0 : i32, i32
  }
  func.func @transform_2(%arg0: i32) -> (i32, i32) {
    %c0_i32 = arith.constant 0 : i32
    %c0_i32_0 = arith.constant 0 : i32
    %c0_i32_1 = arith.constant 0 : i32
    return %c0_i32, %c0_i32_0 : i32, i32
  }
  func.func @transform_3(%arg0: i32) -> (i32, i32) {
    %c0_i32 = arith.constant 0 : i32
    %c0_i32_0 = arith.constant 0 : i32
    %c0_i32_1 = arith.constant 0 : i32
    return %c0_i32, %c0_i32_0 : i32, i32
  }
  func.func @transform_4(%arg0: i32) -> (i32, i32, i32) {
    %c0_i32 = arith.constant 0 : i32
    %c0_i32_0 = arith.constant 0 : i32
    %c0_i32_1 = arith.constant 0 : i32
    return %arg0, %c0_i32, %c0_i32_0 : i32, i32, i32
  }
  func.func @transform_5(%arg0: i32) -> (i32, i32, i32) {
    %c0_i32 = arith.constant 0 : i32
    %c0_i32_0 = arith.constant 0 : i32
    %c0_i32_1 = arith.constant 0 : i32
    return %arg0, %c0_i32, %c0_i32_0 : i32, i32, i32
  }
}

module attributes {stable_mosaic.version = 11 : i64} {
  func.func @_conv3_stats_kernel(%arg0: i32, %arg1: memref<64x128xbf16, #tpu.memory_space<vmem>>, %arg2: memref<1x128xf32, #tpu.memory_space<vmem>>, %arg3: memref<1x128xf32, #tpu.memory_space<vmem>>, %arg4: memref<128x128xbf16, #tpu.memory_space<vmem>>, %arg5: memref<1x2x128xf32, #tpu.memory_space<vmem>>) attributes {dimension_semantics = [#tpu.dimension_semantics<parallel>], iteration_bounds = array<i64: 2>, scalar_prefetch = 0 : i64, scratch_operands = 0 : i64, tpu.core_type = #tpu.core_type<tc>, window_params = [{transform_indices = @transform_0, window_bounds = array<i64: 64, 128>}, {pipeline_mode = #tpu.pipeline_mode<synchronous>, transform_indices = @transform_1, window_bounds = array<i64: 1, 128>}, {pipeline_mode = #tpu.pipeline_mode<synchronous>, transform_indices = @transform_2, window_bounds = array<i64: 1, 128>}, {pipeline_mode = #tpu.pipeline_mode<synchronous>, transform_indices = @transform_3, window_bounds = array<i64: 128, 128>}, {transform_indices = @transform_4, window_bounds = array<i64: 1, 2, 128>}]} {
    %c0 = arith.constant 0 : index
    %c0_0 = arith.constant 0 : index
    %0 = vector.load %arg1[%c0, %c0_0] : memref<64x128xbf16, #tpu.memory_space<vmem>>, vector<64x128xbf16>
    %1 = arith.extf %0 : vector<64x128xbf16> to vector<64x128xf32>
    %c0_1 = arith.constant 0 : index
    %c0_2 = arith.constant 0 : index
    %2 = vector.load %arg2[%c0_1, %c0_2] : memref<1x128xf32, #tpu.memory_space<vmem>>, vector<1x128xf32>
    %3 = vector.broadcast %2 : vector<1x128xf32> to vector<64x128xf32>
    %4 = arith.mulf %1, %3 : vector<64x128xf32>
    %c0_3 = arith.constant 0 : index
    %c0_4 = arith.constant 0 : index
    %5 = vector.load %arg3[%c0_3, %c0_4] : memref<1x128xf32, #tpu.memory_space<vmem>>, vector<1x128xf32>
    %6 = vector.broadcast %5 : vector<1x128xf32> to vector<64x128xf32>
    %7 = arith.addf %4, %6 : vector<64x128xf32>
    %cst = arith.constant 0.000000e+00 : f32
    %8 = vector.broadcast %cst : f32 to vector<64x128xf32>
    %9 = arith.maximumf %7, %8 : vector<64x128xf32>
    %10 = arith.truncf %9 : vector<64x128xf32> to vector<64x128xbf16>
    %c0_5 = arith.constant 0 : index
    %c0_6 = arith.constant 0 : index
    %11 = vector.load %arg4[%c0_5, %c0_6] : memref<128x128xbf16, #tpu.memory_space<vmem>>, vector<128x128xbf16>
    %cst_7 = arith.constant dense<0.000000e+00> : vector<64x128xf32>
    %12 = tpu.matmul %10, %11, %cst_7 {dimension_numbers = #tpu.dot_dimension_numbers<[1], [0], [0], [1], [0, 0, 1, 1], [], []>} : vector<64x128xbf16>, vector<128x128xbf16>, vector<64x128xf32> -> vector<64x128xf32>
    %cst_8 = arith.constant dense<0.000000e+00> : vector<128xf32>
    %13 = vector.multi_reduction <add>, %12, %cst_8 [0] : vector<64x128xf32> to vector<128xf32>
    %14 = vector.shape_cast %13 : vector<128xf32> to vector<1x128xf32>
    %15 = arith.mulf %12, %12 : vector<64x128xf32>
    %cst_9 = arith.constant dense<0.000000e+00> : vector<128xf32>
    %16 = vector.multi_reduction <add>, %15, %cst_9 [0] : vector<64x128xf32> to vector<128xf32>
    %17 = vector.shape_cast %16 : vector<128xf32> to vector<1x128xf32>
    %18 = tpu.concatenate %14, %17 in 0 : vector<1x128xf32>, vector<1x128xf32> -> vector<2x128xf32>
    %c0_10 = arith.constant 0 : index
    %c0_11 = arith.constant 0 : index
    %c0_12 = arith.constant 0 : index
    %19 = vector.load %arg5[%c0_10, %c0_11, %c0_12] : memref<1x2x128xf32, #tpu.memory_space<vmem>>, vector<1x2x128xf32>
    %20 = vector.shape_cast %19 : vector<1x2x128xf32> to vector<2x128xf32>
    %21 = vector.shape_cast %18 : vector<2x128xf32> to vector<1x2x128xf32>
    tpu.vector_store %arg5[%c0_10, %c0_11, %c0_12], %21 {strides = array<i32>} : memref<1x2x128xf32, #tpu.memory_space<vmem>>, vector<1x2x128xf32>,
    return
  }
  func.func @transform_0(%arg0: i32) -> (i32, i32) {
    %c0_i32 = arith.constant 0 : i32
    %c0_i32_0 = arith.constant 0 : i32
    return %arg0, %c0_i32 : i32, i32
  }
  func.func @transform_1(%arg0: i32) -> (i32, i32) {
    %c0_i32 = arith.constant 0 : i32
    %c0_i32_0 = arith.constant 0 : i32
    %c0_i32_1 = arith.constant 0 : i32
    return %c0_i32, %c0_i32_0 : i32, i32
  }
  func.func @transform_2(%arg0: i32) -> (i32, i32) {
    %c0_i32 = arith.constant 0 : i32
    %c0_i32_0 = arith.constant 0 : i32
    %c0_i32_1 = arith.constant 0 : i32
    return %c0_i32, %c0_i32_0 : i32, i32
  }
  func.func @transform_3(%arg0: i32) -> (i32, i32) {
    %c0_i32 = arith.constant 0 : i32
    %c0_i32_0 = arith.constant 0 : i32
    %c0_i32_1 = arith.constant 0 : i32
    return %c0_i32, %c0_i32_0 : i32, i32
  }
  func.func @transform_4(%arg0: i32) -> (i32, i32, i32) {
    %c0_i32 = arith.constant 0 : i32
    %c0_i32_0 = arith.constant 0 : i32
    %c0_i32_1 = arith.constant 0 : i32
    return %arg0, %c0_i32, %c0_i32_0 : i32, i32, i32
  }
}

module attributes {stable_mosaic.version = 11 : i64} {
  func.func @_finalize_kernel(%arg0: i32, %arg1: memref<64x128xbf16, #tpu.memory_space<vmem>>, %arg2: memref<64x128xf32, #tpu.memory_space<vmem>>, %arg3: memref<1x128xf32, #tpu.memory_space<vmem>>, %arg4: memref<1x128xf32, #tpu.memory_space<vmem>>, %arg5: memref<128x128xbf16, #tpu.memory_space<vmem>>, %arg6: memref<1x128xf32, #tpu.memory_space<vmem>>, %arg7: memref<1x128xf32, #tpu.memory_space<vmem>>, %arg8: memref<64x128xf32, #tpu.memory_space<vmem>>) attributes {dimension_semantics = [#tpu.dimension_semantics<parallel>], iteration_bounds = array<i64: 2>, scalar_prefetch = 0 : i64, scratch_operands = 0 : i64, tpu.core_type = #tpu.core_type<tc>, window_params = [{transform_indices = @transform_0, window_bounds = array<i64: 64, 128>}, {transform_indices = @transform_1, window_bounds = array<i64: 64, 128>}, {pipeline_mode = #tpu.pipeline_mode<synchronous>, transform_indices = @transform_2, window_bounds = array<i64: 1, 128>}, {pipeline_mode = #tpu.pipeline_mode<synchronous>, transform_indices = @transform_3, window_bounds = array<i64: 1, 128>}, {pipeline_mode = #tpu.pipeline_mode<synchronous>, transform_indices = @transform_4, window_bounds = array<i64: 128, 128>}, {pipeline_mode = #tpu.pipeline_mode<synchronous>, transform_indices = @transform_5, window_bounds = array<i64: 1, 128>}, {pipeline_mode = #tpu.pipeline_mode<synchronous>, transform_indices = @transform_6, window_bounds = array<i64: 1, 128>}, {transform_indices = @transform_7, window_bounds = array<i64: 64, 128>}]} {
    %c0 = arith.constant 0 : index
    %c0_0 = arith.constant 0 : index
    %0 = vector.load %arg1[%c0, %c0_0] : memref<64x128xbf16, #tpu.memory_space<vmem>>, vector<64x128xbf16>
    %1 = arith.extf %0 : vector<64x128xbf16> to vector<64x128xf32>
    %c0_1 = arith.constant 0 : index
    %c0_2 = arith.constant 0 : index
    %2 = vector.load %arg3[%c0_1, %c0_2] : memref<1x128xf32, #tpu.memory_space<vmem>>, vector<1x128xf32>
    %3 = vector.broadcast %2 : vector<1x128xf32> to vector<64x128xf32>
    %4 = arith.mulf %1, %3 : vector<64x128xf32>
    %c0_3 = arith.constant 0 : index
    %c0_4 = arith.constant 0 : index
    %5 = vector.load %arg4[%c0_3, %c0_4] : memref<1x128xf32, #tpu.memory_space<vmem>>, vector<1x128xf32>
    %6 = vector.broadcast %5 : vector<1x128xf32> to vector<64x128xf32>
    %7 = arith.addf %4, %6 : vector<64x128xf32>
    %cst = arith.constant 0.000000e+00 : f32
    %8 = vector.broadcast %cst : f32 to vector<64x128xf32>
    %9 = arith.maximumf %7, %8 : vector<64x128xf32>
    %10 = arith.truncf %9 : vector<64x128xf32> to vector<64x128xbf16>
    %c0_5 = arith.constant 0 : index
    %c0_6 = arith.constant 0 : index
    %11 = vector.load %arg5[%c0_5, %c0_6] : memref<128x128xbf16, #tpu.memory_space<vmem>>, vector<128x128xbf16>
    %cst_7 = arith.constant dense<0.000000e+00> : vector<64x128xf32>
    %12 = tpu.matmul %10, %11, %cst_7 {dimension_numbers = #tpu.dot_dimension_numbers<[1], [0], [0], [1], [0, 0, 1, 1], [], []>} : vector<64x128xbf16>, vector<128x128xbf16>, vector<64x128xf32> -> vector<64x128xf32>
    %c0_8 = arith.constant 0 : index
    %c0_9 = arith.constant 0 : index
    %13 = vector.load %arg6[%c0_8, %c0_9] : memref<1x128xf32, #tpu.memory_space<vmem>>, vector<1x128xf32>
    %14 = vector.broadcast %13 : vector<1x128xf32> to vector<64x128xf32>
    %15 = arith.mulf %12, %14 : vector<64x128xf32>
    %c0_10 = arith.constant 0 : index
    %c0_11 = arith.constant 0 : index
    %16 = vector.load %arg7[%c0_10, %c0_11] : memref<1x128xf32, #tpu.memory_space<vmem>>, vector<1x128xf32>
    %17 = vector.broadcast %16 : vector<1x128xf32> to vector<64x128xf32>
    %18 = arith.addf %15, %17 : vector<64x128xf32>
    %c0_12 = arith.constant 0 : index
    %c0_13 = arith.constant 0 : index
    %19 = vector.load %arg2[%c0_12, %c0_13] : memref<64x128xf32, #tpu.memory_space<vmem>>, vector<64x128xf32>
    %20 = arith.addf %18, %19 : vector<64x128xf32>
    %cst_14 = arith.constant 0.000000e+00 : f32
    %21 = vector.broadcast %cst_14 : f32 to vector<64x128xf32>
    %22 = arith.maximumf %20, %21 : vector<64x128xf32>
    %c0_15 = arith.constant 0 : index
    %c0_16 = arith.constant 0 : index
    %23 = vector.load %arg8[%c0_15, %c0_16] : memref<64x128xf32, #tpu.memory_space<vmem>>, vector<64x128xf32>
    tpu.vector_store %arg8[%c0_15, %c0_16], %22 {strides = array<i32>} : memref<64x128xf32, #tpu.memory_space<vmem>>, vector<64x128xf32>,
    return
  }
  func.func @transform_0(%arg0: i32) -> (i32, i32) {
    %c0_i32 = arith.constant 0 : i32
    %c0_i32_0 = arith.constant 0 : i32
    return %arg0, %c0_i32 : i32, i32
  }
  func.func @transform_1(%arg0: i32) -> (i32, i32) {
    %c0_i32 = arith.constant 0 : i32
    %c0_i32_0 = arith.constant 0 : i32
    return %arg0, %c0_i32 : i32, i32
  }
  func.func @transform_2(%arg0: i32) -> (i32, i32) {
    %c0_i32 = arith.constant 0 : i32
    %c0_i32_0 = arith.constant 0 : i32
    %c0_i32_1 = arith.constant 0 : i32
    return %c0_i32, %c0_i32_0 : i32, i32
  }
  func.func @transform_3(%arg0: i32) -> (i32, i32) {
    %c0_i32 = arith.constant 0 : i32
    %c0_i32_0 = arith.constant 0 : i32
    %c0_i32_1 = arith.constant 0 : i32
    return %c0_i32, %c0_i32_0 : i32, i32
  }
  func.func @transform_4(%arg0: i32) -> (i32, i32) {
    %c0_i32 = arith.constant 0 : i32
    %c0_i32_0 = arith.constant 0 : i32
    %c0_i32_1 = arith.constant 0 : i32
    return %c0_i32, %c0_i32_0 : i32, i32
  }
  func.func @transform_5(%arg0: i32) -> (i32, i32) {
    %c0_i32 = arith.constant 0 : i32
    %c0_i32_0 = arith.constant 0 : i32
    %c0_i32_1 = arith.constant 0 : i32
    return %c0_i32, %c0_i32_0 : i32, i32
  }
  func.func @transform_6(%arg0: i32) -> (i32, i32) {
    %c0_i32 = arith.constant 0 : i32
    %c0_i32_0 = arith.constant 0 : i32
    %c0_i32_1 = arith.constant 0 : i32
    return %c0_i32, %c0_i32_0 : i32, i32
  }
  func.func @transform_7(%arg0: i32) -> (i32, i32) {
    %c0_i32 = arith.constant 0 : i32
    %c0_i32_0 = arith.constant 0 : i32
    return %arg0, %c0_i32 : i32, i32
  }
}

</mosaic_0001>

<llo_original>
// kernel: _lambda_.4
$region0: #{_lambda_.4}
  #allocation0 [shape = 'u32[]', space=smem, size = 0x4, offset = 0x4, fixed_abs, tag = 'smem constant byte address 0x4 - core index']
  #allocation1 [shape = 'u32[144,128]{1,0:T(1,128)}', space=vmem, size = 0x12000, scoped, tag = 'internal scratch']
  %s0 = inlined_call_operand.vmem [shape: f32[128,128], index: 0, kind: input, shape index: {}]
  %s1 = inlined_call_operand.vmem [shape: bf16[128,128], index: 1, kind: input, shape index: {}]
  %s2 = inlined_call_operand.vmem [shape: bf16[128,128], index: 2, kind: output, shape index: {0}]
  %s3 = inlined_call_operand.vmem [shape: f32[2,2,128], index: 3, kind: output, shape index: {1}]
  %4 = xla_tuple %s2, %s3
  %s5 = sld [smem:[#allocation0]]
  $region49: #{_lambda_.4} parent=0
    _
  %s7 = ssub.s32 1, %s5
  %s8 = scalar_select 0, %s7, %s5
  loop: start=0, step=1, limit=4
  $region2: #{_lambda_.4} parent=0 // loop_pre_header
    _
  $region3: #{_lambda_.4} parent=0 // loop_header
    %s10 = sphi 0, %s14
    %p11 = scmp.ge.s32.totalorder %s10, 4
    %s20 = sphi 0, %s22
    %s23 = sphi 0, %s20
    %s24 = sphi 0, %s23
    %s40 = sphi 0, %s24
    %s44 = sphi 0, %s44
    %s46 = sphi 0, %s44
    %s47 = sphi 0, %s46
    %s61 = sphi 0, %s47
    %s67 = sphi 0, %s69
    %s70 = sphi 0, %s67
    %s71 = sphi 0, %s70
    %s87 = sphi 0, %s71
    %s93 = sphi 0, %s95
    %s96 = sphi 0, %s93
    %s97 = sphi 0, %s96
    %s113 = sphi 0, %s97
  $region4: #{_lambda_.4} parent=0 // loop_header_branch
    %13 = sbr.rel (%p11) target = $region8
  $region5: #{_lambda_.4} parent=0 // loop_body
    %s15 = ssub.s32 %s10, 1
    %s16 = ssub.s32 %s10, 2
    %s17 = sadd.s32 %s10, 1
    %s18 = ssub.s32 %s10, %s17
    %p19 = scmp.eq.s32.totalorder %s18, 0
    %s21 = sadd.s32 %s20, 1
    %s22 = scalar_select %p19, %s20, %s21
    %p25 = pneg %p19
    %p26 = scmp.eq.s32.totalorder %s10, 1
    %p27 = por %p25, %p26
    %p28 = scmp.ne.s32.totalorder %s20, %s23
    %p29 = scmp.eq.s32.totalorder %s10, 0
    %p30 = por %p28, %p29
    %p31 = scmp.ne.s32.totalorder %s20, %s23
    %p32 = scmp.eq.s32.totalorder %s15, 1
    %p33 = por %p31, %p32
    %p34 = scmp.ne.s32.totalorder %s23, %s24
    %p35 = scmp.eq.s32.totalorder %s15, 0
    %p36 = por %p34, %p35
    %p37 = scmp.ne.s32.totalorder %s23, %s24
    %p38 = scmp.eq.s32.totalorder %s16, 1
    %p39 = por %p37, %p38
    %p41 = scmp.ne.s32.totalorder %s24, %s40
    %p42 = scmp.eq.s32.totalorder %s16, 0
    %p43 = por %p41, %p42
    %s45 = sadd.s32 %s44, 1
    %p48 = scmp.eq.s32.totalorder %s10, 1
    %p49 = scmp.ne.s32.totalorder %s44, %s46
    %p50 = scmp.eq.s32.totalorder %s10, 0
    %p51 = por %p49, %p50
    %p52 = scmp.ne.s32.totalorder %s44, %s46
    %p53 = scmp.eq.s32.totalorder %s15, 1
    %p54 = por %p52, %p53
    %p55 = scmp.ne.s32.totalorder %s46, %s47
    %p56 = scmp.eq.s32.totalorder %s15, 0
    %p57 = por %p55, %p56
    %p58 = scmp.ne.s32.totalorder %s46, %s47
    %p59 = scmp.eq.s32.totalorder %s16, 1
    %p60 = por %p58, %p59
    %p62 = scmp.ne.s32.totalorder %s47, %s61
    %p63 = scmp.eq.s32.totalorder %s16, 0
    %p64 = por %p62, %p63
    %s65 = ssub.s32 %s10, %s17
    %p66 = scmp.eq.s32.totalorder %s65, 0
    %s68 = sadd.s32 %s67, 1
    %s69 = scalar_select %p66, %s67, %s68
    %p72 = pneg %p66
    %p73 = scmp.eq.s32.totalorder %s10, 1
    %p74 = por %p72, %p73
    %p75 = scmp.ne.s32.totalorder %s67, %s70
    %p76 = scmp.eq.s32.totalorder %s10, 0
    %p77 = por %p75, %p76
    %p78 = scmp.ne.s32.totalorder %s67, %s70
    %p79 = scmp.eq.s32.totalorder %s15, 1
    %p80 = por %p78, %p79
    %p81 = scmp.ne.s32.totalorder %s70, %s71
    %p82 = scmp.eq.s32.totalorder %s15, 0
    %p83 = por %p81, %p82
    %p84 = scmp.ne.s32.totalorder %s70, %s71
    %p85 = scmp.eq.s32.totalorder %s16, 1
    %p86 = por %p84, %p85
    %p88 = scmp.ne.s32.totalorder %s71, %s87
    %p89 = scmp.eq.s32.totalorder %s16, 0
    %p90 = por %p88, %p89
    %s91 = ssub.s32 %s10, %s17
    %p92 = scmp.eq.s32.totalorder %s91, 0
    %s94 = sadd.s32 %s93, 1
    %s95 = scalar_select %p92, %s93, %s94
    %p98 = pneg %p92
    %p99 = scmp.eq.s32.totalorder %s10, 1
    %p100 = por %p98, %p99
    %p101 = scmp.ne.s32.totalorder %s93, %s96
    %p102 = scmp.eq.s32.totalorder %s10, 0
    %p103 = por %p101, %p102
    %p104 = scmp.ne.s32.totalorder %s93, %s96
    %p105 = scmp.eq.s32.totalorder %s15, 1
    %p106 = por %p104, %p105
    %p107 = scmp.ne.s32.totalorder %s96, %s97
    %p108 = scmp.eq.s32.totalorder %s15, 0
    %p109 = por %p107, %p108
    %p110 = scmp.ne.s32.totalorder %s96, %s97
    %p111 = scmp.eq.s32.totalorder %s16, 1
    %p112 = por %p110, %p111
    %p114 = scmp.ne.s32.totalorder %s97, %s113
    %p115 = scmp.eq.s32.totalorder %s16, 0
    %p116 = por %p114, %p115
    %p117 = scmp.le.s32.totalorder 1, %s10
    %p118 = scmp.lt.s32.totalorder %s10, 3
    %p119 = pnand %p117, %p118
    %p120 = pneg %p119
    // Predicated region
    $region9: #{_lambda_.4} parent=5 // pred_check
      _
    $region10: #{_lambda_.4} parent=5 // pred_check_branch
      %122 = sbr.rel (%p119) target = $region12
    $region11: #{_lambda_.4} parent=5 // pred_region
      %s123 = ssub.s32 %s10, 1
      // Predicated region
      $region13: #{_lambda_.4} parent=11 // pred_check
        %p124 = pneg %p57
      $region14: #{_lambda_.4} parent=11 // pred_check_branch
        %126 = sbr.rel (%p124) target = $region16
      $region15: #{_lambda_.4} parent=11 // pred_region
        _
      $region16: #{_lambda_.4} parent=11 // pred_fallthru
        _
    $region12: #{_lambda_.4} parent=5 // pred_fallthru
      _
    %p127 = scmp.lt.s32.totalorder %s10, 2
    // Predicated region
    $region17: #{_lambda_.4} parent=5 // pred_check
      %p128 = pneg %p127
    $region18: #{_lambda_.4} parent=5 // pred_check_branch
      %130 = sbr.rel (%p128) target = $region20
    $region19: #{_lambda_.4} parent=5 // pred_region
      // Predicated region
      $region21: #{_lambda_.4} parent=19 // pred_check
        %p131 = pneg %p30
      $region22: #{_lambda_.4} parent=19 // pred_check_branch
        %133 = sbr.rel (%p131) target = $region24
      $region23: #{_lambda_.4} parent=19 // pred_region
        %s134 = smul.u32 8, %s10
        %p135 = scmp.lt.s32.totalorder %s134, 15
        %s136 = scalar_select %p135, %s134, 15
        %s137 = smul.addr %s136, 8
        %s138 = scalar_lea.vmem %s0, %s137
        %s139 = smul.u32 8, %s10
      $region24: #{_lambda_.4} parent=19 // pred_fallthru
        _
    $region20: #{_lambda_.4} parent=5 // pred_fallthru
      _
    %p140 = scmp.le.s32.totalorder 1, %s10
    %p141 = scmp.lt.s32.totalorder %s10, 3
    %p142 = pnand %p140, %p141
    %p143 = pneg %p142
    // Predicated region
    $region25: #{_lambda_.4} parent=5 // pred_check
      _
    $region26: #{_lambda_.4} parent=5 // pred_check_branch
      %145 = sbr.rel (%p142) target = $region28
    $region27: #{_lambda_.4} parent=5 // pred_region
      %s146 = ssub.s32 %s10, 1
      %s147 = smul.u32 8, %s15
      %p148 = scmp.lt.s32.totalorder %s147, 15
      %s149 = scalar_select %p148, %s147, 15
      %s150 = smul.addr %s149, 8
      %s151 = scalar_lea.vmem %s0, %s150
      %p152 = pneg %p36
      %p153 = pneg %p33
      %p154 = pneg %p57
      %p155 = pneg %p54
      %p156 = pneg %p83
      %p157 = pneg %p80
      %s158 = smul.u32 8, %s15
      %p159 = scmp.lt.s32.totalorder %s158, 15
      %s160 = scalar_select %p159, %s158, 15
      %s161 = smul.addr %s160, 4
      %s162 = scalar_lea.vmem %s2, %s161
      %p163 = pneg %p109
      %p164 = pneg %p106
      %p165 = scmp.lt.s32.totalorder %s15, 1
      %s166 = scalar_select %p165, %s15, 1
      %s167 = smul.addr %s166, 2
      %s168 = scalar_lea.vmem %s3, %s167
      %s169 = smul.u32 8, %s15
      %p170 = scmp.lt.s32.totalorder %s169, 15
      %s171 = scalar_select %p170, %s169, 15
      %s172 = smul.addr %s171, 8
      %s173 = scalar_lea.vmem %s0, %s172
      %s174 = smul.u32 8, %s15
      %s175 = smul.u32 8, %s15
      %p176 = scmp.lt.s32.totalorder %s175, 15
      %s177 = scalar_select %p176, %s175, 15
      %s178 = smul.addr %s177, 4
      %s179 = scalar_lea.vmem %s2, %s178
      %s180 = smul.u32 8, %s15
      %p181 = scmp.lt.s32.totalorder %s15, 1
      %s182 = scalar_select %p181, %s15, 1
      %s183 = smul.addr %s182, 2
      %s184 = scalar_lea.vmem %s3, %s183
      %v186 = vld [vmem:[%s173] sm:$0xff]
      %v187 = vld [vmem:[%s173 + $0x8] sm:$0xff]
      %v188 = vld [vmem:[%s173 + $0x10] sm:$0xff]
      %v189 = vld [vmem:[%s173 + $0x18] sm:$0xff]
      %v190 = vld [vmem:[%s173 + $0x20] sm:$0xff]
      %v191 = vld [vmem:[%s173 + $0x28] sm:$0xff]
      %v192 = vld [vmem:[%s173 + $0x30] sm:$0xff]
      %v193 = vld [vmem:[%s173 + $0x38] sm:$0xff]
      %v194 = vpack.c.bf16 %v187, %v186
      %v195 = vpack.c.bf16 %v189, %v188
      %v196 = vpack.c.bf16 %v191, %v190
      %v197 = vpack.c.bf16 %v193, %v192
      %v198 = vld [vmem:[%s1] sm:$0xf]
      %v199 = vld [vmem:[%s1 + $0x4] sm:$0xf]
      %v200 = vld [vmem:[%s1 + $0x8] sm:$0xf]
      %v201 = vld [vmem:[%s1 + $0xc] sm:$0xf]
      %v202 = vld [vmem:[%s1 + $0x10] sm:$0xf]
      %v203 = vld [vmem:[%s1 + $0x14] sm:$0xf]
      %v204 = vld [vmem:[%s1 + $0x18] sm:$0xf]
      %v205 = vld [vmem:[%s1 + $0x1c] sm:$0xf]
      %v206 = vld [vmem:[%s1 + $0x20] sm:$0xf]
      %v207 = vld [vmem:[%s1 + $0x24] sm:$0xf]
      %v208 = vld [vmem:[%s1 + $0x28] sm:$0xf]
      %v209 = vld [vmem:[%s1 + $0x2c] sm:$0xf]
      %v210 = vld [vmem:[%s1 + $0x30] sm:$0xf]
      %v211 = vld [vmem:[%s1 + $0x34] sm:$0xf]
      %v212 = vld [vmem:[%s1 + $0x38] sm:$0xf]
      %v213 = vld [vmem:[%s1 + $0x3c] sm:$0xf]
      %v230 = vunpack.c.l.b16 %v198
      %v231 = vunpack.c.l.b16 %v199
      %v232 = vunpack.c.l.b16 %v200
      %v233 = vunpack.c.l.b16 %v201
      %v234 = vunpack.c.l.b16 %v202
      %v235 = vunpack.c.l.b16 %v203
      %v236 = vunpack.c.l.b16 %v204
      %v237 = vunpack.c.l.b16 %v205
      %v238 = vunpack.c.l.b16 %v206
      %v239 = vunpack.c.l.b16 %v207
      %v240 = vunpack.c.l.b16 %v208
      %v241 = vunpack.c.l.b16 %v209
      %v242 = vunpack.c.l.b16 %v210
      %v243 = vunpack.c.l.b16 %v211
      %v244 = vunpack.c.l.b16 %v212
      %v245 = vunpack.c.l.b16 %v213
      %v246 = vpack.c.b16 %v231, %v230
      %v247 = vpack.c.b16 %v233, %v232
      %v248 = vpack.c.b16 %v235, %v234
      %v249 = vpack.c.b16 %v237, %v236
      %v250 = vpack.c.b16 %v239, %v238
      %v251 = vpack.c.b16 %v241, %v240
      %v252 = vpack.c.b16 %v243, %v242
      %v253 = vpack.c.b16 %v245, %v244
      %262 = vmatprep.subr.bf16.mxu0 0
      %263 = vmatpush1.bf16.msra.mxu0 %v253
      %264 = vmatprep.subr.bf16.mxu0 0
      %265 = vmatpush1.bf16.msra.mxu0 %v252
      %266 = vmatprep.subr.bf16.mxu0 0
      %267 = vmatpush1.bf16.msra.mxu0 %v251
      %268 = vmatprep.subr.bf16.mxu0 0
      %269 = vmatpush1.bf16.msra.mxu0 %v250
      %270 = vmatprep.subr.bf16.mxu0 0
      %271 = vmatpush1.bf16.msra.mxu0 %v249
      %272 = vmatprep.subr.bf16.mxu0 0
      %273 = vmatpush1.bf16.msra.mxu0 %v248
      %274 = vmatprep.subr.bf16.mxu0 0
      %275 = vmatpush1.bf16.msra.mxu0 %v247
      %276 = vmatprep.subr.bf16.mxu0 0
      %277 = vmatpush1.bf16.msra.mxu0 %v246
      %278 = vmatprep.subr.bf16.mxu0 0
      %279 = vmatpush2.bf16.msra.mxu0 0
      %280 = vmatprep.subr.bf16.mxu0 0
      %281 = vmatpush2.bf16.msra.mxu0 0
      %282 = vmatprep.subr.bf16.mxu0 0
      %283 = vmatpush2.bf16.msra.mxu0 0
      %284 = vmatprep.subr.bf16.mxu0 0
      %285 = vmatpush2.bf16.msra.mxu0 0
      %286 = vmatprep.subr.bf16.mxu0 0
      %287 = vmatpush2.bf16.msra.mxu0 0
      %288 = vmatprep.subr.bf16.mxu0 0
      %289 = vmatpush2.bf16.msra.mxu0 0
      %290 = vmatprep.subr.bf16.mxu0 0
      %291 = vmatpush2.bf16.msra.mxu0 0
      %292 = vmatprep.subr.bf16.mxu0 0
      %293 = vmatpush2.bf16.msra.mxu0 0
      %294 = vmatprep.mubr.bf16.mxu0 0
      %295 = vmatmul.mubr.bf16.gmra.mxu0 %v194
      %v296 = vpop.f32.mrf.mxu0
      %v297 = vadd.f32 0.0, %v296
      %v298 = vpop.f32.mrf.mxu0
      %v299 = vpop.f32.mrf.mxu0
      %v300 = vadd.f32 0.0, %v299
      %v301 = vpop.f32.mrf.mxu0
      %302 = vmatprep.mubr.bf16.mxu0 0
      %303 = vmatmul.mubr.bf16.gmra.mxu0 %v195
      %v304 = vpop.f32.mrf.mxu0
      %v305 = vadd.f32 0.0, %v304
      %v306 = vpop.f32.mrf.mxu0
      %v307 = vpop.f32.mrf.mxu0
      %v308 = vadd.f32 0.0, %v307
      %v309 = vpop.f32.mrf.mxu0
      %310 = vmatprep.mubr.bf16.mxu0 0
      %311 = vmatmul.mubr.bf16.gmra.mxu0 %v196
      %v312 = vpop.f32.mrf.mxu0
      %v313 = vadd.f32 0.0, %v312
      %v314 = vpop.f32.mrf.mxu0
      %v315 = vpop.f32.mrf.mxu0
      %v316 = vadd.f32 0.0, %v315
      %v317 = vpop.f32.mrf.mxu0
      %318 = vmatprep.mubr.bf16.mxu0 0
      %319 = vmatmul.mubr.bf16.gmra.mxu0 %v197
      %v320 = vpop.f32.mrf.mxu0
      %v321 = vadd.f32 0.0, %v320
      %v322 = vpop.f32.mrf.mxu0
      %v323 = vpop.f32.mrf.mxu0
      %v324 = vadd.f32 0.0, %v323
      %v325 = vpop.f32.mrf.mxu0
      %326 = vdwg.mxu0
      %v327 = vpack.c.bf16 %v300, %v297
      %v328 = vpack.c.bf16 %v308, %v305
      %v329 = vpack.c.bf16 %v316, %v313
      %v330 = vpack.c.bf16 %v324, %v321
      %v335 = vunpack.c.l.b16 %v327
      %v336 = vunpack.c.h.b16 %v327
      %v337 = vunpack.c.l.b16 %v328
      %v338 = vunpack.c.h.b16 %v328
      %v339 = vunpack.c.l.b16 %v329
      %v340 = vunpack.c.h.b16 %v329
      %v341 = vunpack.c.l.b16 %v330
      %v342 = vunpack.c.h.b16 %v330
      %v343 = vpack.c.b16 %v335, %v335
      %v344 = vpack.c.b16 %v336, %v336
      %v345 = vpack.c.b16 %v337, %v337
      %v346 = vpack.c.b16 %v338, %v338
      %v347 = vpack.c.b16 %v339, %v339
      %v348 = vpack.c.b16 %v340, %v340
      %v349 = vpack.c.b16 %v341, %v341
      %v350 = vpack.c.b16 %v342, %v342
      %359 = vst [vmem:[%s179] sm:$0xf] %v343
      %360 = vst [vmem:[%s179 + $0x4] sm:$0xf] %v344
      %361 = vst [vmem:[%s179 + $0x8] sm:$0xf] %v345
      %362 = vst [vmem:[%s179 + $0xc] sm:$0xf] %v346
      %363 = vst [vmem:[%s179 + $0x10] sm:$0xf] %v347
      %364 = vst [vmem:[%s179 + $0x14] sm:$0xf] %v348
      %365 = vst [vmem:[%s179 + $0x18] sm:$0xf] %v349
      %366 = vst [vmem:[%s179 + $0x1c] sm:$0xf] %v350
      %v367 = vadd.f32 %v297, %v300
      %v368 = vadd.f32 %v367, %v305
      %v369 = vadd.f32 %v368, %v308
      %v370 = vadd.f32 %v369, %v313
      %v371 = vadd.f32 %v370, %v316
      %v372 = vadd.f32 %v371, %v321
      %v373 = vadd.f32 %v372, %v324
      %v374 = vrot.slane %v373, 4
      %v375 = vadd.f32 %v373, %v374
      %v376 = vrot.slane %v375, 2
      %v377 = vadd.f32 %v375, %v376
      %v378 = vrot.slane %v377, 1
      %v379 = vadd.f32 %v377, %v378
      %v380 = vmul.f32 %v297, %v297
      %v381 = vmul.f32 %v300, %v300
      %v382 = vmul.f32 %v305, %v305
      %v383 = vmul.f32 %v308, %v308
      %v384 = vmul.f32 %v313, %v313
      %v385 = vmul.f32 %v316, %v316
      %v386 = vmul.f32 %v321, %v321
      %v387 = vmul.f32 %v324, %v324
      %v388 = vadd.f32 %v380, %v381
      %v389 = vadd.f32 %v388, %v382
      %v390 = vadd.f32 %v389, %v383
      %v391 = vadd.f32 %v390, %v384
      %v392 = vadd.f32 %v391, %v385
      %v393 = vadd.f32 %v392, %v386
      %v394 = vadd.f32 %v393, %v387
      %v395 = vrot.slane %v394, 4
      %v396 = vadd.f32 %v394, %v395
      %v397 = vrot.slane %v396, 2
      %v398 = vadd.f32 %v396, %v397
      %v399 = vrot.slane %v398, 1
      %v400 = vadd.f32 %v398, %v399
      %vm401 = vcmask 1040384
      %v402 = vsel %vm401, %v379, %v400
      %403 = vst [vmem:[%s184] sm:$0x3] %v402
      %s404 = smul.u32 8, %s15
      %p405 = scmp.lt.s32.totalorder %s404, 15
      %s406 = scalar_select %p405, %s404, 15
      %s407 = smul.addr %s406, 4
      %s408 = scalar_lea.vmem %s2, %s407
      %p409 = scmp.lt.s32.totalorder %s15, 1
      %s410 = scalar_select %p409, %s15, 1
      %s411 = smul.addr %s410, 2
      %s412 = scalar_lea.vmem %s3, %s411
      // Predicated region
      $region29: #{_lambda_.4} parent=27 // pred_check
        %p413 = pneg %p80
      $region30: #{_lambda_.4} parent=27 // pred_check_branch
        %415 = sbr.rel (%p413) target = $region32
      $region31: #{_lambda_.4} parent=27 // pred_region
        %s416 = smul.u32 8, %s15
      $region32: #{_lambda_.4} parent=27 // pred_fallthru
        _
      // Predicated region
      $region33: #{_lambda_.4} parent=27 // pred_check
        %p417 = pneg %p106
      $region34: #{_lambda_.4} parent=27 // pred_check_branch
        %419 = sbr.rel (%p417) target = $region36
      $region35: #{_lambda_.4} parent=27 // pred_region
        _
      $region36: #{_lambda_.4} parent=27 // pred_fallthru
        _
    $region28: #{_lambda_.4} parent=5 // pred_fallthru
      _
    %p420 = scmp.le.s32.totalorder 2, %s10
    // Predicated region
    $region37: #{_lambda_.4} parent=5 // pred_check
      %p421 = pneg %p420
    $region38: #{_lambda_.4} parent=5 // pred_check_branch
      %423 = sbr.rel (%p421) target = $region40
    $region39: #{_lambda_.4} parent=5 // pred_region
      %s424 = ssub.s32 %s10, 2
      // Predicated region
      $region41: #{_lambda_.4} parent=39 // pred_check
        %p425 = pneg %p86
      $region42: #{_lambda_.4} parent=39 // pred_check_branch
        %427 = sbr.rel (%p425) target = $region44
      $region43: #{_lambda_.4} parent=39 // pred_region
        %s428 = smul.u32 8, %s16
        %p429 = scmp.lt.s32.totalorder %s428, 15
        %s430 = scalar_select %p429, %s428, 15
        %s431 = smul.addr %s430, 4
        %s432 = scalar_lea.vmem %s2, %s431
      $region44: #{_lambda_.4} parent=39 // pred_fallthru
        _
      // Predicated region
      $region45: #{_lambda_.4} parent=39 // pred_check
        %p433 = pneg %p112
      $region46: #{_lambda_.4} parent=39 // pred_check_branch
        %435 = sbr.rel (%p433) target = $region48
      $region47: #{_lambda_.4} parent=39 // pred_region
        %p436 = scmp.lt.s32.totalorder %s16, 1
        %s437 = scalar_select %p436, %s16, 1
        %s438 = smul.addr %s437, 2
        %s439 = scalar_lea.vmem %s3, %s438
      $region48: #{_lambda_.4} parent=39 // pred_fallthru
        _
    $region40: #{_lambda_.4} parent=5 // pred_fallthru
      _
  $region6: #{_lambda_.4} parent=0 // loop_footer
    %s14 = sadd.s32 1, %s10
  $region7: #{_lambda_.4} parent=0 // loop_footer_branch
    %9 = sbr.rel target = $region3
  $region8: #{_lambda_.4} parent=0 // loop_exit
    _

// kernel: _lambda_.6
$region0: #{_lambda_.6}
  #allocation0 [shape = 'u32[]', space=smem, size = 0x4, offset = 0x4, fixed_abs, tag = 'smem constant byte address 0x4 - core index']
  #allocation1 [shape = 'u32[144,128]{1,0:T(1,128)}', space=vmem, size = 0x12000, scoped, tag = 'internal scratch']
  %s0 = inlined_call_operand.vmem [shape: bf16[128,128], index: 0, kind: input, shape index: {}]
  %s1 = inlined_call_operand.vmem [shape: f32[1,128], index: 1, kind: input, shape index: {}]
  %s2 = inlined_call_operand.vmem [shape: f32[1,128], index: 2, kind: input, shape index: {}]
  %s3 = inlined_call_operand.vmem [shape: bf16[128,128], index: 3, kind: input, shape index: {}]
  %s4 = inlined_call_operand.vmem [shape: f32[2,2,128], index: 4, kind: output, shape index: {}]
  %s5 = sld [smem:[#allocation0]]
  $region49: #{_lambda_.6} parent=0
    _
  %s7 = ssub.s32 1, %s5
  %s8 = scalar_select 0, %s7, %s5
  loop: start=0, step=1, limit=4
  $region2: #{_lambda_.6} parent=0 // loop_pre_header
    _
  $region3: #{_lambda_.6} parent=0 // loop_header
    %s10 = sphi 0, %s14
    %p11 = scmp.ge.s32.totalorder %s10, 4
    %s20 = sphi 0, %s22
    %s23 = sphi 0, %s20
    %s24 = sphi 0, %s23
    %s40 = sphi 0, %s24
    %s44 = sphi 0, %s44
    %s46 = sphi 0, %s44
    %s47 = sphi 0, %s46
    %s61 = sphi 0, %s47
    %s65 = sphi 0, %s65
    %s67 = sphi 0, %s65
    %s68 = sphi 0, %s67
    %s82 = sphi 0, %s68
    %s86 = sphi 0, %s86
    %s88 = sphi 0, %s86
    %s89 = sphi 0, %s88
    %s103 = sphi 0, %s89
    %s109 = sphi 0, %s111
    %s112 = sphi 0, %s109
    %s113 = sphi 0, %s112
    %s129 = sphi 0, %s113
  $region4: #{_lambda_.6} parent=0 // loop_header_branch
    %13 = sbr.rel (%p11) target = $region8
  $region5: #{_lambda_.6} parent=0 // loop_body
    %s15 = ssub.s32 %s10, 1
    %s16 = ssub.s32 %s10, 2
    %s17 = sadd.s32 %s10, 1
    %s18 = ssub.s32 %s10, %s17
    %p19 = scmp.eq.s32.totalorder %s18, 0
    %s21 = sadd.s32 %s20, 1
    %s22 = scalar_select %p19, %s20, %s21
    %p25 = pneg %p19
    %p26 = scmp.eq.s32.totalorder %s10, 1
    %p27 = por %p25, %p26
    %p28 = scmp.ne.s32.totalorder %s20, %s23
    %p29 = scmp.eq.s32.totalorder %s10, 0
    %p30 = por %p28, %p29
    %p31 = scmp.ne.s32.totalorder %s20, %s23
    %p32 = scmp.eq.s32.totalorder %s15, 1
    %p33 = por %p31, %p32
    %p34 = scmp.ne.s32.totalorder %s23, %s24
    %p35 = scmp.eq.s32.totalorder %s15, 0
    %p36 = por %p34, %p35
    %p37 = scmp.ne.s32.totalorder %s23, %s24
    %p38 = scmp.eq.s32.totalorder %s16, 1
    %p39 = por %p37, %p38
    %p41 = scmp.ne.s32.totalorder %s24, %s40
    %p42 = scmp.eq.s32.totalorder %s16, 0
    %p43 = por %p41, %p42
    %s45 = sadd.s32 %s44, 1
    %p48 = scmp.eq.s32.totalorder %s10, 1
    %p49 = scmp.ne.s32.totalorder %s44, %s46
    %p50 = scmp.eq.s32.totalorder %s10, 0
    %p51 = por %p49, %p50
    %p52 = scmp.ne.s32.totalorder %s44, %s46
    %p53 = scmp.eq.s32.totalorder %s15, 1
    %p54 = por %p52, %p53
    %p55 = scmp.ne.s32.totalorder %s46, %s47
    %p56 = scmp.eq.s32.totalorder %s15, 0
    %p57 = por %p55, %p56
    %p58 = scmp.ne.s32.totalorder %s46, %s47
    %p59 = scmp.eq.s32.totalorder %s16, 1
    %p60 = por %p58, %p59
    %p62 = scmp.ne.s32.totalorder %s47, %s61
    %p63 = scmp.eq.s32.totalorder %s16, 0
    %p64 = por %p62, %p63
    %s66 = sadd.s32 %s65, 1
    %p69 = scmp.eq.s32.totalorder %s10, 1
    %p70 = scmp.ne.s32.totalorder %s65, %s67
    %p71 = scmp.eq.s32.totalorder %s10, 0
    %p72 = por %p70, %p71
    %p73 = scmp.ne.s32.totalorder %s65, %s67
    %p74 = scmp.eq.s32.totalorder %s15, 1
    %p75 = por %p73, %p74
    %p76 = scmp.ne.s32.totalorder %s67, %s68
    %p77 = scmp.eq.s32.totalorder %s15, 0
    %p78 = por %p76, %p77
    %p79 = scmp.ne.s32.totalorder %s67, %s68
    %p80 = scmp.eq.s32.totalorder %s16, 1
    %p81 = por %p79, %p80
    %p83 = scmp.ne.s32.totalorder %s68, %s82
    %p84 = scmp.eq.s32.totalorder %s16, 0
    %p85 = por %p83, %p84
    %s87 = sadd.s32 %s86, 1
    %p90 = scmp.eq.s32.totalorder %s10, 1
    %p91 = scmp.ne.s32.totalorder %s86, %s88
    %p92 = scmp.eq.s32.totalorder %s10, 0
    %p93 = por %p91, %p92
    %p94 = scmp.ne.s32.totalorder %s86, %s88
    %p95 = scmp.eq.s32.totalorder %s15, 1
    %p96 = por %p94, %p95
    %p97 = scmp.ne.s32.totalorder %s88, %s89
    %p98 = scmp.eq.s32.totalorder %s15, 0
    %p99 = por %p97, %p98
    %p100 = scmp.ne.s32.totalorder %s88, %s89
    %p101 = scmp.eq.s32.totalorder %s16, 1
    %p102 = por %p100, %p101
    %p104 = scmp.ne.s32.totalorder %s89, %s103
    %p105 = scmp.eq.s32.totalorder %s16, 0
    %p106 = por %p104, %p105
    %s107 = ssub.s32 %s10, %s17
    %p108 = scmp.eq.s32.totalorder %s107, 0
    %s110 = sadd.s32 %s109, 1
    %s111 = scalar_select %p108, %s109, %s110
    %p114 = pneg %p108
    %p115 = scmp.eq.s32.totalorder %s10, 1
    %p116 = por %p114, %p115
    %p117 = scmp.ne.s32.totalorder %s109, %s112
    %p118 = scmp.eq.s32.totalorder %s10, 0
    %p119 = por %p117, %p118
    %p120 = scmp.ne.s32.totalorder %s109, %s112
    %p121 = scmp.eq.s32.totalorder %s15, 1
    %p122 = por %p120, %p121
    %p123 = scmp.ne.s32.totalorder %s112, %s113
    %p124 = scmp.eq.s32.totalorder %s15, 0
    %p125 = por %p123, %p124
    %p126 = scmp.ne.s32.totalorder %s112, %s113
    %p127 = scmp.eq.s32.totalorder %s16, 1
    %p128 = por %p126, %p127
    %p130 = scmp.ne.s32.totalorder %s113, %s129
    %p131 = scmp.eq.s32.totalorder %s16, 0
    %p132 = por %p130, %p131
    %p133 = scmp.le.s32.totalorder 1, %s10
    %p134 = scmp.lt.s32.totalorder %s10, 3
    %p135 = pnand %p133, %p134
    %p136 = pneg %p135
    // Predicated region
    $region9: #{_lambda_.6} parent=5 // pred_check
      _
    $region10: #{_lambda_.6} parent=5 // pred_check_branch
      %138 = sbr.rel (%p135) target = $region12
    $region11: #{_lambda_.6} parent=5 // pred_region
      %s139 = ssub.s32 %s10, 1
      // Predicated region
      $region13: #{_lambda_.6} parent=11 // pred_check
        %p140 = pneg %p57
      $region14: #{_lambda_.6} parent=11 // pred_check_branch
        %142 = sbr.rel (%p140) target = $region16
      $region15: #{_lambda_.6} parent=11 // pred_region
        _
      $region16: #{_lambda_.6} parent=11 // pred_fallthru
        _
      // Predicated region
      $region17: #{_lambda_.6} parent=11 // pred_check
        %p143 = pneg %p78
      $region18: #{_lambda_.6} parent=11 // pred_check_branch
        %145 = sbr.rel (%p143) target = $region20
      $region19: #{_lambda_.6} parent=11 // pred_region
        _
      $region20: #{_lambda_.6} parent=11 // pred_fallthru
        _
      // Predicated region
      $region21: #{_lambda_.6} parent=11 // pred_check
        %p146 = pneg %p99
      $region22: #{_lambda_.6} parent=11 // pred_check_branch
        %148 = sbr.rel (%p146) target = $region24
      $region23: #{_lambda_.6} parent=11 // pred_region
        _
      $region24: #{_lambda_.6} parent=11 // pred_fallthru
        _
    $region12: #{_lambda_.6} parent=5 // pred_fallthru
      _
    %p149 = scmp.lt.s32.totalorder %s10, 2
    // Predicated region
    $region25: #{_lambda_.6} parent=5 // pred_check
      %p150 = pneg %p149
    $region26: #{_lambda_.6} parent=5 // pred_check_branch
      %152 = sbr.rel (%p150) target = $region28
    $region27: #{_lambda_.6} parent=5 // pred_region
      // Predicated region
      $region29: #{_lambda_.6} parent=27 // pred_check
        %p153 = pneg %p30
      $region30: #{_lambda_.6} parent=27 // pred_check_branch
        %155 = sbr.rel (%p153) target = $region32
      $region31: #{_lambda_.6} parent=27 // pred_region
        %s156 = smul.u32 8, %s10
        %p157 = scmp.lt.s32.totalorder %s156, 15
        %s158 = scalar_select %p157, %s156, 15
        %s159 = smul.addr %s158, 4
        %s160 = scalar_lea.vmem %s0, %s159
        %s161 = smul.u32 8, %s10
      $region32: #{_lambda_.6} parent=27 // pred_fallthru
        _
    $region28: #{_lambda_.6} parent=5 // pred_fallthru
      _
    %p162 = scmp.le.s32.totalorder 1, %s10
    %p163 = scmp.lt.s32.totalorder %s10, 3
    %p164 = pnand %p162, %p163
    %p165 = pneg %p164
    // Predicated region
    $region33: #{_lambda_.6} parent=5 // pred_check
      _
    $region34: #{_lambda_.6} parent=5 // pred_check_branch
      %167 = sbr.rel (%p164) target = $region36
    $region35: #{_lambda_.6} parent=5 // pred_region
      %s168 = ssub.s32 %s10, 1
      %s169 = smul.u32 8, %s15
      %p170 = scmp.lt.s32.totalorder %s169, 15
      %s171 = scalar_select %p170, %s169, 15
      %s172 = smul.addr %s171, 4
      %s173 = scalar_lea.vmem %s0, %s172
      %p174 = pneg %p36
      %p175 = pneg %p33
      %p176 = pneg %p57
      %p177 = pneg %p54
      %p178 = pneg %p78
      %p179 = pneg %p75
      %p180 = pneg %p99
      %p181 = pneg %p96
      %p182 = pneg %p125
      %p183 = pneg %p122
      %p184 = scmp.lt.s32.totalorder %s15, 1
      %s185 = scalar_select %p184, %s15, 1
      %s186 = smul.addr %s185, 2
      %s187 = scalar_lea.vmem %s4, %s186
      %s188 = smul.u32 8, %s15
      %p189 = scmp.lt.s32.totalorder %s188, 15
      %s190 = scalar_select %p189, %s188, 15
      %s191 = smul.addr %s190, 4
      %s192 = scalar_lea.vmem %s0, %s191
      %s193 = smul.u32 8, %s15
      %p194 = scmp.lt.s32.totalorder %s15, 1
      %s195 = scalar_select %p194, %s15, 1
      %s196 = smul.addr %s195, 2
      %s197 = scalar_lea.vmem %s4, %s196
      %v199 = vld [vmem:[%s192] sm:$0xf]
      %v200 = vld [vmem:[%s192 + $0x4] sm:$0xf]
      %v201 = vld [vmem:[%s192 + $0x8] sm:$0xf]
      %v202 = vld [vmem:[%s192 + $0xc] sm:$0xf]
      %v203 = vld [vmem:[%s192 + $0x10] sm:$0xf]
      %v204 = vld [vmem:[%s192 + $0x14] sm:$0xf]
      %v205 = vld [vmem:[%s192 + $0x18] sm:$0xf]
      %v206 = vld [vmem:[%s192 + $0x1c] sm:$0xf]
      %v207 = vunpack.c.l.bf16 %v199
      %v208 = vunpack.c.l.bf16 %v200
      %v209 = vunpack.c.l.bf16 %v201
      %v210 = vunpack.c.l.bf16 %v202
      %v211 = vunpack.c.l.bf16 %v203
      %v212 = vunpack.c.l.bf16 %v204
      %v213 = vunpack.c.l.bf16 %v205
      %v214 = vunpack.c.l.bf16 %v206
      %v215 = vld [vmem:[%s1] sm:$0x1]
      %v217 = vlaneseq
      %v218 = vshrl.u32 %v217, 7
      %v219 = vsub.s32 0, %v218
      %v220 = vrot.slane %v215, %v219
      %v222 = vmul.f32 %v207, %v220
      %v223 = vmul.f32 %v208, %v220
      %v224 = vmul.f32 %v209, %v220
      %v225 = vmul.f32 %v210, %v220
      %v226 = vmul.f32 %v211, %v220
      %v227 = vmul.f32 %v212, %v220
      %v228 = vmul.f32 %v213, %v220
      %v229 = vmul.f32 %v214, %v220
      %v230 = vld [vmem:[%s2] sm:$0x1]
      %v232 = vlaneseq
      %v233 = vshrl.u32 %v232, 7
      %v234 = vsub.s32 0, %v233
      %v235 = vrot.slane %v230, %v234
      %v237 = vadd.f32 %v222, %v235
      %v238 = vadd.f32 %v223, %v235
      %v239 = vadd.f32 %v224, %v235
      %v240 = vadd.f32 %v225, %v235
      %v241 = vadd.f32 %v226, %v235
      %v242 = vadd.f32 %v227, %v235
      %v243 = vadd.f32 %v228, %v235
      %v244 = vadd.f32 %v229, %v235
      %v245 = vmax.f32 %v237, 0.0
      %v246 = vmax.f32 %v238, 0.0
      %v247 = vmax.f32 %v239, 0.0
      %v248 = vmax.f32 %v240, 0.0
      %v249 = vmax.f32 %v241, 0.0
      %v250 = vmax.f32 %v242, 0.0
      %v251 = vmax.f32 %v243, 0.0
      %v252 = vmax.f32 %v244, 0.0
      %v253 = vpack.c.bf16 %v246, %v245
      %v254 = vpack.c.bf16 %v248, %v247
      %v255 = vpack.c.bf16 %v250, %v249
      %v256 = vpack.c.bf16 %v252, %v251
      %v257 = vld [vmem:[%s3] sm:$0xf]
      %v258 = vld [vmem:[%s3 + $0x4] sm:$0xf]
      %v259 = vld [vmem:[%s3 + $0x8] sm:$0xf]
      %v260 = vld [vmem:[%s3 + $0xc] sm:$0xf]
      %v261 = vld [vmem:[%s3 + $0x10] sm:$0xf]
      %v262 = vld [vmem:[%s3 + $0x14] sm:$0xf]
      %v263 = vld [vmem:[%s3 + $0x18] sm:$0xf]
      %v264 = vld [vmem:[%s3 + $0x1c] sm:$0xf]
      %v265 = vld [vmem:[%s3 + $0x20] sm:$0xf]
      %v266 = vld [vmem:[%s3 + $0x24] sm:$0xf]
      %v267 = vld [vmem:[%s3 + $0x28] sm:$0xf]
      %v268 = vld [vmem:[%s3 + $0x2c] sm:$0xf]
      %v269 = vld [vmem:[%s3 + $0x30] sm:$0xf]
      %v270 = vld [vmem:[%s3 + $0x34] sm:$0xf]
      %v271 = vld [vmem:[%s3 + $0x38] sm:$0xf]
      %v272 = vld [vmem:[%s3 + $0x3c] sm:$0xf]
      %v289 = vunpack.c.l.b16 %v257
      %v290 = vunpack.c.l.b16 %v258
      %v291 = vunpack.c.l.b16 %v259
      %v292 = vunpack.c.l.b16 %v260
      %v293 = vunpack.c.l.b16 %v261
      %v294 = vunpack.c.l.b16 %v262
      %v295 = vunpack.c.l.b16 %v263
      %v296 = vunpack.c.l.b16 %v264
      %v297 = vunpack.c.l.b16 %v265
      %v298 = vunpack.c.l.b16 %v266
      %v299 = vunpack.c.l.b16 %v267
      %v300 = vunpack.c.l.b16 %v268
      %v301 = vunpack.c.l.b16 %v269
      %v302 = vunpack.c.l.b16 %v270
      %v303 = vunpack.c.l.b16 %v271
      %v304 = vunpack.c.l.b16 %v272
      %v305 = vpack.c.b16 %v290, %v289
      %v306 = vpack.c.b16 %v292, %v291
      %v307 = vpack.c.b16 %v294, %v293
      %v308 = vpack.c.b16 %v296, %v295
      %v309 = vpack.c.b16 %v298, %v297
      %v310 = vpack.c.b16 %v300, %v299
      %v311 = vpack.c.b16 %v302, %v301
      %v312 = vpack.c.b16 %v304, %v303
      %321 = vmatprep.subr.bf16.mxu0 0
      %322 = vmatpush1.bf16.msra.mxu0 %v312
      %323 = vmatprep.subr.bf16.mxu0 0
      %324 = vmatpush1.bf16.msra.mxu0 %v311
      %325 = vmatprep.subr.bf16.mxu0 0
      %326 = vmatpush1.bf16.msra.mxu0 %v310
      %327 = vmatprep.subr.bf16.mxu0 0
      %328 = vmatpush1.bf16.msra.mxu0 %v309
      %329 = vmatprep.subr.bf16.mxu0 0
      %330 = vmatpush1.bf16.msra.mxu0 %v308
      %331 = vmatprep.subr.bf16.mxu0 0
      %332 = vmatpush1.bf16.msra.mxu0 %v307
      %333 = vmatprep.subr.bf16.mxu0 0
      %334 = vmatpush1.bf16.msra.mxu0 %v306
      %335 = vmatprep.subr.bf16.mxu0 0
      %336 = vmatpush1.bf16.msra.mxu0 %v305
      %337 = vmatprep.subr.bf16.mxu0 0
      %338 = vmatpush2.bf16.msra.mxu0 0
      %339 = vmatprep.subr.bf16.mxu0 0
      %340 = vmatpush2.bf16.msra.mxu0 0
      %341 = vmatprep.subr.bf16.mxu0 0
      %342 = vmatpush2.bf16.msra.mxu0 0
      %343 = vmatprep.subr.bf16.mxu0 0
      %344 = vmatpush2.bf16.msra.mxu0 0
      %345 = vmatprep.subr.bf16.mxu0 0
      %346 = vmatpush2.bf16.msra.mxu0 0
      %347 = vmatprep.subr.bf16.mxu0 0
      %348 = vmatpush2.bf16.msra.mxu0 0
      %349 = vmatprep.subr.bf16.mxu0 0
      %350 = vmatpush2.bf16.msra.mxu0 0
      %351 = vmatprep.subr.bf16.mxu0 0
      %352 = vmatpush2.bf16.msra.mxu0 0
      %353 = vmatprep.mubr.bf16.mxu0 0
      %354 = vmatmul.mubr.bf16.gmra.mxu0 %v253
      %v355 = vpop.f32.mrf.mxu0
      %v356 = vadd.f32 0.0, %v355
      %v357 = vpop.f32.mrf.mxu0
      %v358 = vpop.f32.mrf.mxu0
      %v359 = vadd.f32 0.0, %v358
      %v360 = vpop.f32.mrf.mxu0
      %361 = vmatprep.mubr.bf16.mxu0 0
      %362 = vmatmul.mubr.bf16.gmra.mxu0 %v254
      %v363 = vpop.f32.mrf.mxu0
      %v364 = vadd.f32 0.0, %v363
      %v365 = vpop.f32.mrf.mxu0
      %v366 = vpop.f32.mrf.mxu0
      %v367 = vadd.f32 0.0, %v366
      %v368 = vpop.f32.mrf.mxu0
      %369 = vmatprep.mubr.bf16.mxu0 0
      %370 = vmatmul.mubr.bf16.gmra.mxu0 %v255
      %v371 = vpop.f32.mrf.mxu0
      %v372 = vadd.f32 0.0, %v371
      %v373 = vpop.f32.mrf.mxu0
      %v374 = vpop.f32.mrf.mxu0
      %v375 = vadd.f32 0.0, %v374
      %v376 = vpop.f32.mrf.mxu0
      %377 = vmatprep.mubr.bf16.mxu0 0
      %378 = vmatmul.mubr.bf16.gmra.mxu0 %v256
      %v379 = vpop.f32.mrf.mxu0
      %v380 = vadd.f32 0.0, %v379
      %v381 = vpop.f32.mrf.mxu0
      %v382 = vpop.f32.mrf.mxu0
      %v383 = vadd.f32 0.0, %v382
      %v384 = vpop.f32.mrf.mxu0
      %385 = vdwg.mxu0
      %v386 = vadd.f32 %v356, %v359
      %v387 = vadd.f32 %v386, %v364
      %v388 = vadd.f32 %v387, %v367
      %v389 = vadd.f32 %v388, %v372
      %v390 = vadd.f32 %v389, %v375
      %v391 = vadd.f32 %v390, %v380
      %v392 = vadd.f32 %v391, %v383
      %v393 = vrot.slane %v392, 4
      %v394 = vadd.f32 %v392, %v393
      %v395 = vrot.slane %v394, 2
      %v396 = vadd.f32 %v394, %v395
      %v397 = vrot.slane %v396, 1
      %v398 = vadd.f32 %v396, %v397
      %v399 = vmul.f32 %v356, %v356
      %v400 = vmul.f32 %v359, %v359
      %v401 = vmul.f32 %v364, %v364
      %v402 = vmul.f32 %v367, %v367
      %v403 = vmul.f32 %v372, %v372
      %v404 = vmul.f32 %v375, %v375
      %v405 = vmul.f32 %v380, %v380
      %v406 = vmul.f32 %v383, %v383
      %v407 = vadd.f32 %v399, %v400
      %v408 = vadd.f32 %v407, %v401
      %v409 = vadd.f32 %v408, %v402
      %v410 = vadd.f32 %v409, %v403
      %v411 = vadd.f32 %v410, %v404
      %v412 = vadd.f32 %v411, %v405
      %v413 = vadd.f32 %v412, %v406
      %v414 = vrot.slane %v413, 4
      %v415 = vadd.f32 %v413, %v414
      %v416 = vrot.slane %v415, 2
      %v417 = vadd.f32 %v415, %v416
      %v418 = vrot.slane %v417, 1
      %v419 = vadd.f32 %v417, %v418
      %vm420 = vcmask 1040384
      %v421 = vsel %vm420, %v398, %v419
      %422 = vst [vmem:[%s197] sm:$0x3] %v421
      %p423 = scmp.lt.s32.totalorder %s15, 1
      %s424 = scalar_select %p423, %s15, 1
      %s425 = smul.addr %s424, 2
      %s426 = scalar_lea.vmem %s4, %s425
      // Predicated region
      $region37: #{_lambda_.6} parent=35 // pred_check
        %p427 = pneg %p122
      $region38: #{_lambda_.6} parent=35 // pred_check_branch
        %429 = sbr.rel (%p427) target = $region40
      $region39: #{_lambda_.6} parent=35 // pred_region
        _
      $region40: #{_lambda_.6} parent=35 // pred_fallthru
        _
    $region36: #{_lambda_.6} parent=5 // pred_fallthru
      _
    %p430 = scmp.le.s32.totalorder 2, %s10
    // Predicated region
    $region41: #{_lambda_.6} parent=5 // pred_check
      %p431 = pneg %p430
    $region42: #{_lambda_.6} parent=5 // pred_check_branch
      %433 = sbr.rel (%p431) target = $region44
    $region43: #{_lambda_.6} parent=5 // pred_region
      %s434 = ssub.s32 %s10, 2
      // Predicated region
      $region45: #{_lambda_.6} parent=43 // pred_check
        %p435 = pneg %p128
      $region46: #{_lambda_.6} parent=43 // pred_check_branch
        %437 = sbr.rel (%p435) target = $region48
      $region47: #{_lambda_.6} parent=43 // pred_region
        %p438 = scmp.lt.s32.totalorder %s16, 1
        %s439 = scalar_select %p438, %s16, 1
        %s440 = smul.addr %s439, 2
        %s441 = scalar_lea.vmem %s4, %s440
      $region48: #{_lambda_.6} parent=43 // pred_fallthru
        _
    $region44: #{_lambda_.6} parent=5 // pred_fallthru
      _
  $region6: #{_lambda_.6} parent=0 // loop_footer
    %s14 = sadd.s32 1, %s10
  $region7: #{_lambda_.6} parent=0 // loop_footer_branch
    %9 = sbr.rel target = $region3
  $region8: #{_lambda_.6} parent=0 // loop_exit
    _

// kernel: _lambda_.7
$region0: #{_lambda_.7}
  #allocation0 [shape = 'u32[]', space=smem, size = 0x4, offset = 0x4, fixed_abs, tag = 'smem constant byte address 0x4 - core index']
  #allocation1 [shape = 'u32[144,128]{1,0:T(1,128)}', space=vmem, size = 0x12000, scoped, tag = 'internal scratch']
  %s0 = inlined_call_operand.vmem [shape: bf16[128,128], index: 0, kind: input, shape index: {}]
  %s1 = inlined_call_operand.vmem [shape: f32[128,128], index: 1, kind: input, shape index: {}]
  %s2 = inlined_call_operand.vmem [shape: f32[1,128], index: 2, kind: input, shape index: {}]
  %s3 = inlined_call_operand.vmem [shape: f32[1,128], index: 3, kind: input, shape index: {}]
  %s4 = inlined_call_operand.vmem [shape: bf16[128,128], index: 4, kind: input, shape index: {}]
  %s5 = inlined_call_operand.vmem [shape: f32[1,128], index: 5, kind: input, shape index: {}]
  %s6 = inlined_call_operand.vmem [shape: f32[1,128], index: 6, kind: input, shape index: {}]
  %s7 = inlined_call_operand.hbm [shape: f32[128,128], index: 7, kind: output, shape index: {}]
  %s8 = sld [smem:[#allocation0]]
  $region61: #{_lambda_.7} parent=0
    _
  %s10 = ssub.s32 1, %s8
  %s11 = scalar_select 0, %s10, %s8
  $region1: #{_lambda_.7} parent=0
    #allocation2 [shape = 'u8[65536]{0}', space=vmem, size = 0x10000, scoped, tag = 'output window, operand 0']
    #allocation3 [shape = 's32[2]{0}', space=sflag, size = 0x8, scoped, tag = 'scoped memory for _lambda_.7']
    %12 = vsyncpa [#allocation3], 0
    %s13 = scalar_lea.sflag [#allocation3], 1
    %14 = vsyncpa %s13, 0
    loop: start=0, step=1, limit=4
    $region2: #{_lambda_.7} parent=1 // loop_pre_header
      _
    $region3: #{_lambda_.7} parent=1 // loop_header
      %s16 = sphi 0, %s20
      %p17 = scmp.ge.s32.totalorder %s16, 4
      %s26 = sphi 0, %s28
      %s29 = sphi 0, %s26
      %s30 = sphi 0, %s29
      %s46 = sphi 0, %s30
      %s52 = sphi 0, %s54
      %s55 = sphi 0, %s52
      %s56 = sphi 0, %s55
      %s72 = sphi 0, %s56
      %s76 = sphi 0, %s76
      %s78 = sphi 0, %s76
      %s79 = sphi 0, %s78
      %s93 = sphi 0, %s79
      %s97 = sphi 0, %s97
      %s99 = sphi 0, %s97
      %s100 = sphi 0, %s99
      %s114 = sphi 0, %s100
      %s118 = sphi 0, %s118
      %s120 = sphi 0, %s118
      %s121 = sphi 0, %s120
      %s135 = sphi 0, %s121
      %s139 = sphi 0, %s139
      %s141 = sphi 0, %s139
      %s142 = sphi 0, %s141
      %s156 = sphi 0, %s142
      %s160 = sphi 0, %s160
      %s162 = sphi 0, %s160
      %s163 = sphi 0, %s162
      %s177 = sphi 0, %s163
      %s183 = sphi 0, %s185
      %s186 = sphi 0, %s183
      %s187 = sphi 0, %s186
      %s203 = sphi 0, %s187
    $region4: #{_lambda_.7} parent=1 // loop_header_branch
      %19 = sbr.rel (%p17) target = $region8
    $region5: #{_lambda_.7} parent=1 // loop_body
      %s21 = ssub.s32 %s16, 1
      %s22 = ssub.s32 %s16, 2
      %s23 = sadd.s32 %s16, 1
      %s24 = ssub.s32 %s16, %s23
      %p25 = scmp.eq.s32.totalorder %s24, 0
      %s27 = sadd.s32 %s26, 1
      %s28 = scalar_select %p25, %s26, %s27
      %p31 = pneg %p25
      %p32 = scmp.eq.s32.totalorder %s16, 1
      %p33 = por %p31, %p32
      %p34 = scmp.ne.s32.totalorder %s26, %s29
      %p35 = scmp.eq.s32.totalorder %s16, 0
      %p36 = por %p34, %p35
      %p37 = scmp.ne.s32.totalorder %s26, %s29
      %p38 = scmp.eq.s32.totalorder %s21, 1
      %p39 = por %p37, %p38
      %p40 = scmp.ne.s32.totalorder %s29, %s30
      %p41 = scmp.eq.s32.totalorder %s21, 0
      %p42 = por %p40, %p41
      %p43 = scmp.ne.s32.totalorder %s29, %s30
      %p44 = scmp.eq.s32.totalorder %s22, 1
      %p45 = por %p43, %p44
      %p47 = scmp.ne.s32.totalorder %s30, %s46
      %p48 = scmp.eq.s32.totalorder %s22, 0
      %p49 = por %p47, %p48
      %s50 = ssub.s32 %s16, %s23
      %p51 = scmp.eq.s32.totalorder %s50, 0
      %s53 = sadd.s32 %s52, 1
      %s54 = scalar_select %p51, %s52, %s53
      %p57 = pneg %p51
      %p58 = scmp.eq.s32.totalorder %s16, 1
      %p59 = por %p57, %p58
      %p60 = scmp.ne.s32.totalorder %s52, %s55
      %p61 = scmp.eq.s32.totalorder %s16, 0
      %p62 = por %p60, %p61
      %p63 = scmp.ne.s32.totalorder %s52, %s55
      %p64 = scmp.eq.s32.totalorder %s21, 1
      %p65 = por %p63, %p64
      %p66 = scmp.ne.s32.totalorder %s55, %s56
      %p67 = scmp.eq.s32.totalorder %s21, 0
      %p68 = por %p66, %p67
      %p69 = scmp.ne.s32.totalorder %s55, %s56
      %p70 = scmp.eq.s32.totalorder %s22, 1
      %p71 = por %p69, %p70
      %p73 = scmp.ne.s32.totalorder %s56, %s72
      %p74 = scmp.eq.s32.totalorder %s22, 0
      %p75 = por %p73, %p74
      %s77 = sadd.s32 %s76, 1
      %p80 = scmp.eq.s32.totalorder %s16, 1
      %p81 = scmp.ne.s32.totalorder %s76, %s78
      %p82 = scmp.eq.s32.totalorder %s16, 0
      %p83 = por %p81, %p82
      %p84 = scmp.ne.s32.totalorder %s76, %s78
      %p85 = scmp.eq.s32.totalorder %s21, 1
      %p86 = por %p84, %p85
      %p87 = scmp.ne.s32.totalorder %s78, %s79
      %p88 = scmp.eq.s32.totalorder %s21, 0
      %p89 = por %p87, %p88
      %p90 = scmp.ne.s32.totalorder %s78, %s79
      %p91 = scmp.eq.s32.totalorder %s22, 1
      %p92 = por %p90, %p91
      %p94 = scmp.ne.s32.totalorder %s79, %s93
      %p95 = scmp.eq.s32.totalorder %s22, 0
      %p96 = por %p94, %p95
      %s98 = sadd.s32 %s97, 1
      %p101 = scmp.eq.s32.totalorder %s16, 1
      %p102 = scmp.ne.s32.totalorder %s97, %s99
      %p103 = scmp.eq.s32.totalorder %s16, 0
      %p104 = por %p102, %p103
      %p105 = scmp.ne.s32.totalorder %s97, %s99
      %p106 = scmp.eq.s32.totalorder %s21, 1
      %p107 = por %p105, %p106
      %p108 = scmp.ne.s32.totalorder %s99, %s100
      %p109 = scmp.eq.s32.totalorder %s21, 0
      %p110 = por %p108, %p109
      %p111 = scmp.ne.s32.totalorder %s99, %s100
      %p112 = scmp.eq.s32.totalorder %s22, 1
      %p113 = por %p111, %p112
      %p115 = scmp.ne.s32.totalorder %s100, %s114
      %p116 = scmp.eq.s32.totalorder %s22, 0
      %p117 = por %p115, %p116
      %s119 = sadd.s32 %s118, 1
      %p122 = scmp.eq.s32.totalorder %s16, 1
      %p123 = scmp.ne.s32.totalorder %s118, %s120
      %p124 = scmp.eq.s32.totalorder %s16, 0
      %p125 = por %p123, %p124
      %p126 = scmp.ne.s32.totalorder %s118, %s120
      %p127 = scmp.eq.s32.totalorder %s21, 1
      %p128 = por %p126, %p127
      %p129 = scmp.ne.s32.totalorder %s120, %s121
      %p130 = scmp.eq.s32.totalorder %s21, 0
      %p131 = por %p129, %p130
      %p132 = scmp.ne.s32.totalorder %s120, %s121
      %p133 = scmp.eq.s32.totalorder %s22, 1
      %p134 = por %p132, %p133
      %p136 = scmp.ne.s32.totalorder %s121, %s135
      %p137 = scmp.eq.s32.totalorder %s22, 0
      %p138 = por %p136, %p137
      %s140 = sadd.s32 %s139, 1
      %p143 = scmp.eq.s32.totalorder %s16, 1
      %p144 = scmp.ne.s32.totalorder %s139, %s141
      %p145 = scmp.eq.s32.totalorder %s16, 0
      %p146 = por %p144, %p145
      %p147 = scmp.ne.s32.totalorder %s139, %s141
      %p148 = scmp.eq.s32.totalorder %s21, 1
      %p149 = por %p147, %p148
      %p150 = scmp.ne.s32.totalorder %s141, %s142
      %p151 = scmp.eq.s32.totalorder %s21, 0
      %p152 = por %p150, %p151
      %p153 = scmp.ne.s32.totalorder %s141, %s142
      %p154 = scmp.eq.s32.totalorder %s22, 1
      %p155 = por %p153, %p154
      %p157 = scmp.ne.s32.totalorder %s142, %s156
      %p158 = scmp.eq.s32.totalorder %s22, 0
      %p159 = por %p157, %p158
      %s161 = sadd.s32 %s160, 1
      %p164 = scmp.eq.s32.totalorder %s16, 1
      %p165 = scmp.ne.s32.totalorder %s160, %s162
      %p166 = scmp.eq.s32.totalorder %s16, 0
      %p167 = por %p165, %p166
      %p168 = scmp.ne.s32.totalorder %s160, %s162
      %p169 = scmp.eq.s32.totalorder %s21, 1
      %p170 = por %p168, %p169
      %p171 = scmp.ne.s32.totalorder %s162, %s163
      %p172 = scmp.eq.s32.totalorder %s21, 0
      %p173 = por %p171, %p172
      %p174 = scmp.ne.s32.totalorder %s162, %s163
      %p175 = scmp.eq.s32.totalorder %s22, 1
      %p176 = por %p174, %p175
      %p178 = scmp.ne.s32.totalorder %s163, %s177
      %p179 = scmp.eq.s32.totalorder %s22, 0
      %p180 = por %p178, %p179
      %s181 = ssub.s32 %s16, %s23
      %p182 = scmp.eq.s32.totalorder %s181, 0
      %s184 = sadd.s32 %s183, 1
      %s185 = scalar_select %p182, %s183, %s184
      %p188 = pneg %p182
      %p189 = scmp.eq.s32.totalorder %s16, 1
      %p190 = por %p188, %p189
      %p191 = scmp.ne.s32.totalorder %s183, %s186
      %p192 = scmp.eq.s32.totalorder %s16, 0
      %p193 = por %p191, %p192
      %p194 = scmp.ne.s32.totalorder %s183, %s186
      %p195 = scmp.eq.s32.totalorder %s21, 1
      %p196 = por %p194, %p195
      %p197 = scmp.ne.s32.totalorder %s186, %s187
      %p198 = scmp.eq.s32.totalorder %s21, 0
      %p199 = por %p197, %p198
      %p200 = scmp.ne.s32.totalorder %s186, %s187
      %p201 = scmp.eq.s32.totalorder %s22, 1
      %p202 = por %p200, %p201
      %p204 = scmp.ne.s32.totalorder %s187, %s203
      %p205 = scmp.eq.s32.totalorder %s22, 0
      %p206 = por %p204, %p205
      %p207 = scmp.le.s32.totalorder 1, %s16
      %p208 = scmp.lt.s32.totalorder %s16, 3
      %p209 = pnand %p207, %p208
      %p210 = pneg %p209
      // Predicated region
      $region9: #{_lambda_.7} parent=5 // pred_check
        _
      $region10: #{_lambda_.7} parent=5 // pred_check_branch
        %212 = sbr.rel (%p209) target = $region12
      $region11: #{_lambda_.7} parent=5 // pred_region
        %s213 = ssub.s32 %s16, 1
        // Predicated region
        $region13: #{_lambda_.7} parent=11 // pred_check
          %p214 = pneg %p89
        $region14: #{_lambda_.7} parent=11 // pred_check_branch
          %216 = sbr.rel (%p214) target = $region16
        $region15: #{_lambda_.7} parent=11 // pred_region
          _
        $region16: #{_lambda_.7} parent=11 // pred_fallthru
          _
        // Predicated region
        $region17: #{_lambda_.7} parent=11 // pred_check
          %p217 = pneg %p110
        $region18: #{_lambda_.7} parent=11 // pred_check_branch
          %219 = sbr.rel (%p217) target = $region20
        $region19: #{_lambda_.7} parent=11 // pred_region
          _
        $region20: #{_lambda_.7} parent=11 // pred_fallthru
          _
        // Predicated region
        $region21: #{_lambda_.7} parent=11 // pred_check
          %p220 = pneg %p131
        $region22: #{_lambda_.7} parent=11 // pred_check_branch
          %222 = sbr.rel (%p220) target = $region24
        $region23: #{_lambda_.7} parent=11 // pred_region
          _
        $region24: #{_lambda_.7} parent=11 // pred_fallthru
          _
        // Predicated region
        $region25: #{_lambda_.7} parent=11 // pred_check
          %p223 = pneg %p152
        $region26: #{_lambda_.7} parent=11 // pred_check_branch
          %225 = sbr.rel (%p223) target = $region28
        $region27: #{_lambda_.7} parent=11 // pred_region
          _
        $region28: #{_lambda_.7} parent=11 // pred_fallthru
          _
        // Predicated region
        $region29: #{_lambda_.7} parent=11 // pred_check
          %p226 = pneg %p173
        $region30: #{_lambda_.7} parent=11 // pred_check_branch
          %228 = sbr.rel (%p226) target = $region32
        $region31: #{_lambda_.7} parent=11 // pred_region
          _
        $region32: #{_lambda_.7} parent=11 // pred_fallthru
          _
      $region12: #{_lambda_.7} parent=5 // pred_fallthru
        _
      %p229 = scmp.lt.s32.totalorder %s16, 2
      // Predicated region
      $region33: #{_lambda_.7} parent=5 // pred_check
        %p230 = pneg %p229
      $region34: #{_lambda_.7} parent=5 // pred_check_branch
        %232 = sbr.rel (%p230) target = $region36
      $region35: #{_lambda_.7} parent=5 // pred_region
        // Predicated region
        $region37: #{_lambda_.7} parent=35 // pred_check
          %p233 = pneg %p36
        $region38: #{_lambda_.7} parent=35 // pred_check_branch
          %235 = sbr.rel (%p233) target = $region40
        $region39: #{_lambda_.7} parent=35 // pred_region
          %s236 = smul.u32 8, %s16
          %p237 = scmp.lt.s32.totalorder %s236, 15
          %s238 = scalar_select %p237, %s236, 15
          %s239 = smul.addr %s238, 4
          %s240 = scalar_lea.vmem %s0, %s239
          %s241 = smul.u32 8, %s16
        $region40: #{_lambda_.7} parent=35 // pred_fallthru
          _
        // Predicated region
        $region41: #{_lambda_.7} parent=35 // pred_check
          %p242 = pneg %p62
        $region42: #{_lambda_.7} parent=35 // pred_check_branch
          %244 = sbr.rel (%p242) target = $region44
        $region43: #{_lambda_.7} parent=35 // pred_region
          %s245 = smul.u32 8, %s16
          %p246 = scmp.lt.s32.totalorder %s245, 15
          %s247 = scalar_select %p246, %s245, 15
          %s248 = smul.addr %s247, 8
          %s249 = scalar_lea.vmem %s1, %s248
          %s250 = smul.u32 8, %s16
        $region44: #{_lambda_.7} parent=35 // pred_fallthru
          _
      $region36: #{_lambda_.7} parent=5 // pred_fallthru
        _
      %p251 = scmp.le.s32.totalorder 1, %s16
      %p252 = scmp.lt.s32.totalorder %s16, 3
      %p253 = pnand %p251, %p252
      %p254 = pneg %p253
      // Predicated region
      $region45: #{_lambda_.7} parent=5 // pred_check
        _
      $region46: #{_lambda_.7} parent=5 // pred_check_branch
        %256 = sbr.rel (%p253) target = $region48
      $region47: #{_lambda_.7} parent=5 // pred_region
        %s257 = ssub.s32 %s16, 1
        %s258 = smul.u32 8, %s21
        %p259 = scmp.lt.s32.totalorder %s258, 15
        %s260 = scalar_select %p259, %s258, 15
        %s261 = smul.addr %s260, 4
        %s262 = scalar_lea.vmem %s0, %s261
        %p263 = pneg %p42
        %p264 = pneg %p39
        %s265 = smul.u32 8, %s21
        %p266 = scmp.lt.s32.totalorder %s265, 15
        %s267 = scalar_select %p266, %s265, 15
        %s268 = smul.addr %s267, 8
        %s269 = scalar_lea.vmem %s1, %s268
        %p270 = pneg %p68
        %p271 = pneg %p65
        %p272 = pneg %p89
        %p273 = pneg %p86
        %p274 = pneg %p110
        %p275 = pneg %p107
        %p276 = pneg %p131
        %p277 = pneg %p128
        %p278 = pneg %p152
        %p279 = pneg %p149
        %p280 = pneg %p173
        %p281 = pneg %p170
        %p282 = pneg %p199
        %p283 = pneg %p196
        %s284 = sand.u32 %s186, 1
        %s285 = scalar_lea.sflag [#allocation3], %s284
        %s286 = sand.u32 %s186, 1
        %s287 = smul.addr %s286, 64
        %s288 = scalar_lea.vmem [#allocation2], %s287
        %s289 = smul.u32 8, %s21
        %p290 = scmp.lt.s32.totalorder %s289, 15
        %s291 = scalar_select %p290, %s289, 15
        %s292 = smul.addr %s291, 4
        %s293 = scalar_lea.vmem %s0, %s292
        %s294 = smul.u32 8, %s21
        %s295 = smul.u32 8, %s21
        %p296 = scmp.lt.s32.totalorder %s295, 15
        %s297 = scalar_select %p296, %s295, 15
        %s298 = smul.addr %s297, 8
        %s299 = scalar_lea.vmem %s1, %s298
        %s300 = smul.u32 8, %s21
        %s301 = smul.u32 8, %s21
        %v303 = vld [vmem:[%s293] sm:$0xf]
        %v304 = vld [vmem:[%s293 + $0x4] sm:$0xf]
        %v305 = vld [vmem:[%s293 + $0x8] sm:$0xf]
        %v306 = vld [vmem:[%s293 + $0xc] sm:$0xf]
        %v307 = vld [vmem:[%s293 + $0x10] sm:$0xf]
        %v308 = vld [vmem:[%s293 + $0x14] sm:$0xf]
        %v309 = vld [vmem:[%s293 + $0x18] sm:$0xf]
        %v310 = vld [vmem:[%s293 + $0x1c] sm:$0xf]
        %v311 = vunpack.c.l.bf16 %v303
        %v312 = vunpack.c.l.bf16 %v304
        %v313 = vunpack.c.l.bf16 %v305
        %v314 = vunpack.c.l.bf16 %v306
        %v315 = vunpack.c.l.bf16 %v307
        %v316 = vunpack.c.l.bf16 %v308
        %v317 = vunpack.c.l.bf16 %v309
        %v318 = vunpack.c.l.bf16 %v310
        %v319 = vld [vmem:[%s2] sm:$0x1]
        %v321 = vlaneseq
        %v322 = vshrl.u32 %v321, 7
        %v323 = vsub.s32 0, %v322
        %v324 = vrot.slane %v319, %v323
        %v326 = vmul.f32 %v311, %v324
        %v327 = vmul.f32 %v312, %v324
        %v328 = vmul.f32 %v313, %v324
        %v329 = vmul.f32 %v314, %v324
        %v330 = vmul.f32 %v315, %v324
        %v331 = vmul.f32 %v316, %v324
        %v332 = vmul.f32 %v317, %v324
        %v333 = vmul.f32 %v318, %v324
        %v334 = vld [vmem:[%s3] sm:$0x1]
        %v336 = vlaneseq
        %v337 = vshrl.u32 %v336, 7
        %v338 = vsub.s32 0, %v337
        %v339 = vrot.slane %v334, %v338
        %v341 = vadd.f32 %v326, %v339
        %v342 = vadd.f32 %v327, %v339
        %v343 = vadd.f32 %v328, %v339
        %v344 = vadd.f32 %v329, %v339
        %v345 = vadd.f32 %v330, %v339
        %v346 = vadd.f32 %v331, %v339
        %v347 = vadd.f32 %v332, %v339
        %v348 = vadd.f32 %v333, %v339
        %v349 = vmax.f32 %v341, 0.0
        %v350 = vmax.f32 %v342, 0.0
        %v351 = vmax.f32 %v343, 0.0
        %v352 = vmax.f32 %v344, 0.0
        %v353 = vmax.f32 %v345, 0.0
        %v354 = vmax.f32 %v346, 0.0
        %v355 = vmax.f32 %v347, 0.0
        %v356 = vmax.f32 %v348, 0.0
        %v357 = vpack.c.bf16 %v350, %v349
        %v358 = vpack.c.bf16 %v352, %v351
        %v359 = vpack.c.bf16 %v354, %v353
        %v360 = vpack.c.bf16 %v356, %v355
        %v361 = vld [vmem:[%s4] sm:$0xf]
        %v362 = vld [vmem:[%s4 + $0x4] sm:$0xf]
        %v363 = vld [vmem:[%s4 + $0x8] sm:$0xf]
        %v364 = vld [vmem:[%s4 + $0xc] sm:$0xf]
        %v365 = vld [vmem:[%s4 + $0x10] sm:$0xf]
        %v366 = vld [vmem:[%s4 + $0x14] sm:$0xf]
        %v367 = vld [vmem:[%s4 + $0x18] sm:$0xf]
        %v368 = vld [vmem:[%s4 + $0x1c] sm:$0xf]
        %v369 = vld [vmem:[%s4 + $0x20] sm:$0xf]
        %v370 = vld [vmem:[%s4 + $0x24] sm:$0xf]
        %v371 = vld [vmem:[%s4 + $0x28] sm:$0xf]
        %v372 = vld [vmem:[%s4 + $0x2c] sm:$0xf]
        %v373 = vld [vmem:[%s4 + $0x30] sm:$0xf]
        %v374 = vld [vmem:[%s4 + $0x34] sm:$0xf]
        %v375 = vld [vmem:[%s4 + $0x38] sm:$0xf]
        %v376 = vld [vmem:[%s4 + $0x3c] sm:$0xf]
        %v393 = vunpack.c.l.b16 %v361
        %v394 = vunpack.c.l.b16 %v362
        %v395 = vunpack.c.l.b16 %v363
        %v396 = vunpack.c.l.b16 %v364
        %v397 = vunpack.c.l.b16 %v365
        %v398 = vunpack.c.l.b16 %v366
        %v399 = vunpack.c.l.b16 %v367
        %v400 = vunpack.c.l.b16 %v368
        %v401 = vunpack.c.l.b16 %v369
        %v402 = vunpack.c.l.b16 %v370
        %v403 = vunpack.c.l.b16 %v371
        %v404 = vunpack.c.l.b16 %v372
        %v405 = vunpack.c.l.b16 %v373
        %v406 = vunpack.c.l.b16 %v374
        %v407 = vunpack.c.l.b16 %v375
        %v408 = vunpack.c.l.b16 %v376
        %v409 = vpack.c.b16 %v394, %v393
        %v410 = vpack.c.b16 %v396, %v395
        %v411 = vpack.c.b16 %v398, %v397
        %v412 = vpack.c.b16 %v400, %v399
        %v413 = vpack.c.b16 %v402, %v401
        %v414 = vpack.c.b16 %v404, %v403
        %v415 = vpack.c.b16 %v406, %v405
        %v416 = vpack.c.b16 %v408, %v407
        %425 = vmatprep.subr.bf16.mxu0 0
        %426 = vmatpush1.bf16.msra.mxu0 %v416
        %427 = vmatprep.subr.bf16.mxu0 0
        %428 = vmatpush1.bf16.msra.mxu0 %v415
        %429 = vmatprep.subr.bf16.mxu0 0
        %430 = vmatpush1.bf16.msra.mxu0 %v414
        %431 = vmatprep.subr.bf16.mxu0 0
        %432 = vmatpush1.bf16.msra.mxu0 %v413
        %433 = vmatprep.subr.bf16.mxu0 0
        %434 = vmatpush1.bf16.msra.mxu0 %v412
        %435 = vmatprep.subr.bf16.mxu0 0
        %436 = vmatpush1.bf16.msra.mxu0 %v411
        %437 = vmatprep.subr.bf16.mxu0 0
        %438 = vmatpush1.bf16.msra.mxu0 %v410
        %439 = vmatprep.subr.bf16.mxu0 0
        %440 = vmatpush1.bf16.msra.mxu0 %v409
        %441 = vmatprep.subr.bf16.mxu0 0
        %442 = vmatpush2.bf16.msra.mxu0 0
        %443 = vmatprep.subr.bf16.mxu0 0
        %444 = vmatpush2.bf16.msra.mxu0 0
        %445 = vmatprep.subr.bf16.mxu0 0
        %446 = vmatpush2.bf16.msra.mxu0 0
        %447 = vmatprep.subr.bf16.mxu0 0
        %448 = vmatpush2.bf16.msra.mxu0 0
        %449 = vmatprep.subr.bf16.mxu0 0
        %450 = vmatpush2.bf16.msra.mxu0 0
        %451 = vmatprep.subr.bf16.mxu0 0
        %452 = vmatpush2.bf16.msra.mxu0 0
        %453 = vmatprep.subr.bf16.mxu0 0
        %454 = vmatpush2.bf16.msra.mxu0 0
        %455 = vmatprep.subr.bf16.mxu0 0
        %456 = vmatpush2.bf16.msra.mxu0 0
        %457 = vmatprep.mubr.bf16.mxu0 0
        %458 = vmatmul.mubr.bf16.gmra.mxu0 %v357
        %v459 = vpop.f32.mrf.mxu0
        %v460 = vadd.f32 0.0, %v459
        %v461 = vpop.f32.mrf.mxu0
        %v462 = vpop.f32.mrf.mxu0
        %v463 = vadd.f32 0.0, %v462
        %v464 = vpop.f32.mrf.mxu0
        %465 = vmatprep.mubr.bf16.mxu0 0
        %466 = vmatmul.mubr.bf16.gmra.mxu0 %v358
        %v467 = vpop.f32.mrf.mxu0
        %v468 = vadd.f32 0.0, %v467
        %v469 = vpop.f32.mrf.mxu0
        %v470 = vpop.f32.mrf.mxu0
        %v471 = vadd.f32 0.0, %v470
        %v472 = vpop.f32.mrf.mxu0
        %473 = vmatprep.mubr.bf16.mxu0 0
        %474 = vmatmul.mubr.bf16.gmra.mxu0 %v359
        %v475 = vpop.f32.mrf.mxu0
        %v476 = vadd.f32 0.0, %v475
        %v477 = vpop.f32.mrf.mxu0
        %v478 = vpop.f32.mrf.mxu0
        %v479 = vadd.f32 0.0, %v478
        %v480 = vpop.f32.mrf.mxu0
        %481 = vmatprep.mubr.bf16.mxu0 0
        %482 = vmatmul.mubr.bf16.gmra.mxu0 %v360
        %v483 = vpop.f32.mrf.mxu0
        %v484 = vadd.f32 0.0, %v483
        %v485 = vpop.f32.mrf.mxu0
        %v486 = vpop.f32.mrf.mxu0
        %v487 = vadd.f32 0.0, %v486
        %v488 = vpop.f32.mrf.mxu0
        %489 = vdwg.mxu0
        %v490 = vld [vmem:[%s5] sm:$0x1]
        %v492 = vlaneseq
        %v493 = vshrl.u32 %v492, 7
        %v494 = vsub.s32 0, %v493
        %v495 = vrot.slane %v490, %v494
        %v497 = vmul.f32 %v460, %v495
        %v498 = vmul.f32 %v463, %v495
        %v499 = vmul.f32 %v468, %v495
        %v500 = vmul.f32 %v471, %v495
        %v501 = vmul.f32 %v476, %v495
        %v502 = vmul.f32 %v479, %v495
        %v503 = vmul.f32 %v484, %v495
        %v504 = vmul.f32 %v487, %v495
        %v505 = vld [vmem:[%s6] sm:$0x1]
        %v507 = vlaneseq
        %v508 = vshrl.u32 %v507, 7
        %v509 = vsub.s32 0, %v508
        %v510 = vrot.slane %v505, %v509
        %v512 = vadd.f32 %v497, %v510
        %v513 = vadd.f32 %v498, %v510
        %v514 = vadd.f32 %v499, %v510
        %v515 = vadd.f32 %v500, %v510
        %v516 = vadd.f32 %v501, %v510
        %v517 = vadd.f32 %v502, %v510
        %v518 = vadd.f32 %v503, %v510
        %v519 = vadd.f32 %v504, %v510
        %v520 = vld [vmem:[%s299] sm:$0xff]
        %v521 = vld [vmem:[%s299 + $0x8] sm:$0xff]
        %v522 = vld [vmem:[%s299 + $0x10] sm:$0xff]
        %v523 = vld [vmem:[%s299 + $0x18] sm:$0xff]
        %v524 = vld [vmem:[%s299 + $0x20] sm:$0xff]
        %v525 = vld [vmem:[%s299 + $0x28] sm:$0xff]
        %v526 = vld [vmem:[%s299 + $0x30] sm:$0xff]
        %v527 = vld [vmem:[%s299 + $0x38] sm:$0xff]
        %v528 = vadd.f32 %v512, %v520
        %v529 = vadd.f32 %v513, %v521
        %v530 = vadd.f32 %v514, %v522
        %v531 = vadd.f32 %v515, %v523
        %v532 = vadd.f32 %v516, %v524
        %v533 = vadd.f32 %v517, %v525
        %v534 = vadd.f32 %v518, %v526
        %v535 = vadd.f32 %v519, %v527
        %v536 = vmax.f32 %v528, 0.0
        %v537 = vmax.f32 %v529, 0.0
        %v538 = vmax.f32 %v530, 0.0
        %v539 = vmax.f32 %v531, 0.0
        %v540 = vmax.f32 %v532, 0.0
        %v541 = vmax.f32 %v533, 0.0
        %v542 = vmax.f32 %v534, 0.0
        %v543 = vmax.f32 %v535, 0.0
        %544 = vst [vmem:[%s288] sm:$0xff] %v536
        %545 = vst [vmem:[%s288 + $0x8] sm:$0xff] %v537
        %546 = vst [vmem:[%s288 + $0x10] sm:$0xff] %v538
        %547 = vst [vmem:[%s288 + $0x18] sm:$0xff] %v539
        %548 = vst [vmem:[%s288 + $0x20] sm:$0xff] %v540
        %549 = vst [vmem:[%s288 + $0x28] sm:$0xff] %v541
        %550 = vst [vmem:[%s288 + $0x30] sm:$0xff] %v542
        %551 = vst [vmem:[%s288 + $0x38] sm:$0xff] %v543
        %s552 = sand.u32 %s186, 1
        %s553 = scalar_lea.sflag [#allocation3], %s552
        %s554 = sand.u32 %s186, 1
        %s555 = smul.addr %s554, 64
        %s556 = scalar_lea.vmem [#allocation2], %s555
        // Predicated region
        $region49: #{_lambda_.7} parent=47 // pred_check
          %p557 = pneg %p196
        $region50: #{_lambda_.7} parent=47 // pred_check_branch
          %559 = sbr.rel (%p557) target = $region52
        $region51: #{_lambda_.7} parent=47 // pred_region
          %s560 = smul.u32 8, %s21
          %s562 = ssub.s32 1024, 1024
          %563 = vsyncadd %s553, %s562
          %s564 = smul.addr %s560, 128
          %s565 = scalar_lea.hbm %s7, %s564
          %s566 = sshll.u32 %s556, 4
          %s567 = int_to_ptr.vmem [resolvable:$true] %s566
          %572 = dma.vmem_to_hbm [thread:$0]  %s567, 1024, %s565, %s553, 128, 128, 8
        $region52: #{_lambda_.7} parent=47 // pred_fallthru
          _
      $region48: #{_lambda_.7} parent=5 // pred_fallthru
        _
      %p573 = scmp.le.s32.totalorder 2, %s16
      // Predicated region
      $region53: #{_lambda_.7} parent=5 // pred_check
        %p574 = pneg %p573
      $region54: #{_lambda_.7} parent=5 // pred_check_branch
        %576 = sbr.rel (%p574) target = $region56
      $region55: #{_lambda_.7} parent=5 // pred_region
        %s577 = ssub.s32 %s16, 2
        // Predicated region
        $region57: #{_lambda_.7} parent=55 // pred_check
          %p578 = pneg %p202
        $region58: #{_lambda_.7} parent=55 // pred_check_branch
          %580 = sbr.rel (%p578) target = $region60
        $region59: #{_lambda_.7} parent=55 // pred_region
          %s581 = sand.u32 %s187, 1
          %s582 = scalar_lea.sflag [#allocation3], %s581
          %s583 = sand.u32 %s187, 1
          %s584 = smul.addr %s583, 64
          %s585 = scalar_lea.vmem [#allocation2], %s584
          %586 = dma.done %s582, 1024
        $region60: #{_lambda_.7} parent=55 // pred_fallthru
          _
      $region56: #{_lambda_.7} parent=5 // pred_fallthru
        _
    $region6: #{_lambda_.7} parent=1 // loop_footer
      %s20 = sadd.s32 1, %s16
    $region7: #{_lambda_.7} parent=1 // loop_footer_branch
      %15 = sbr.rel target = $region3
    $region8: #{_lambda_.7} parent=1 // loop_exit
      _
    %587 = vsyncpa [#allocation3], 1
    %s588 = scalar_lea.sflag [#allocation3], 1
    %589 = vsyncpa %s588, 1

// kernel: _lambda_.5
$region0: #{_lambda_.5}
  #allocation0 [shape = 'u32[]', space=smem, size = 0x4, offset = 0x4, fixed_abs, tag = 'smem constant byte address 0x4 - core index']
  #allocation1 [shape = 'u32[144,128]{1,0:T(1,128)}', space=vmem, size = 0x12000, scoped, tag = 'internal scratch']
  #allocation2 [shape = 'bf16[10,10,128]{2,1,0:T(8,128)(2,1)}', space=vmem, size = 0xa000, scoped, tag = 'scratch operand']
  #allocation3 [shape = 'bf16[64,1152]{1,0:T(8,128)(2,1)}', space=vmem, size = 0x24000, scoped, tag = 'scratch operand']
  %s0 = inlined_call_operand.vmem [shape: bf16[2,8,8,128], index: 0, kind: input, shape index: {}]
  %s1 = inlined_call_operand.vmem [shape: f32[1,128], index: 1, kind: input, shape index: {}]
  %s2 = inlined_call_operand.vmem [shape: f32[1,128], index: 2, kind: input, shape index: {}]
  %s3 = inlined_call_operand.vmem [shape: bf16[1152,128], index: 3, kind: input, shape index: {}]
  %s4 = inlined_call_operand.vmem [shape: bf16[2,64,128], index: 4, kind: output, shape index: {0}]
  %s5 = inlined_call_operand.vmem [shape: f32[2,2,128], index: 5, kind: output, shape index: {1}]
  %6 = xla_tuple %s4, %s5
  %s7 = sld [smem:[#allocation0]]
  $region57: #{_lambda_.5} parent=0
    _
  %s9 = ssub.s32 1, %s7
  %s10 = scalar_select 0, %s9, %s7
  loop: start=0, step=1, limit=4
  $region2: #{_lambda_.5} parent=0 // loop_pre_header
    _
  $region3: #{_lambda_.5} parent=0 // loop_header
    %s12 = sphi 0, %s16
    %p13 = scmp.ge.s32.totalorder %s12, 4
    %s22 = sphi 0, %s24
    %s25 = sphi 0, %s22
    %s26 = sphi 0, %s25
    %s42 = sphi 0, %s26
    %s46 = sphi 0, %s46
    %s48 = sphi 0, %s46
    %s49 = sphi 0, %s48
    %s63 = sphi 0, %s49
    %s67 = sphi 0, %s67
    %s69 = sphi 0, %s67
    %s70 = sphi 0, %s69
    %s84 = sphi 0, %s70
    %s88 = sphi 0, %s88
    %s90 = sphi 0, %s88
    %s91 = sphi 0, %s90
    %s105 = sphi 0, %s91
    %s111 = sphi 0, %s113
    %s114 = sphi 0, %s111
    %s115 = sphi 0, %s114
    %s131 = sphi 0, %s115
    %s137 = sphi 0, %s139
    %s140 = sphi 0, %s137
    %s141 = sphi 0, %s140
    %s157 = sphi 0, %s141
  $region4: #{_lambda_.5} parent=0 // loop_header_branch
    %15 = sbr.rel (%p13) target = $region8
  $region5: #{_lambda_.5} parent=0 // loop_body
    %s17 = ssub.s32 %s12, 1
    %s18 = ssub.s32 %s12, 2
    %s19 = sadd.s32 %s12, 1
    %s20 = ssub.s32 %s12, %s19
    %p21 = scmp.eq.s32.totalorder %s20, 0
    %s23 = sadd.s32 %s22, 1
    %s24 = scalar_select %p21, %s22, %s23
    %p27 = pneg %p21
    %p28 = scmp.eq.s32.totalorder %s12, 1
    %p29 = por %p27, %p28
    %p30 = scmp.ne.s32.totalorder %s22, %s25
    %p31 = scmp.eq.s32.totalorder %s12, 0
    %p32 = por %p30, %p31
    %p33 = scmp.ne.s32.totalorder %s22, %s25
    %p34 = scmp.eq.s32.totalorder %s17, 1
    %p35 = por %p33, %p34
    %p36 = scmp.ne.s32.totalorder %s25, %s26
    %p37 = scmp.eq.s32.totalorder %s17, 0
    %p38 = por %p36, %p37
    %p39 = scmp.ne.s32.totalorder %s25, %s26
    %p40 = scmp.eq.s32.totalorder %s18, 1
    %p41 = por %p39, %p40
    %p43 = scmp.ne.s32.totalorder %s26, %s42
    %p44 = scmp.eq.s32.totalorder %s18, 0
    %p45 = por %p43, %p44
    %s47 = sadd.s32 %s46, 1
    %p50 = scmp.eq.s32.totalorder %s12, 1
    %p51 = scmp.ne.s32.totalorder %s46, %s48
    %p52 = scmp.eq.s32.totalorder %s12, 0
    %p53 = por %p51, %p52
    %p54 = scmp.ne.s32.totalorder %s46, %s48
    %p55 = scmp.eq.s32.totalorder %s17, 1
    %p56 = por %p54, %p55
    %p57 = scmp.ne.s32.totalorder %s48, %s49
    %p58 = scmp.eq.s32.totalorder %s17, 0
    %p59 = por %p57, %p58
    %p60 = scmp.ne.s32.totalorder %s48, %s49
    %p61 = scmp.eq.s32.totalorder %s18, 1
    %p62 = por %p60, %p61
    %p64 = scmp.ne.s32.totalorder %s49, %s63
    %p65 = scmp.eq.s32.totalorder %s18, 0
    %p66 = por %p64, %p65
    %s68 = sadd.s32 %s67, 1
    %p71 = scmp.eq.s32.totalorder %s12, 1
    %p72 = scmp.ne.s32.totalorder %s67, %s69
    %p73 = scmp.eq.s32.totalorder %s12, 0
    %p74 = por %p72, %p73
    %p75 = scmp.ne.s32.totalorder %s67, %s69
    %p76 = scmp.eq.s32.totalorder %s17, 1
    %p77 = por %p75, %p76
    %p78 = scmp.ne.s32.totalorder %s69, %s70
    %p79 = scmp.eq.s32.totalorder %s17, 0
    %p80 = por %p78, %p79
    %p81 = scmp.ne.s32.totalorder %s69, %s70
    %p82 = scmp.eq.s32.totalorder %s18, 1
    %p83 = por %p81, %p82
    %p85 = scmp.ne.s32.totalorder %s70, %s84
    %p86 = scmp.eq.s32.totalorder %s18, 0
    %p87 = por %p85, %p86
    %s89 = sadd.s32 %s88, 1
    %p92 = scmp.eq.s32.totalorder %s12, 1
    %p93 = scmp.ne.s32.totalorder %s88, %s90
    %p94 = scmp.eq.s32.totalorder %s12, 0
    %p95 = por %p93, %p94
    %p96 = scmp.ne.s32.totalorder %s88, %s90
    %p97 = scmp.eq.s32.totalorder %s17, 1
    %p98 = por %p96, %p97
    %p99 = scmp.ne.s32.totalorder %s90, %s91
    %p100 = scmp.eq.s32.totalorder %s17, 0
    %p101 = por %p99, %p100
    %p102 = scmp.ne.s32.totalorder %s90, %s91
    %p103 = scmp.eq.s32.totalorder %s18, 1
    %p104 = por %p102, %p103
    %p106 = scmp.ne.s32.totalorder %s91, %s105
    %p107 = scmp.eq.s32.totalorder %s18, 0
    %p108 = por %p106, %p107
    %s109 = ssub.s32 %s12, %s19
    %p110 = scmp.eq.s32.totalorder %s109, 0
    %s112 = sadd.s32 %s111, 1
    %s113 = scalar_select %p110, %s111, %s112
    %p116 = pneg %p110
    %p117 = scmp.eq.s32.totalorder %s12, 1
    %p118 = por %p116, %p117
    %p119 = scmp.ne.s32.totalorder %s111, %s114
    %p120 = scmp.eq.s32.totalorder %s12, 0
    %p121 = por %p119, %p120
    %p122 = scmp.ne.s32.totalorder %s111, %s114
    %p123 = scmp.eq.s32.totalorder %s17, 1
    %p124 = por %p122, %p123
    %p125 = scmp.ne.s32.totalorder %s114, %s115
    %p126 = scmp.eq.s32.totalorder %s17, 0
    %p127 = por %p125, %p126
    %p128 = scmp.ne.s32.totalorder %s114, %s115
    %p129 = scmp.eq.s32.totalorder %s18, 1
    %p130 = por %p128, %p129
    %p132 = scmp.ne.s32.totalorder %s115, %s131
    %p133 = scmp.eq.s32.totalorder %s18, 0
    %p134 = por %p132, %p133
    %s135 = ssub.s32 %s12, %s19
    %p136 = scmp.eq.s32.totalorder %s135, 0
    %s138 = sadd.s32 %s137, 1
    %s139 = scalar_select %p136, %s137, %s138
    %p142 = pneg %p136
    %p143 = scmp.eq.s32.totalorder %s12, 1
    %p144 = por %p142, %p143
    %p145 = scmp.ne.s32.totalorder %s137, %s140
    %p146 = scmp.eq.s32.totalorder %s12, 0
    %p147 = por %p145, %p146
    %p148 = scmp.ne.s32.totalorder %s137, %s140
    %p149 = scmp.eq.s32.totalorder %s17, 1
    %p150 = por %p148, %p149
    %p151 = scmp.ne.s32.totalorder %s140, %s141
    %p152 = scmp.eq.s32.totalorder %s17, 0
    %p153 = por %p151, %p152
    %p154 = scmp.ne.s32.totalorder %s140, %s141
    %p155 = scmp.eq.s32.totalorder %s18, 1
    %p156 = por %p154, %p155
    %p158 = scmp.ne.s32.totalorder %s141, %s157
    %p159 = scmp.eq.s32.totalorder %s18, 0
    %p160 = por %p158, %p159
    %p161 = scmp.le.s32.totalorder 1, %s12
    %p162 = scmp.lt.s32.totalorder %s12, 3
    %p163 = pnand %p161, %p162
    %p164 = pneg %p163
    // Predicated region
    $region9: #{_lambda_.5} parent=5 // pred_check
      _
    $region10: #{_lambda_.5} parent=5 // pred_check_branch
      %166 = sbr.rel (%p163) target = $region12
    $region11: #{_lambda_.5} parent=5 // pred_region
      %s167 = ssub.s32 %s12, 1
      // Predicated region
      $region13: #{_lambda_.5} parent=11 // pred_check
        %p168 = pneg %p59
      $region14: #{_lambda_.5} parent=11 // pred_check_branch
        %170 = sbr.rel (%p168) target = $region16
      $region15: #{_lambda_.5} parent=11 // pred_region
        _
      $region16: #{_lambda_.5} parent=11 // pred_fallthru
        _
      // Predicated region
      $region17: #{_lambda_.5} parent=11 // pred_check
        %p171 = pneg %p80
      $region18: #{_lambda_.5} parent=11 // pred_check_branch
        %173 = sbr.rel (%p171) target = $region20
      $region19: #{_lambda_.5} parent=11 // pred_region
        _
      $region20: #{_lambda_.5} parent=11 // pred_fallthru
        _
      // Predicated region
      $region21: #{_lambda_.5} parent=11 // pred_check
        %p174 = pneg %p101
      $region22: #{_lambda_.5} parent=11 // pred_check_branch
        %176 = sbr.rel (%p174) target = $region24
      $region23: #{_lambda_.5} parent=11 // pred_region
        _
      $region24: #{_lambda_.5} parent=11 // pred_fallthru
        _
    $region12: #{_lambda_.5} parent=5 // pred_fallthru
      _
    %p177 = scmp.lt.s32.totalorder %s12, 2
    // Predicated region
    $region25: #{_lambda_.5} parent=5 // pred_check
      %p178 = pneg %p177
    $region26: #{_lambda_.5} parent=5 // pred_check_branch
      %180 = sbr.rel (%p178) target = $region28
    $region27: #{_lambda_.5} parent=5 // pred_region
      // Predicated region
      $region29: #{_lambda_.5} parent=27 // pred_check
        %p181 = pneg %p32
      $region30: #{_lambda_.5} parent=27 // pred_check_branch
        %183 = sbr.rel (%p181) target = $region32
      $region31: #{_lambda_.5} parent=27 // pred_region
        %p184 = scmp.lt.s32.totalorder %s12, 1
        %s185 = scalar_select %p184, %s12, 1
        %s186 = smul.addr %s185, 8
        %s187 = smul.addr %s186, 4
        %s188 = scalar_lea.vmem %s0, %s187
      $region32: #{_lambda_.5} parent=27 // pred_fallthru
        _
    $region28: #{_lambda_.5} parent=5 // pred_fallthru
      _
    %p189 = scmp.le.s32.totalorder 1, %s12
    %p190 = scmp.lt.s32.totalorder %s12, 3
    %p191 = pnand %p189, %p190
    %p192 = pneg %p191
    // Predicated region
    $region33: #{_lambda_.5} parent=5 // pred_check
      _
    $region34: #{_lambda_.5} parent=5 // pred_check_branch
      %194 = sbr.rel (%p191) target = $region36
    $region35: #{_lambda_.5} parent=5 // pred_region
      %s195 = ssub.s32 %s12, 1
      %p196 = scmp.lt.s32.totalorder %s17, 1
      %s197 = scalar_select %p196, %s17, 1
      %s198 = smul.addr %s197, 8
      %s199 = smul.addr %s198, 4
      %s200 = scalar_lea.vmem %s0, %s199
      %p201 = pneg %p38
      %p202 = pneg %p35
      %p203 = pneg %p59
      %p204 = pneg %p56
      %p205 = pneg %p80
      %p206 = pneg %p77
      %p207 = pneg %p101
      %p208 = pneg %p98
      %p209 = pneg %p127
      %p210 = pneg %p124
      %p211 = scmp.lt.s32.totalorder %s17, 1
      %s212 = scalar_select %p211, %s17, 1
      %s213 = smul.addr %s212, 8
      %s214 = smul.addr %s213, 4
      %s215 = scalar_lea.vmem %s4, %s214
      %p216 = pneg %p153
      %p217 = pneg %p150
      %p218 = scmp.lt.s32.totalorder %s17, 1
      %s219 = scalar_select %p218, %s17, 1
      %s220 = smul.addr %s219, 2
      %s221 = scalar_lea.vmem %s5, %s220
      %p222 = scmp.lt.s32.totalorder %s17, 1
      %s223 = scalar_select %p222, %s17, 1
      %s224 = smul.addr %s223, 8
      %s225 = smul.addr %s224, 4
      %s226 = scalar_lea.vmem %s0, %s225
      %p227 = scmp.lt.s32.totalorder %s17, 1
      %s228 = scalar_select %p227, %s17, 1
      %s229 = smul.addr %s228, 8
      %s230 = smul.addr %s229, 4
      %s231 = scalar_lea.vmem %s4, %s230
      %p232 = scmp.lt.s32.totalorder %s17, 1
      %s233 = scalar_select %p232, %s17, 1
      %s234 = smul.addr %s233, 2
      %s235 = scalar_lea.vmem %s5, %s234
      %237 = vst [vmem:[#allocation2] sm:$0xf] 0
      %238 = vst [vmem:[#allocation2 + $0x4] sm:$0x1] 0
      %s239 = scalar_lea.vmem [#allocation2], 72
      %240 = vst [vmem:[%s239] sm:$0xf] 0
      %241 = vst [vmem:[%s239 + $0x4] sm:$0x1] 0
      %s242 = scalar_lea.vmem [#allocation2], 8
      %vm243 = vcmask 1040384
      %vm244 = vsmask.f32 256
      %vm245 = vmand %vm243, %vm244
      %v246 = vld [vmem:[%s242] sm:$0x1]
      %v247 = vsel %vm245, 0, %v246
      %248 = vst [vmem:[%s242] sm:$0x1] %v247
      %v249 = vld [vmem:[%s242 + $0x8] sm:$0x1]
      %v250 = vsel %vm245, 0, %v249
      %251 = vst [vmem:[%s242 + $0x8] sm:$0x1] %v250
      %v252 = vld [vmem:[%s242 + $0x10] sm:$0x1]
      %v253 = vsel %vm245, 0, %v252
      %254 = vst [vmem:[%s242 + $0x10] sm:$0x1] %v253
      %v255 = vld [vmem:[%s242 + $0x18] sm:$0x1]
      %v256 = vsel %vm245, 0, %v255
      %257 = vst [vmem:[%s242 + $0x18] sm:$0x1] %v256
      %v258 = vld [vmem:[%s242 + $0x20] sm:$0x1]
      %v259 = vsel %vm245, 0, %v258
      %260 = vst [vmem:[%s242 + $0x20] sm:$0x1] %v259
      %v261 = vld [vmem:[%s242 + $0x28] sm:$0x1]
      %v262 = vsel %vm245, 0, %v261
      %263 = vst [vmem:[%s242 + $0x28] sm:$0x1] %v262
      %v264 = vld [vmem:[%s242 + $0x30] sm:$0x1]
      %v265 = vsel %vm245, 0, %v264
      %266 = vst [vmem:[%s242 + $0x30] sm:$0x1] %v265
      %v267 = vld [vmem:[%s242 + $0x38] sm:$0x1]
      %v268 = vsel %vm245, 0, %v267
      %269 = vst [vmem:[%s242 + $0x38] sm:$0x1] %v268
      %vm270 = vsmask.f32 7938
      %vm271 = vmand %vm243, %vm270
      %v272 = vld [vmem:[%s242 + $0x4] sm:$0x1]
      %v273 = vsel %vm271, 0, %v272
      %274 = vst [vmem:[%s242 + $0x4] sm:$0x1] %v273
      %v275 = vld [vmem:[%s242 + $0xc] sm:$0x1]
      %v276 = vsel %vm271, 0, %v275
      %277 = vst [vmem:[%s242 + $0xc] sm:$0x1] %v276
      %v278 = vld [vmem:[%s242 + $0x14] sm:$0x1]
      %v279 = vsel %vm271, 0, %v278
      %280 = vst [vmem:[%s242 + $0x14] sm:$0x1] %v279
      %v281 = vld [vmem:[%s242 + $0x1c] sm:$0x1]
      %v282 = vsel %vm271, 0, %v281
      %283 = vst [vmem:[%s242 + $0x1c] sm:$0x1] %v282
      %v284 = vld [vmem:[%s242 + $0x24] sm:$0x1]
      %v285 = vsel %vm271, 0, %v284
      %286 = vst [vmem:[%s242 + $0x24] sm:$0x1] %v285
      %v287 = vld [vmem:[%s242 + $0x2c] sm:$0x1]
      %v288 = vsel %vm271, 0, %v287
      %289 = vst [vmem:[%s242 + $0x2c] sm:$0x1] %v288
      %v290 = vld [vmem:[%s242 + $0x34] sm:$0x1]
      %v291 = vsel %vm271, 0, %v290
      %292 = vst [vmem:[%s242 + $0x34] sm:$0x1] %v291
      %v293 = vld [vmem:[%s242 + $0x3c] sm:$0x1]
      %v294 = vsel %vm271, 0, %v293
      %295 = vst [vmem:[%s242 + $0x3c] sm:$0x1] %v294
      %v296 = vld [vmem:[%s1] sm:$0x1]
      %v297 = vld [vmem:[%s2] sm:$0x1]
      %v298 = vld [vmem:[%s226] sm:$0xf]
      %v299 = vld [vmem:[%s226 + $0x4] sm:$0xf]
      %v300 = vld [vmem:[%s226 + $0x8] sm:$0xf]
      %v301 = vld [vmem:[%s226 + $0xc] sm:$0xf]
      %v302 = vld [vmem:[%s226 + $0x10] sm:$0xf]
      %v303 = vld [vmem:[%s226 + $0x14] sm:$0xf]
      %v304 = vld [vmem:[%s226 + $0x18] sm:$0xf]
      %v305 = vld [vmem:[%s226 + $0x1c] sm:$0xf]
      %v306 = vunpack.c.l.bf16 %v298
      %v307 = vunpack.c.l.bf16 %v299
      %v308 = vunpack.c.l.bf16 %v300
      %v309 = vunpack.c.l.bf16 %v301
      %v310 = vunpack.c.l.bf16 %v302
      %v311 = vunpack.c.l.bf16 %v303
      %v312 = vunpack.c.l.bf16 %v304
      %v313 = vunpack.c.l.bf16 %v305
      %v315 = vlaneseq
      %v316 = vshrl.u32 %v315, 7
      %v317 = vsub.s32 0, %v316
      %v318 = vrot.slane %v296, %v317
      %v320 = vmul.f32 %v306, %v318
      %v321 = vmul.f32 %v307, %v318
      %v322 = vmul.f32 %v308, %v318
      %v323 = vmul.f32 %v309, %v318
      %v324 = vmul.f32 %v310, %v318
      %v325 = vmul.f32 %v311, %v318
      %v326 = vmul.f32 %v312, %v318
      %v327 = vmul.f32 %v313, %v318
      %v329 = vlaneseq
      %v330 = vshrl.u32 %v329, 7
      %v331 = vsub.s32 0, %v330
      %v332 = vrot.slane %v297, %v331
      %v334 = vadd.f32 %v320, %v332
      %v335 = vadd.f32 %v321, %v332
      %v336 = vadd.f32 %v322, %v332
      %v337 = vadd.f32 %v323, %v332
      %v338 = vadd.f32 %v324, %v332
      %v339 = vadd.f32 %v325, %v332
      %v340 = vadd.f32 %v326, %v332
      %v341 = vadd.f32 %v327, %v332
      %v342 = vmax.f32 %v334, 0.0
      %v343 = vmax.f32 %v335, 0.0
      %v344 = vmax.f32 %v336, 0.0
      %v345 = vmax.f32 %v337, 0.0
      %v346 = vmax.f32 %v338, 0.0
      %v347 = vmax.f32 %v339, 0.0
      %v348 = vmax.f32 %v340, 0.0
      %v349 = vmax.f32 %v341, 0.0
      %v350 = vpack.c.bf16 %v342, %v342
      %v351 = vpack.c.bf16 %v343, %v343
      %v352 = vpack.c.bf16 %v344, %v344
      %v353 = vpack.c.bf16 %v345, %v345
      %v354 = vpack.c.bf16 %v346, %v346
      %v355 = vpack.c.bf16 %v347, %v347
      %v356 = vpack.c.bf16 %v348, %v348
      %v357 = vpack.c.bf16 %v349, %v349
      %v366 = vunpack.c.l.b16 %v350
      %v367 = vunpack.c.l.b16 %v351
      %v368 = vunpack.c.l.b16 %v352
      %v369 = vunpack.c.l.b16 %v353
      %v370 = vunpack.c.l.b16 %v354
      %v371 = vunpack.c.l.b16 %v355
      %v372 = vunpack.c.l.b16 %v356
      %v373 = vunpack.c.l.b16 %v357
      %v374 = vpack.c.b16 %v366, %v366
      %v375 = vpack.c.b16 %v367, %v367
      %v376 = vpack.c.b16 %v368, %v368
      %v377 = vpack.c.b16 %v369, %v369
      %v378 = vpack.c.b16 %v370, %v370
      %v379 = vpack.c.b16 %v371, %v371
      %v380 = vpack.c.b16 %v372, %v372
      %v381 = vpack.c.b16 %v373, %v373
      %v383 = vshrl.u32 %v374, 16
      %v385 = vrot.slane %v383, 7
      %v386 = vshll.u32 %v374, 16
      %v388 = vor.u32 %v385, %v386
      %v389 = vrot.slane %v385, 4
      %v391 = vshrl.u32 %v375, 16
      %v393 = vrot.slane %v391, 7
      %v394 = vshll.u32 %v375, 16
      %v396 = vor.u32 %v393, %v394
      %v397 = vrot.slane %v393, 4
      %v399 = vshrl.u32 %v376, 16
      %v401 = vrot.slane %v399, 7
      %v402 = vshll.u32 %v376, 16
      %v404 = vor.u32 %v401, %v402
      %v405 = vrot.slane %v401, 4
      %v407 = vshrl.u32 %v377, 16
      %v409 = vrot.slane %v407, 7
      %v410 = vshll.u32 %v377, 16
      %v412 = vor.u32 %v409, %v410
      %v413 = vrot.slane %v409, 4
      %v415 = vshrl.u32 %v378, 16
      %v417 = vrot.slane %v415, 7
      %v418 = vshll.u32 %v378, 16
      %v420 = vor.u32 %v417, %v418
      %v421 = vrot.slane %v417, 4
      %v423 = vshrl.u32 %v379, 16
      %v425 = vrot.slane %v423, 7
      %v426 = vshll.u32 %v379, 16
      %v428 = vor.u32 %v425, %v426
      %v429 = vrot.slane %v425, 4
      %v431 = vshrl.u32 %v380, 16
      %v433 = vrot.slane %v431, 7
      %v434 = vshll.u32 %v380, 16
      %v436 = vor.u32 %v433, %v434
      %v437 = vrot.slane %v433, 4
      %v439 = vshrl.u32 %v381, 16
      %v441 = vrot.slane %v439, 7
      %v442 = vshll.u32 %v381, 16
      %v444 = vor.u32 %v441, %v442
      %v445 = vrot.slane %v441, 4
      %vm462 = vcmask 1043456
      %vm463 = vmand %vm462, %vm270
      %v464 = vld [vmem:[%s242] sm:$0xf]
      %v465 = vsel %vm463, %v388, %v464
      %466 = vst [vmem:[%s242] sm:$0xf] %v465
      %v467 = vld [vmem:[%s242 + $0x4] sm:$0x1]
      %v468 = vsel %vm245, %v389, %v467
      %469 = vst [vmem:[%s242 + $0x4] sm:$0x1] %v468
      %v470 = vld [vmem:[%s242 + $0x8] sm:$0xf]
      %v471 = vsel %vm463, %v396, %v470
      %472 = vst [vmem:[%s242 + $0x8] sm:$0xf] %v471
      %v473 = vld [vmem:[%s242 + $0xc] sm:$0x1]
      %v474 = vsel %vm245, %v397, %v473
      %475 = vst [vmem:[%s242 + $0xc] sm:$0x1] %v474
      %v476 = vld [vmem:[%s242 + $0x10] sm:$0xf]
      %v477 = vsel %vm463, %v404, %v476
      %478 = vst [vmem:[%s242 + $0x10] sm:$0xf] %v477
      %v479 = vld [vmem:[%s242 + $0x14] sm:$0x1]
      %v480 = vsel %vm245, %v405, %v479
      %481 = vst [vmem:[%s242 + $0x14] sm:$0x1] %v480
      %v482 = vld [vmem:[%s242 + $0x18] sm:$0xf]
      %v483 = vsel %vm463, %v412, %v482
      %484 = vst [vmem:[%s242 + $0x18] sm:$0xf] %v483
      %v485 = vld [vmem:[%s242 + $0x1c] sm:$0x1]
      %v486 = vsel %vm245, %v413, %v485
      %487 = vst [vmem:[%s242 + $0x1c] sm:$0x1] %v486
      %v488 = vld [vmem:[%s242 + $0x20] sm:$0xf]
      %v489 = vsel %vm463, %v420, %v488
      %490 = vst [vmem:[%s242 + $0x20] sm:$0xf] %v489
      %v491 = vld [vmem:[%s242 + $0x24] sm:$0x1]
      %v492 = vsel %vm245, %v421, %v491
      %493 = vst [vmem:[%s242 + $0x24] sm:$0x1] %v492
      %v494 = vld [vmem:[%s242 + $0x28] sm:$0xf]
      %v495 = vsel %vm463, %v428, %v494
      %496 = vst [vmem:[%s242 + $0x28] sm:$0xf] %v495
      %v497 = vld [vmem:[%s242 + $0x2c] sm:$0x1]
      %v498 = vsel %vm245, %v429, %v497
      %499 = vst [vmem:[%s242 + $0x2c] sm:$0x1] %v498
      %v500 = vld [vmem:[%s242 + $0x30] sm:$0xf]
      %v501 = vsel %vm463, %v436, %v500
      %502 = vst [vmem:[%s242 + $0x30] sm:$0xf] %v501
      %v503 = vld [vmem:[%s242 + $0x34] sm:$0x1]
      %v504 = vsel %vm245, %v437, %v503
      %505 = vst [vmem:[%s242 + $0x34] sm:$0x1] %v504
      %v506 = vld [vmem:[%s242 + $0x38] sm:$0xf]
      %v507 = vsel %vm463, %v444, %v506
      %508 = vst [vmem:[%s242 + $0x38] sm:$0xf] %v507
      %v509 = vld [vmem:[%s242 + $0x3c] sm:$0x1]
      %v510 = vsel %vm245, %v445, %v509
      %511 = vst [vmem:[%s242 + $0x3c] sm:$0x1] %v510
      %v512 = vld [vmem:[#allocation2] sm:$0xf]
      %v513 = vld [vmem:[#allocation2 + $0x8] sm:$0xf]
      %v514 = vld [vmem:[#allocation2 + $0x10] sm:$0xf]
      %v515 = vld [vmem:[#allocation2 + $0x18] sm:$0xf]
      %v516 = vld [vmem:[#allocation2 + $0x20] sm:$0xf]
      %v517 = vld [vmem:[#allocation2 + $0x28] sm:$0xf]
      %v518 = vld [vmem:[#allocation2 + $0x30] sm:$0xf]
      %v519 = vld [vmem:[#allocation2 + $0x38] sm:$0xf]
      %520 = vst [vmem:[#allocation3] sm:$0xf] %v512
      %521 = vst [vmem:[#allocation3 + $0x24] sm:$0xf] %v513
      %522 = vst [vmem:[#allocation3 + $0x48] sm:$0xf] %v514
      %523 = vst [vmem:[#allocation3 + $0x6c] sm:$0xf] %v515
      %524 = vst [vmem:[#allocation3 + $0x90] sm:$0xf] %v516
      %525 = vst [vmem:[#allocation3 + $0xb4] sm:$0xf] %v517
      %526 = vst [vmem:[#allocation3 + $0xd8] sm:$0xf] %v518
      %527 = vst [vmem:[#allocation3 + $0xfc] sm:$0xf] %v519
      %v528 = vld [vmem:[#allocation2] sm:$0xf]
      %v529 = vld [vmem:[#allocation2 + $0x4] sm:$0x1]
      %v530 = vld [vmem:[#allocation2 + $0x8] sm:$0xf]
      %v531 = vld [vmem:[#allocation2 + $0xc] sm:$0x1]
      %v532 = vld [vmem:[#allocation2 + $0x10] sm:$0xf]
      %v533 = vld [vmem:[#allocation2 + $0x14] sm:$0x1]
      %v534 = vld [vmem:[#allocation2 + $0x18] sm:$0xf]
      %v535 = vld [vmem:[#allocation2 + $0x1c] sm:$0x1]
      %v536 = vld [vmem:[#allocation2 + $0x20] sm:$0xf]
      %v537 = vld [vmem:[#allocation2 + $0x24] sm:$0x1]
      %v538 = vld [vmem:[#allocation2 + $0x28] sm:$0xf]
      %v539 = vld [vmem:[#allocation2 + $0x2c] sm:$0x1]
      %v540 = vld [vmem:[#allocation2 + $0x30] sm:$0xf]
      %v541 = vld [vmem:[#allocation2 + $0x34] sm:$0x1]
      %v542 = vld [vmem:[#allocation2 + $0x38] sm:$0xf]
      %v543 = vld [vmem:[#allocation2 + $0x3c] sm:$0x1]
      %vm544 = vsmask.f32 3328
      %vm545 = vsmask.f32 7440
      %vm546 = vmor %vm544, %vm545
      %v548 = vshrl.u32 %v528, 16
      %v550 = vrot.slane %v548, 4
      %v551 = vshll.u32 %v528, 16
      %v553 = vrot.slane %v551, 5
      %v554 = vor.u32 %v550, %v553
      %v555 = vrot.slane %v554, 4
      %v557 = vshll.u32 %v529, 16
      %v559 = vrot.slane %v557, 5
      %v560 = vsel %vm546, %v555, %v559
      %v562 = vshrl.u32 %v530, 16
      %v564 = vrot.slane %v562, 4
      %v565 = vshll.u32 %v530, 16
      %v567 = vrot.slane %v565, 5
      %v568 = vor.u32 %v564, %v567
      %v569 = vrot.slane %v568, 4
      %v571 = vshll.u32 %v531, 16
      %v573 = vrot.slane %v571, 5
      %v574 = vsel %vm546, %v569, %v573
      %v576 = vshrl.u32 %v532, 16
      %v578 = vrot.slane %v576, 4
      %v579 = vshll.u32 %v532, 16
      %v581 = vrot.slane %v579, 5
      %v582 = vor.u32 %v578, %v581
      %v583 = vrot.slane %v582, 4
      %v585 = vshll.u32 %v533, 16
      %v587 = vrot.slane %v585, 5
      %v588 = vsel %vm546, %v583, %v587
      %v590 = vshrl.u32 %v534, 16
      %v592 = vrot.slane %v590, 4
      %v593 = vshll.u32 %v534, 16
      %v595 = vrot.slane %v593, 5
      %v596 = vor.u32 %v592, %v595
      %v597 = vrot.slane %v596, 4
      %v599 = vshll.u32 %v535, 16
      %v601 = vrot.slane %v599, 5
      %v602 = vsel %vm546, %v597, %v601
      %v604 = vshrl.u32 %v536, 16
      %v606 = vrot.slane %v604, 4
      %v607 = vshll.u32 %v536, 16
      %v609 = vrot.slane %v607, 5
      %v610 = vor.u32 %v606, %v609
      %v611 = vrot.slane %v610, 4
      %v613 = vshll.u32 %v537, 16
      %v615 = vrot.slane %v613, 5
      %v616 = vsel %vm546, %v611, %v615
      %v618 = vshrl.u32 %v538, 16
      %v620 = vrot.slane %v618, 4
      %v621 = vshll.u32 %v538, 16
      %v623 = vrot.slane %v621, 5
      %v624 = vor.u32 %v620, %v623
      %v625 = vrot.slane %v624, 4
      %v627 = vshll.u32 %v539, 16
      %v629 = vrot.slane %v627, 5
      %v630 = vsel %vm546, %v625, %v629
      %v632 = vshrl.u32 %v540, 16
      %v634 = vrot.slane %v632, 4
      %v635 = vshll.u32 %v540, 16
      %v637 = vrot.slane %v635, 5
      %v638 = vor.u32 %v634, %v637
      %v639 = vrot.slane %v638, 4
      %v641 = vshll.u32 %v541, 16
      %v643 = vrot.slane %v641, 5
      %v644 = vsel %vm546, %v639, %v643
      %v646 = vshrl.u32 %v542, 16
      %v648 = vrot.slane %v646, 4
      %v649 = vshll.u32 %v542, 16
      %v651 = vrot.slane %v649, 5
      %v652 = vor.u32 %v648, %v651
      %v653 = vrot.slane %v652, 4
      %v655 = vshll.u32 %v543, 16
      %v657 = vrot.slane %v655, 5
      %v658 = vsel %vm546, %v653, %v657
      %667 = vst [vmem:[#allocation3 + $0x4] sm:$0xf] %v560
      %668 = vst [vmem:[#allocation3 + $0x28] sm:$0xf] %v574
      %669 = vst [vmem:[#allocation3 + $0x4c] sm:$0xf] %v588
      %670 = vst [vmem:[#allocation3 + $0x70] sm:$0xf] %v602
      %671 = vst [vmem:[#allocation3 + $0x94] sm:$0xf] %v616
      %672 = vst [vmem:[#allocation3 + $0xb8] sm:$0xf] %v630
      %673 = vst [vmem:[#allocation3 + $0xdc] sm:$0xf] %v644
      %674 = vst [vmem:[#allocation3 + $0x100] sm:$0xf] %v658
      %v675 = vld [vmem:[#allocation2] sm:$0xe]
      %v676 = vld [vmem:[#allocation2 + $0x4] sm:$0x1]
      %v677 = vld [vmem:[#allocation2 + $0x8] sm:$0xe]
      %v678 = vld [vmem:[#allocation2 + $0xc] sm:$0x1]
      %v679 = vld [vmem:[#allocation2 + $0x10] sm:$0xe]
      %v680 = vld [vmem:[#allocation2 + $0x14] sm:$0x1]
      %v681 = vld [vmem:[#allocation2 + $0x18] sm:$0xe]
      %v682 = vld [vmem:[#allocation2 + $0x1c] sm:$0x1]
      %v683 = vld [vmem:[#allocation2 + $0x20] sm:$0xe]
      %v684 = vld [vmem:[#allocation2 + $0x24] sm:$0x1]
      %v685 = vld [vmem:[#allocation2 + $0x28] sm:$0xe]
      %v686 = vld [vmem:[#allocation2 + $0x2c] sm:$0x1]
      %v687 = vld [vmem:[#allocation2 + $0x30] sm:$0xe]
      %v688 = vld [vmem:[#allocation2 + $0x34] sm:$0x1]
      %v689 = vld [vmem:[#allocation2 + $0x38] sm:$0xe]
      %v690 = vld [vmem:[#allocation2 + $0x3c] sm:$0x1]
      %vm707 = vcmask 1042432
      %vm708 = vcmask 1046532
      %vm709 = vmor %vm707, %vm708
      %v710 = vrot.slane %v675, 5
      %v711 = vrot.slane %v710, 4
      %v712 = vrot.slane %v676, 5
      %v713 = vsel %vm709, %v711, %v712
      %v714 = vrot.slane %v677, 5
      %v715 = vrot.slane %v714, 4
      %v716 = vrot.slane %v678, 5
      %v717 = vsel %vm709, %v715, %v716
      %v718 = vrot.slane %v679, 5
      %v719 = vrot.slane %v718, 4
      %v720 = vrot.slane %v680, 5
      %v721 = vsel %vm709, %v719, %v720
      %v722 = vrot.slane %v681, 5
      %v723 = vrot.slane %v722, 4
      %v724 = vrot.slane %v682, 5
      %v725 = vsel %vm709, %v723, %v724
      %v726 = vrot.slane %v683, 5
      %v727 = vrot.slane %v726, 4
      %v728 = vrot.slane %v684, 5
      %v729 = vsel %vm709, %v727, %v728
      %v730 = vrot.slane %v685, 5
      %v731 = vrot.slane %v730, 4
      %v732 = vrot.slane %v686, 5
      %v733 = vsel %vm709, %v731, %v732
      %v734 = vrot.slane %v687, 5
      %v735 = vrot.slane %v734, 4
      %v736 = vrot.slane %v688, 5
      %v737 = vsel %vm709, %v735, %v736
      %v738 = vrot.slane %v689, 5
      %v739 = vrot.slane %v738, 4
      %v740 = vrot.slane %v690, 5
      %v741 = vsel %vm709, %v739, %v740
      %750 = vst [vmem:[#allocation3 + $0x8] sm:$0xf] %v713
      %751 = vst [vmem:[#allocation3 + $0x2c] sm:$0xf] %v717
      %752 = vst [vmem:[#allocation3 + $0x50] sm:$0xf] %v721
      %753 = vst [vmem:[#allocation3 + $0x74] sm:$0xf] %v725
      %754 = vst [vmem:[#allocation3 + $0x98] sm:$0xf] %v729
      %755 = vst [vmem:[#allocation3 + $0xbc] sm:$0xf] %v733
      %756 = vst [vmem:[#allocation3 + $0xe0] sm:$0xf] %v737
      %757 = vst [vmem:[#allocation3 + $0x104] sm:$0xf] %v741
      %v758 = vld [vmem:[%s242] sm:$0xf]
      %v759 = vld [vmem:[%s242 + $0x8] sm:$0xf]
      %v760 = vld [vmem:[%s242 + $0x10] sm:$0xf]
      %v761 = vld [vmem:[%s242 + $0x18] sm:$0xf]
      %v762 = vld [vmem:[%s242 + $0x20] sm:$0xf]
      %v763 = vld [vmem:[%s242 + $0x28] sm:$0xf]
      %v764 = vld [vmem:[%s242 + $0x30] sm:$0xf]
      %v765 = vld [vmem:[%s242 + $0x38] sm:$0xf]
      %766 = vst [vmem:[#allocation3 + $0xc] sm:$0xf] %v758
      %767 = vst [vmem:[#allocation3 + $0x30] sm:$0xf] %v759
      %768 = vst [vmem:[#allocation3 + $0x54] sm:$0xf] %v760
      %769 = vst [vmem:[#allocation3 + $0x78] sm:$0xf] %v761
      %770 = vst [vmem:[#allocation3 + $0x9c] sm:$0xf] %v762
      %771 = vst [vmem:[#allocation3 + $0xc0] sm:$0xf] %v763
      %772 = vst [vmem:[#allocation3 + $0xe4] sm:$0xf] %v764
      %773 = vst [vmem:[#allocation3 + $0x108] sm:$0xf] %v765
      %v774 = vld [vmem:[%s242] sm:$0xf]
      %v775 = vld [vmem:[%s242 + $0x4] sm:$0x1]
      %v776 = vld [vmem:[%s242 + $0x8] sm:$0xf]
      %v777 = vld [vmem:[%s242 + $0xc] sm:$0x1]
      %v778 = vld [vmem:[%s242 + $0x10] sm:$0xf]
      %v779 = vld [vmem:[%s242 + $0x14] sm:$0x1]
      %v780 = vld [vmem:[%s242 + $0x18] sm:$0xf]
      %v781 = vld [vmem:[%s242 + $0x1c] sm:$0x1]
      %v782 = vld [vmem:[%s242 + $0x20] sm:$0xf]
      %v783 = vld [vmem:[%s242 + $0x24] sm:$0x1]
      %v784 = vld [vmem:[%s242 + $0x28] sm:$0xf]
      %v785 = vld [vmem:[%s242 + $0x2c] sm:$0x1]
      %v786 = vld [vmem:[%s242 + $0x30] sm:$0xf]
      %v787 = vld [vmem:[%s242 + $0x34] sm:$0x1]
      %v788 = vld [vmem:[%s242 + $0x38] sm:$0xf]
      %v789 = vld [vmem:[%s242 + $0x3c] sm:$0x1]
      %v791 = vshrl.u32 %v774, 16
      %v793 = vrot.slane %v791, 4
      %v794 = vshll.u32 %v774, 16
      %v796 = vrot.slane %v794, 5
      %v797 = vor.u32 %v793, %v796
      %v798 = vrot.slane %v797, 4
      %v800 = vshll.u32 %v775, 16
      %v802 = vrot.slane %v800, 5
      %v803 = vsel %vm546, %v798, %v802
      %v805 = vshrl.u32 %v776, 16
      %v807 = vrot.slane %v805, 4
      %v808 = vshll.u32 %v776, 16
      %v810 = vrot.slane %v808, 5
      %v811 = vor.u32 %v807, %v810
      %v812 = vrot.slane %v811, 4
      %v814 = vshll.u32 %v777, 16
      %v816 = vrot.slane %v814, 5
      %v817 = vsel %vm546, %v812, %v816
      %v819 = vshrl.u32 %v778, 16
      %v821 = vrot.slane %v819, 4
      %v822 = vshll.u32 %v778, 16
      %v824 = vrot.slane %v822, 5
      %v825 = vor.u32 %v821, %v824
      %v826 = vrot.slane %v825, 4
      %v828 = vshll.u32 %v779, 16
      %v830 = vrot.slane %v828, 5
      %v831 = vsel %vm546, %v826, %v830
      %v833 = vshrl.u32 %v780, 16
      %v835 = vrot.slane %v833, 4
      %v836 = vshll.u32 %v780, 16
      %v838 = vrot.slane %v836, 5
      %v839 = vor.u32 %v835, %v838
      %v840 = vrot.slane %v839, 4
      %v842 = vshll.u32 %v781, 16
      %v844 = vrot.slane %v842, 5
      %v845 = vsel %vm546, %v840, %v844
      %v847 = vshrl.u32 %v782, 16
      %v849 = vrot.slane %v847, 4
      %v850 = vshll.u32 %v782, 16
      %v852 = vrot.slane %v850, 5
      %v853 = vor.u32 %v849, %v852
      %v854 = vrot.slane %v853, 4
      %v856 = vshll.u32 %v783, 16
      %v858 = vrot.slane %v856, 5
      %v859 = vsel %vm546, %v854, %v858
      %v861 = vshrl.u32 %v784, 16
      %v863 = vrot.slane %v861, 4
      %v864 = vshll.u32 %v784, 16
      %v866 = vrot.slane %v864, 5
      %v867 = vor.u32 %v863, %v866
      %v868 = vrot.slane %v867, 4
      %v870 = vshll.u32 %v785, 16
      %v872 = vrot.slane %v870, 5
      %v873 = vsel %vm546, %v868, %v872
      %v875 = vshrl.u32 %v786, 16
      %v877 = vrot.slane %v875, 4
      %v878 = vshll.u32 %v786, 16
      %v880 = vrot.slane %v878, 5
      %v881 = vor.u32 %v877, %v880
      %v882 = vrot.slane %v881, 4
      %v884 = vshll.u32 %v787, 16
      %v886 = vrot.slane %v884, 5
      %v887 = vsel %vm546, %v882, %v886
      %v889 = vshrl.u32 %v788, 16
      %v891 = vrot.slane %v889, 4
      %v892 = vshll.u32 %v788, 16
      %v894 = vrot.slane %v892, 5
      %v895 = vor.u32 %v891, %v894
      %v896 = vrot.slane %v895, 4
      %v898 = vshll.u32 %v789, 16
      %v900 = vrot.slane %v898, 5
      %v901 = vsel %vm546, %v896, %v900
      %910 = vst [vmem:[#allocation3 + $0x10] sm:$0xf] %v803
      %911 = vst [vmem:[#allocation3 + $0x34] sm:$0xf] %v817
      %912 = vst [vmem:[#allocation3 + $0x58] sm:$0xf] %v831
      %913 = vst [vmem:[#allocation3 + $0x7c] sm:$0xf] %v845
      %914 = vst [vmem:[#allocation3 + $0xa0] sm:$0xf] %v859
      %915 = vst [vmem:[#allocation3 + $0xc4] sm:$0xf] %v873
      %916 = vst [vmem:[#allocation3 + $0xe8] sm:$0xf] %v887
      %917 = vst [vmem:[#allocation3 + $0x10c] sm:$0xf] %v901
      %v918 = vld [vmem:[%s242] sm:$0xe]
      %v919 = vld [vmem:[%s242 + $0x4] sm:$0x1]
      %v920 = vld [vmem:[%s242 + $0x8] sm:$0xe]
      %v921 = vld [vmem:[%s242 + $0xc] sm:$0x1]
      %v922 = vld [vmem:[%s242 + $0x10] sm:$0xe]
      %v923 = vld [vmem:[%s242 + $0x14] sm:$0x1]
      %v924 = vld [vmem:[%s242 + $0x18] sm:$0xe]
      %v925 = vld [vmem:[%s242 + $0x1c] sm:$0x1]
      %v926 = vld [vmem:[%s242 + $0x20] sm:$0xe]
      %v927 = vld [vmem:[%s242 + $0x24] sm:$0x1]
      %v928 = vld [vmem:[%s242 + $0x28] sm:$0xe]
      %v929 = vld [vmem:[%s242 + $0x2c] sm:$0x1]
      %v930 = vld [vmem:[%s242 + $0x30] sm:$0xe]
      %v931 = vld [vmem:[%s242 + $0x34] sm:$0x1]
      %v932 = vld [vmem:[%s242 + $0x38] sm:$0xe]
      %v933 = vld [vmem:[%s242 + $0x3c] sm:$0x1]
      %v950 = vrot.slane %v918, 5
      %v951 = vrot.slane %v950, 4
      %v952 = vrot.slane %v919, 5
      %v953 = vsel %vm709, %v951, %v952
      %v954 = vrot.slane %v920, 5
      %v955 = vrot.slane %v954, 4
      %v956 = vrot.slane %v921, 5
      %v957 = vsel %vm709, %v955, %v956
      %v958 = vrot.slane %v922, 5
      %v959 = vrot.slane %v958, 4
      %v960 = vrot.slane %v923, 5
      %v961 = vsel %vm709, %v959, %v960
      %v962 = vrot.slane %v924, 5
      %v963 = vrot.slane %v962, 4
      %v964 = vrot.slane %v925, 5
      %v965 = vsel %vm709, %v963, %v964
      %v966 = vrot.slane %v926, 5
      %v967 = vrot.slane %v966, 4
      %v968 = vrot.slane %v927, 5
      %v969 = vsel %vm709, %v967, %v968
      %v970 = vrot.slane %v928, 5
      %v971 = vrot.slane %v970, 4
      %v972 = vrot.slane %v929, 5
      %v973 = vsel %vm709, %v971, %v972
      %v974 = vrot.slane %v930, 5
      %v975 = vrot.slane %v974, 4
      %v976 = vrot.slane %v931, 5
      %v977 = vsel %vm709, %v975, %v976
      %v978 = vrot.slane %v932, 5
      %v979 = vrot.slane %v978, 4
      %v980 = vrot.slane %v933, 5
      %v981 = vsel %vm709, %v979, %v980
      %990 = vst [vmem:[#allocation3 + $0x14] sm:$0xf] %v953
      %991 = vst [vmem:[#allocation3 + $0x38] sm:$0xf] %v957
      %992 = vst [vmem:[#allocation3 + $0x5c] sm:$0xf] %v961
      %993 = vst [vmem:[#allocation3 + $0x80] sm:$0xf] %v965
      %994 = vst [vmem:[#allocation3 + $0xa4] sm:$0xf] %v969
      %995 = vst [vmem:[#allocation3 + $0xc8] sm:$0xf] %v973
      %996 = vst [vmem:[#allocation3 + $0xec] sm:$0xf] %v977
      %997 = vst [vmem:[#allocation3 + $0x110] sm:$0xf] %v981
      %s998 = scalar_lea.vmem [#allocation2], 16
      %v999 = vld [vmem:[%s998] sm:$0xf]
      %v1000 = vld [vmem:[%s998 + $0x8] sm:$0xf]
      %v1001 = vld [vmem:[%s998 + $0x10] sm:$0xf]
      %v1002 = vld [vmem:[%s998 + $0x18] sm:$0xf]
      %v1003 = vld [vmem:[%s998 + $0x20] sm:$0xf]
      %v1004 = vld [vmem:[%s998 + $0x28] sm:$0xf]
      %v1005 = vld [vmem:[%s998 + $0x30] sm:$0xf]
      %v1006 = vld [vmem:[%s998 + $0x38] sm:$0xf]
      %1007 = vst [vmem:[#allocation3 + $0x18] sm:$0xf] %v999
      %1008 = vst [vmem:[#allocation3 + $0x3c] sm:$0xf] %v1000
      %1009 = vst [vmem:[#allocation3 + $0x60] sm:$0xf] %v1001
      %1010 = vst [vmem:[#allocation3 + $0x84] sm:$0xf] %v1002
      %1011 = vst [vmem:[#allocation3 + $0xa8] sm:$0xf] %v1003
      %1012 = vst [vmem:[#allocation3 + $0xcc] sm:$0xf] %v1004
      %1013 = vst [vmem:[#allocation3 + $0xf0] sm:$0xf] %v1005
      %1014 = vst [vmem:[#allocation3 + $0x114] sm:$0xf] %v1006
      %v1015 = vld [vmem:[%s998] sm:$0xf]
      %v1016 = vld [vmem:[%s998 + $0x4] sm:$0x1]
      %v1017 = vld [vmem:[%s998 + $0x8] sm:$0xf]
      %v1018 = vld [vmem:[%s998 + $0xc] sm:$0x1]
      %v1019 = vld [vmem:[%s998 + $0x10] sm:$0xf]
      %v1020 = vld [vmem:[%s998 + $0x14] sm:$0x1]
      %v1021 = vld [vmem:[%s998 + $0x18] sm:$0xf]
      %v1022 = vld [vmem:[%s998 + $0x1c] sm:$0x1]
      %v1023 = vld [vmem:[%s998 + $0x20] sm:$0xf]
      %v1024 = vld [vmem:[%s998 + $0x24] sm:$0x1]
      %v1025 = vld [vmem:[%s998 + $0x28] sm:$0xf]
      %v1026 = vld [vmem:[%s998 + $0x2c] sm:$0x1]
      %v1027 = vld [vmem:[%s998 + $0x30] sm:$0xf]
      %v1028 = vld [vmem:[%s998 + $0x34] sm:$0x1]
      %v1029 = vld [vmem:[%s998 + $0x38] sm:$0xf]
      %v1030 = vld [vmem:[%s998 + $0x3c] sm:$0x1]
      %v1032 = vshrl.u32 %v1015, 16
      %v1034 = vrot.slane %v1032, 4
      %v1035 = vshll.u32 %v1015, 16
      %v1037 = vrot.slane %v1035, 5
      %v1038 = vor.u32 %v1034, %v1037
      %v1039 = vrot.slane %v1038, 4
      %v1041 = vshll.u32 %v1016, 16
      %v1043 = vrot.slane %v1041, 5
      %v1044 = vsel %vm546, %v1039, %v1043
      %v1046 = vshrl.u32 %v1017, 16
      %v1048 = vrot.slane %v1046, 4
      %v1049 = vshll.u32 %v1017, 16
      %v1051 = vrot.slane %v1049, 5
      %v1052 = vor.u32 %v1048, %v1051
      %v1053 = vrot.slane %v1052, 4
      %v1055 = vshll.u32 %v1018, 16
      %v1057 = vrot.slane %v1055, 5
      %v1058 = vsel %vm546, %v1053, %v1057
      %v1060 = vshrl.u32 %v1019, 16
      %v1062 = vrot.slane %v1060, 4
      %v1063 = vshll.u32 %v1019, 16
      %v1065 = vrot.slane %v1063, 5
      %v1066 = vor.u32 %v1062, %v1065
      %v1067 = vrot.slane %v1066, 4
      %v1069 = vshll.u32 %v1020, 16
      %v1071 = vrot.slane %v1069, 5
      %v1072 = vsel %vm546, %v1067, %v1071
      %v1074 = vshrl.u32 %v1021, 16
      %v1076 = vrot.slane %v1074, 4
      %v1077 = vshll.u32 %v1021, 16
      %v1079 = vrot.slane %v1077, 5
      %v1080 = vor.u32 %v1076, %v1079
      %v1081 = vrot.slane %v1080, 4
      %v1083 = vshll.u32 %v1022, 16
      %v1085 = vrot.slane %v1083, 5
      %v1086 = vsel %vm546, %v1081, %v1085
      %v1088 = vshrl.u32 %v1023, 16
      %v1090 = vrot.slane %v1088, 4
      %v1091 = vshll.u32 %v1023, 16
      %v1093 = vrot.slane %v1091, 5
      %v1094 = vor.u32 %v1090, %v1093
      %v1095 = vrot.slane %v1094, 4
      %v1097 = vshll.u32 %v1024, 16
      %v1099 = vrot.slane %v1097, 5
      %v1100 = vsel %vm546, %v1095, %v1099
      %v1102 = vshrl.u32 %v1025, 16
      %v1104 = vrot.slane %v1102, 4
      %v1105 = vshll.u32 %v1025, 16
      %v1107 = vrot.slane %v1105, 5
      %v1108 = vor.u32 %v1104, %v1107
      %v1109 = vrot.slane %v1108, 4
      %v1111 = vshll.u32 %v1026, 16
      %v1113 = vrot.slane %v1111, 5
      %v1114 = vsel %vm546, %v1109, %v1113
      %v1116 = vshrl.u32 %v1027, 16
      %v1118 = vrot.slane %v1116, 4
      %v1119 = vshll.u32 %v1027, 16
      %v1121 = vrot.slane %v1119, 5
      %v1122 = vor.u32 %v1118, %v1121
      %v1123 = vrot.slane %v1122, 4
      %v1125 = vshll.u32 %v1028, 16
      %v1127 = vrot.slane %v1125, 5
      %v1128 = vsel %vm546, %v1123, %v1127
      %v1130 = vshrl.u32 %v1029, 16
      %v1132 = vrot.slane %v1130, 4
      %v1133 = vshll.u32 %v1029, 16
      %v1135 = vrot.slane %v1133, 5
      %v1136 = vor.u32 %v1132, %v1135
      %v1137 = vrot.slane %v1136, 4
      %v1139 = vshll.u32 %v1030, 16
      %v1141 = vrot.slane %v1139, 5
      %v1142 = vsel %vm546, %v1137, %v1141
      %1151 = vst [vmem:[#allocation3 + $0x1c] sm:$0xf] %v1044
      %1152 = vst [vmem:[#allocation3 + $0x40] sm:$0xf] %v1058
      %1153 = vst [vmem:[#allocation3 + $0x64] sm:$0xf] %v1072
      %1154 = vst [vmem:[#allocation3 + $0x88] sm:$0xf] %v1086
      %1155 = vst [vmem:[#allocation3 + $0xac] sm:$0xf] %v1100
      %1156 = vst [vmem:[#allocation3 + $0xd0] sm:$0xf] %v1114
      %1157 = vst [vmem:[#allocation3 + $0xf4] sm:$0xf] %v1128
      %1158 = vst [vmem:[#allocation3 + $0x118] sm:$0xf] %v1142
      %v1159 = vld [vmem:[%s998] sm:$0xe]
      %v1160 = vld [vmem:[%s998 + $0x4] sm:$0x1]
      %v1161 = vld [vmem:[%s998 + $0x8] sm:$0xe]
      %v1162 = vld [vmem:[%s998 + $0xc] sm:$0x1]
      %v1163 = vld [vmem:[%s998 + $0x10] sm:$0xe]
      %v1164 = vld [vmem:[%s998 + $0x14] sm:$0x1]
      %v1165 = vld [vmem:[%s998 + $0x18] sm:$0xe]
      %v1166 = vld [vmem:[%s998 + $0x1c] sm:$0x1]
      %v1167 = vld [vmem:[%s998 + $0x20] sm:$0xe]
      %v1168 = vld [vmem:[%s998 + $0x24] sm:$0x1]
      %v1169 = vld [vmem:[%s998 + $0x28] sm:$0xe]
      %v1170 = vld [vmem:[%s998 + $0x2c] sm:$0x1]
      %v1171 = vld [vmem:[%s998 + $0x30] sm:$0xe]
      %v1172 = vld [vmem:[%s998 + $0x34] sm:$0x1]
      %v1173 = vld [vmem:[%s998 + $0x38] sm:$0xe]
      %v1174 = vld [vmem:[%s998 + $0x3c] sm:$0x1]
      %v1191 = vrot.slane %v1159, 5
      %v1192 = vrot.slane %v1191, 4
      %v1193 = vrot.slane %v1160, 5
      %v1194 = vsel %vm709, %v1192, %v1193
      %v1195 = vrot.slane %v1161, 5
      %v1196 = vrot.slane %v1195, 4
      %v1197 = vrot.slane %v1162, 5
      %v1198 = vsel %vm709, %v1196, %v1197
      %v1199 = vrot.slane %v1163, 5
      %v1200 = vrot.slane %v1199, 4
      %v1201 = vrot.slane %v1164, 5
      %v1202 = vsel %vm709, %v1200, %v1201
      %v1203 = vrot.slane %v1165, 5
      %v1204 = vrot.slane %v1203, 4
      %v1205 = vrot.slane %v1166, 5
      %v1206 = vsel %vm709, %v1204, %v1205
      %v1207 = vrot.slane %v1167, 5
      %v1208 = vrot.slane %v1207, 4
      %v1209 = vrot.slane %v1168, 5
      %v1210 = vsel %vm709, %v1208, %v1209
      %v1211 = vrot.slane %v1169, 5
      %v1212 = vrot.slane %v1211, 4
      %v1213 = vrot.slane %v1170, 5
      %v1214 = vsel %vm709, %v1212, %v1213
      %v1215 = vrot.slane %v1171, 5
      %v1216 = vrot.slane %v1215, 4
      %v1217 = vrot.slane %v1172, 5
      %v1218 = vsel %vm709, %v1216, %v1217
      %v1219 = vrot.slane %v1173, 5
      %v1220 = vrot.slane %v1219, 4
      %v1221 = vrot.slane %v1174, 5
      %v1222 = vsel %vm709, %v1220, %v1221
      %1231 = vst [vmem:[#allocation3 + $0x20] sm:$0xf] %v1194
      %1232 = vst [vmem:[#allocation3 + $0x44] sm:$0xf] %v1198
      %1233 = vst [vmem:[#allocation3 + $0x68] sm:$0xf] %v1202
      %1234 = vst [vmem:[#allocation3 + $0x8c] sm:$0xf] %v1206
      %1235 = vst [vmem:[#allocation3 + $0xb0] sm:$0xf] %v1210
      %1236 = vst [vmem:[#allocation3 + $0xd4] sm:$0xf] %v1214
      %1237 = vst [vmem:[#allocation3 + $0xf8] sm:$0xf] %v1218
      %1238 = vst [vmem:[#allocation3 + $0x11c] sm:$0xf] %v1222
      %v1239 = vld [vmem:[#allocation3] sm:$0xff]
      %v1240 = vld [vmem:[#allocation3 + $0x8] sm:$0xff]
      %v1241 = vld [vmem:[#allocation3 + $0x10] sm:$0xff]
      %v1242 = vld [vmem:[#allocation3 + $0x18] sm:$0xff]
      %v1243 = vld [vmem:[#allocation3 + $0x20] sm:$0xf]
      %v1244 = vld [vmem:[#allocation3 + $0x24] sm:$0xff]
      %v1245 = vld [vmem:[#allocation3 + $0x2c] sm:$0xff]
      %v1246 = vld [vmem:[#allocation3 + $0x34] sm:$0xff]
      %v1247 = vld [vmem:[#allocation3 + $0x3c] sm:$0xff]
      %v1248 = vld [vmem:[#allocation3 + $0x44] sm:$0xf]
      %v1249 = vld [vmem:[#allocation3 + $0x48] sm:$0xff]
      %v1250 = vld [vmem:[#allocation3 + $0x50] sm:$0xff]
      %v1251 = vld [vmem:[#allocation3 + $0x58] sm:$0xff]
      %v1252 = vld [vmem:[#allocation3 + $0x60] sm:$0xff]
      %v1253 = vld [vmem:[#allocation3 + $0x68] sm:$0xf]
      %v1254 = vld [vmem:[#allocation3 + $0x6c] sm:$0xff]
      %v1255 = vld [vmem:[#allocation3 + $0x74] sm:$0xff]
      %v1256 = vld [vmem:[#allocation3 + $0x7c] sm:$0xff]
      %v1257 = vld [vmem:[#allocation3 + $0x84] sm:$0xff]
      %v1258 = vld [vmem:[#allocation3 + $0x8c] sm:$0xf]
      %v1259 = vld [vmem:[#allocation3 + $0x90] sm:$0xff]
      %v1260 = vld [vmem:[#allocation3 + $0x98] sm:$0xff]
      %v1261 = vld [vmem:[#allocation3 + $0xa0] sm:$0xff]
      %v1262 = vld [vmem:[#allocation3 + $0xa8] sm:$0xff]
      %v1263 = vld [vmem:[#allocation3 + $0xb0] sm:$0xf]
      %v1264 = vld [vmem:[#allocation3 + $0xb4] sm:$0xff]
      %v1265 = vld [vmem:[#allocation3 + $0xbc] sm:$0xff]
      %v1266 = vld [vmem:[#allocation3 + $0xc4] sm:$0xff]
      %v1267 = vld [vmem:[#allocation3 + $0xcc] sm:$0xff]
      %v1268 = vld [vmem:[#allocation3 + $0xd4] sm:$0xf]
      %v1269 = vld [vmem:[#allocation3 + $0xd8] sm:$0xff]
      %v1270 = vld [vmem:[#allocation3 + $0xe0] sm:$0xff]
      %v1271 = vld [vmem:[#allocation3 + $0xe8] sm:$0xff]
      %v1272 = vld [vmem:[#allocation3 + $0xf0] sm:$0xff]
      %v1273 = vld [vmem:[#allocation3 + $0xf8] sm:$0xf]
      %v1274 = vld [vmem:[#allocation3 + $0xfc] sm:$0xff]
      %v1275 = vld [vmem:[#allocation3 + $0x104] sm:$0xff]
      %v1276 = vld [vmem:[#allocation3 + $0x10c] sm:$0xff]
      %v1277 = vld [vmem:[#allocation3 + $0x114] sm:$0xff]
      %v1278 = vld [vmem:[#allocation3 + $0x11c] sm:$0xf]
      %v1279 = vld [vmem:[%s3] sm:$0xf]
      %v1280 = vld [vmem:[%s3 + $0x4] sm:$0xf]
      %v1281 = vld [vmem:[%s3 + $0x8] sm:$0xf]
      %v1282 = vld [vmem:[%s3 + $0xc] sm:$0xf]
      %v1283 = vld [vmem:[%s3 + $0x10] sm:$0xf]
      %v1284 = vld [vmem:[%s3 + $0x14] sm:$0xf]
      %v1285 = vld [vmem:[%s3 + $0x18] sm:$0xf]
      %v1286 = vld [vmem:[%s3 + $0x1c] sm:$0xf]
      %v1287 = vld [vmem:[%s3 + $0x20] sm:$0xf]
      %v1288 = vld [vmem:[%s3 + $0x24] sm:$0xf]
      %v1289 = vld [vmem:[%s3 + $0x28] sm:$0xf]
      %v1290 = vld [vmem:[%s3 + $0x2c] sm:$0xf]
      %v1291 = vld [vmem:[%s3 + $0x30] sm:$0xf]
      %v1292 = vld [vmem:[%s3 + $0x34] sm:$0xf]
      %v1293 = vld [vmem:[%s3 + $0x38] sm:$0xf]
      %v1294 = vld [vmem:[%s3 + $0x3c] sm:$0xf]
      %v1295 = vld [vmem:[%s3 + $0x40] sm:$0xf]
      %v1296 = vld [vmem:[%s3 + $0x44] sm:$0xf]
      %v1297 = vld [vmem:[%s3 + $0x48] sm:$0xf]
      %v1298 = vld [vmem:[%s3 + $0x4c] sm:$0xf]
      %v1299 = vld [vmem:[%s3 + $0x50] sm:$0xf]
      %v1300 = vld [vmem:[%s3 + $0x54] sm:$0xf]
      %v1301 = vld [vmem:[%s3 + $0x58] sm:$0xf]
      %v1302 = vld [vmem:[%s3 + $0x5c] sm:$0xf]
      %v1303 = vld [vmem:[%s3 + $0x60] sm:$0xf]
      %v1304 = vld [vmem:[%s3 + $0x64] sm:$0xf]
      %v1305 = vld [vmem:[%s3 + $0x68] sm:$0xf]
      %v1306 = vld [vmem:[%s3 + $0x6c] sm:$0xf]
      %v1307 = vld [vmem:[%s3 + $0x70] sm:$0xf]
      %v1308 = vld [vmem:[%s3 + $0x74] sm:$0xf]
      %v1309 = vld [vmem:[%s3 + $0x78] sm:$0xf]
      %v1310 = vld [vmem:[%s3 + $0x7c] sm:$0xf]
      %v1311 = vld [vmem:[%s3 + $0x80] sm:$0xf]
      %v1312 = vld [vmem:[%s3 + $0x84] sm:$0xf]
      %v1313 = vld [vmem:[%s3 + $0x88] sm:$0xf]
      %v1314 = vld [vmem:[%s3 + $0x8c] sm:$0xf]
      %v1315 = vld [vmem:[%s3 + $0x90] sm:$0xf]
      %v1316 = vld [vmem:[%s3 + $0x94] sm:$0xf]
      %v1317 = vld [vmem:[%s3 + $0x98] sm:$0xf]
      %v1318 = vld [vmem:[%s3 + $0x9c] sm:$0xf]
      %v1319 = vld [vmem:[%s3 + $0xa0] sm:$0xf]
      %v1320 = vld [vmem:[%s3 + $0xa4] sm:$0xf]
      %v1321 = vld [vmem:[%s3 + $0xa8] sm:$0xf]
      %v1322 = vld [vmem:[%s3 + $0xac] sm:$0xf]
      %v1323 = vld [vmem:[%s3 + $0xb0] sm:$0xf]
      %v1324 = vld [vmem:[%s3 + $0xb4] sm:$0xf]
      %v1325 = vld [vmem:[%s3 + $0xb8] sm:$0xf]
      %v1326 = vld [vmem:[%s3 + $0xbc] sm:$0xf]
      %v1327 = vld [vmem:[%s3 + $0xc0] sm:$0xf]
      %v1328 = vld [vmem:[%s3 + $0xc4] sm:$0xf]
      %v1329 = vld [vmem:[%s3 + $0xc8] sm:$0xf]
      %v1330 = vld [vmem:[%s3 + $0xcc] sm:$0xf]
      %v1331 = vld [vmem:[%s3 + $0xd0] sm:$0xf]
      %v1332 = vld [vmem:[%s3 + $0xd4] sm:$0xf]
      %v1333 = vld [vmem:[%s3 + $0xd8] sm:$0xf]
      %v1334 = vld [vmem:[%s3 + $0xdc] sm:$0xf]
      %v1335 = vld [vmem:[%s3 + $0xe0] sm:$0xf]
      %v1336 = vld [vmem:[%s3 + $0xe4] sm:$0xf]
      %v1337 = vld [vmem:[%s3 + $0xe8] sm:$0xf]
      %v1338 = vld [vmem:[%s3 + $0xec] sm:$0xf]
      %v1339 = vld [vmem:[%s3 + $0xf0] sm:$0xf]
      %v1340 = vld [vmem:[%s3 + $0xf4] sm:$0xf]
      %v1341 = vld [vmem:[%s3 + $0xf8] sm:$0xf]
      %v1342 = vld [vmem:[%s3 + $0xfc] sm:$0xf]
      %v1343 = vld [vmem:[%s3 + $0x100] sm:$0xf]
      %v1344 = vld [vmem:[%s3 + $0x104] sm:$0xf]
      %v1345 = vld [vmem:[%s3 + $0x108] sm:$0xf]
      %v1346 = vld [vmem:[%s3 + $0x10c] sm:$0xf]
      %v1347 = vld [vmem:[%s3 + $0x110] sm:$0xf]
      %v1348 = vld [vmem:[%s3 + $0x114] sm:$0xf]
      %v1349 = vld [vmem:[%s3 + $0x118] sm:$0xf]
      %v1350 = vld [vmem:[%s3 + $0x11c] sm:$0xf]
      %v1351 = vld [vmem:[%s3 + $0x120] sm:$0xf]
      %v1352 = vld [vmem:[%s3 + $0x124] sm:$0xf]
      %v1353 = vld [vmem:[%s3 + $0x128] sm:$0xf]
      %v1354 = vld [vmem:[%s3 + $0x12c] sm:$0xf]
      %v1355 = vld [vmem:[%s3 + $0x130] sm:$0xf]
      %v1356 = vld [vmem:[%s3 + $0x134] sm:$0xf]
      %v1357 = vld [vmem:[%s3 + $0x138] sm:$0xf]
      %v1358 = vld [vmem:[%s3 + $0x13c] sm:$0xf]
      %v1359 = vld [vmem:[%s3 + $0x140] sm:$0xf]
      %v1360 = vld [vmem:[%s3 + $0x144] sm:$0xf]
      %v1361 = vld [vmem:[%s3 + $0x148] sm:$0xf]
      %v1362 = vld [vmem:[%s3 + $0x14c] sm:$0xf]
      %v1363 = vld [vmem:[%s3 + $0x150] sm:$0xf]
      %v1364 = vld [vmem:[%s3 + $0x154] sm:$0xf]
      %v1365 = vld [vmem:[%s3 + $0x158] sm:$0xf]
      %v1366 = vld [vmem:[%s3 + $0x15c] sm:$0xf]
      %v1367 = vld [vmem:[%s3 + $0x160] sm:$0xf]
      %v1368 = vld [vmem:[%s3 + $0x164] sm:$0xf]
      %v1369 = vld [vmem:[%s3 + $0x168] sm:$0xf]
      %v1370 = vld [vmem:[%s3 + $0x16c] sm:$0xf]
      %v1371 = vld [vmem:[%s3 + $0x170] sm:$0xf]
      %v1372 = vld [vmem:[%s3 + $0x174] sm:$0xf]
      %v1373 = vld [vmem:[%s3 + $0x178] sm:$0xf]
      %v1374 = vld [vmem:[%s3 + $0x17c] sm:$0xf]
      %v1375 = vld [vmem:[%s3 + $0x180] sm:$0xf]
      %v1376 = vld [vmem:[%s3 + $0x184] sm:$0xf]
      %v1377 = vld [vmem:[%s3 + $0x188] sm:$0xf]
      %v1378 = vld [vmem:[%s3 + $0x18c] sm:$0xf]
      %v1379 = vld [vmem:[%s3 + $0x190] sm:$0xf]
      %v1380 = vld [vmem:[%s3 + $0x194] sm:$0xf]
      %v1381 = vld [vmem:[%s3 + $0x198] sm:$0xf]
      %v1382 = vld [vmem:[%s3 + $0x19c] sm:$0xf]
      %v1383 = vld [vmem:[%s3 + $0x1a0] sm:$0xf]
      %v1384 = vld [vmem:[%s3 + $0x1a4] sm:$0xf]
      %v1385 = vld [vmem:[%s3 + $0x1a8] sm:$0xf]
      %v1386 = vld [vmem:[%s3 + $0x1ac] sm:$0xf]
      %v1387 = vld [vmem:[%s3 + $0x1b0] sm:$0xf]
      %v1388 = vld [vmem:[%s3 + $0x1b4] sm:$0xf]
      %v1389 = vld [vmem:[%s3 + $0x1b8] sm:$0xf]
      %v1390 = vld [vmem:[%s3 + $0x1bc] sm:$0xf]
      %v1391 = vld [vmem:[%s3 + $0x1c0] sm:$0xf]
      %v1392 = vld [vmem:[%s3 + $0x1c4] sm:$0xf]
      %v1393 = vld [vmem:[%s3 + $0x1c8] sm:$0xf]
      %v1394 = vld [vmem:[%s3 + $0x1cc] sm:$0xf]
      %v1395 = vld [vmem:[%s3 + $0x1d0] sm:$0xf]
      %v1396 = vld [vmem:[%s3 + $0x1d4] sm:$0xf]
      %v1397 = vld [vmem:[%s3 + $0x1d8] sm:$0xf]
      %v1398 = vld [vmem:[%s3 + $0x1dc] sm:$0xf]
      %v1399 = vld [vmem:[%s3 + $0x1e0] sm:$0xf]
      %v1400 = vld [vmem:[%s3 + $0x1e4] sm:$0xf]
      %v1401 = vld [vmem:[%s3 + $0x1e8] sm:$0xf]
      %v1402 = vld [vmem:[%s3 + $0x1ec] sm:$0xf]
      %v1403 = vld [vmem:[%s3 + $0x1f0] sm:$0xf]
      %v1404 = vld [vmem:[%s3 + $0x1f4] sm:$0xf]
      %v1405 = vld [vmem:[%s3 + $0x1f8] sm:$0xf]
      %v1406 = vld [vmem:[%s3 + $0x1fc] sm:$0xf]
      %v1407 = vld [vmem:[%s3 + $0x200] sm:$0xf]
      %v1408 = vld [vmem:[%s3 + $0x204] sm:$0xf]
      %v1409 = vld [vmem:[%s3 + $0x208] sm:$0xf]
      %v1410 = vld [vmem:[%s3 + $0x20c] sm:$0xf]
      %v1411 = vld [vmem:[%s3 + $0x210] sm:$0xf]
      %v1412 = vld [vmem:[%s3 + $0x214] sm:$0xf]
      %v1413 = vld [vmem:[%s3 + $0x218] sm:$0xf]
      %v1414 = vld [vmem:[%s3 + $0x21c] sm:$0xf]
      %v1415 = vld [vmem:[%s3 + $0x220] sm:$0xf]
      %v1416 = vld [vmem:[%s3 + $0x224] sm:$0xf]
      %v1417 = vld [vmem:[%s3 + $0x228] sm:$0xf]
      %v1418 = vld [vmem:[%s3 + $0x22c] sm:$0xf]
      %v1419 = vld [vmem:[%s3 + $0x230] sm:$0xf]
      %v1420 = vld [vmem:[%s3 + $0x234] sm:$0xf]
      %v1421 = vld [vmem:[%s3 + $0x238] sm:$0xf]
      %v1422 = vld [vmem:[%s3 + $0x23c] sm:$0xf]
      %v1463 = vunpack.c.l.b16 %v1239
      %v1464 = vunpack.c.h.b16 %v1239
      %v1465 = vunpack.c.l.b16 %v1240
      %v1466 = vunpack.c.h.b16 %v1240
      %v1467 = vunpack.c.l.b16 %v1241
      %v1468 = vunpack.c.h.b16 %v1241
      %v1469 = vunpack.c.l.b16 %v1242
      %v1470 = vunpack.c.h.b16 %v1242
      %v1471 = vunpack.c.l.b16 %v1243
      %v1472 = vunpack.c.l.b16 %v1244
      %v1473 = vunpack.c.h.b16 %v1244
      %v1474 = vunpack.c.l.b16 %v1245
      %v1475 = vunpack.c.h.b16 %v1245
      %v1476 = vunpack.c.l.b16 %v1246
      %v1477 = vunpack.c.h.b16 %v1246
      %v1478 = vunpack.c.l.b16 %v1247
      %v1479 = vunpack.c.h.b16 %v1247
      %v1480 = vunpack.c.l.b16 %v1248
      %v1481 = vunpack.c.l.b16 %v1249
      %v1482 = vunpack.c.h.b16 %v1249
      %v1483 = vunpack.c.l.b16 %v1250
      %v1484 = vunpack.c.h.b16 %v1250
      %v1485 = vunpack.c.l.b16 %v1251
      %v1486 = vunpack.c.h.b16 %v1251
      %v1487 = vunpack.c.l.b16 %v1252
      %v1488 = vunpack.c.h.b16 %v1252
      %v1489 = vunpack.c.l.b16 %v1253
      %v1490 = vunpack.c.l.b16 %v1254
      %v1491 = vunpack.c.h.b16 %v1254
      %v1492 = vunpack.c.l.b16 %v1255
      %v1493 = vunpack.c.h.b16 %v1255
      %v1494 = vunpack.c.l.b16 %v1256
      %v1495 = vunpack.c.h.b16 %v1256
      %v1496 = vunpack.c.l.b16 %v1257
      %v1497 = vunpack.c.h.b16 %v1257
      %v1498 = vunpack.c.l.b16 %v1258
      %v1499 = vunpack.c.l.b16 %v1259
      %v1500 = vunpack.c.h.b16 %v1259
      %v1501 = vunpack.c.l.b16 %v1260
      %v1502 = vunpack.c.h.b16 %v1260
      %v1503 = vunpack.c.l.b16 %v1261
      %v1504 = vunpack.c.h.b16 %v1261
      %v1505 = vunpack.c.l.b16 %v1262
      %v1506 = vunpack.c.h.b16 %v1262
      %v1507 = vunpack.c.l.b16 %v1263
      %v1508 = vunpack.c.l.b16 %v1264
      %v1509 = vunpack.c.h.b16 %v1264
      %v1510 = vunpack.c.l.b16 %v1265
      %v1511 = vunpack.c.h.b16 %v1265
      %v1512 = vunpack.c.l.b16 %v1266
      %v1513 = vunpack.c.h.b16 %v1266
      %v1514 = vunpack.c.l.b16 %v1267
      %v1515 = vunpack.c.h.b16 %v1267
      %v1516 = vunpack.c.l.b16 %v1268
      %v1517 = vunpack.c.l.b16 %v1269
      %v1518 = vunpack.c.h.b16 %v1269
      %v1519 = vunpack.c.l.b16 %v1270
      %v1520 = vunpack.c.h.b16 %v1270
      %v1521 = vunpack.c.l.b16 %v1271
      %v1522 = vunpack.c.h.b16 %v1271
      %v1523 = vunpack.c.l.b16 %v1272
      %v1524 = vunpack.c.h.b16 %v1272
      %v1525 = vunpack.c.l.b16 %v1273
      %v1526 = vunpack.c.l.b16 %v1274
      %v1527 = vunpack.c.h.b16 %v1274
      %v1528 = vunpack.c.l.b16 %v1275
      %v1529 = vunpack.c.h.b16 %v1275
      %v1530 = vunpack.c.l.b16 %v1276
      %v1531 = vunpack.c.h.b16 %v1276
      %v1532 = vunpack.c.l.b16 %v1277
      %v1533 = vunpack.c.h.b16 %v1277
      %v1534 = vunpack.c.l.b16 %v1278
      %v1535 = vpack.c.b16 %v1472, %v1463
      %v1536 = vpack.c.b16 %v1473, %v1464
      %v1537 = vpack.c.b16 %v1474, %v1465
      %v1538 = vpack.c.b16 %v1475, %v1466
      %v1539 = vpack.c.b16 %v1476, %v1467
      %v1540 = vpack.c.b16 %v1477, %v1468
      %v1541 = vpack.c.b16 %v1478, %v1469
      %v1542 = vpack.c.b16 %v1479, %v1470
      %v1543 = vpack.c.b16 %v1480, %v1471
      %v1544 = vpack.c.b16 %v1490, %v1481
      %v1545 = vpack.c.b16 %v1491, %v1482
      %v1546 = vpack.c.b16 %v1492, %v1483
      %v1547 = vpack.c.b16 %v1493, %v1484
      %v1548 = vpack.c.b16 %v1494, %v1485
      %v1549 = vpack.c.b16 %v1495, %v1486
      %v1550 = vpack.c.b16 %v1496, %v1487
      %v1551 = vpack.c.b16 %v1497, %v1488
      %v1552 = vpack.c.b16 %v1498, %v1489
      %v1553 = vpack.c.b16 %v1508, %v1499
      %v1554 = vpack.c.b16 %v1509, %v1500
      %v1555 = vpack.c.b16 %v1510, %v1501
      %v1556 = vpack.c.b16 %v1511, %v1502
      %v1557 = vpack.c.b16 %v1512, %v1503
      %v1558 = vpack.c.b16 %v1513, %v1504
      %v1559 = vpack.c.b16 %v1514, %v1505
      %v1560 = vpack.c.b16 %v1515, %v1506
      %v1561 = vpack.c.b16 %v1516, %v1507
      %v1562 = vpack.c.b16 %v1526, %v1517
      %v1563 = vpack.c.b16 %v1527, %v1518
      %v1564 = vpack.c.b16 %v1528, %v1519
      %v1565 = vpack.c.b16 %v1529, %v1520
      %v1566 = vpack.c.b16 %v1530, %v1521
      %v1567 = vpack.c.b16 %v1531, %v1522
      %v1568 = vpack.c.b16 %v1532, %v1523
      %v1569 = vpack.c.b16 %v1533, %v1524
      %v1570 = vpack.c.b16 %v1534, %v1525
      %v1751 = vunpack.c.l.b16 %v1279
      %v1752 = vunpack.c.l.b16 %v1280
      %v1753 = vunpack.c.l.b16 %v1281
      %v1754 = vunpack.c.l.b16 %v1282
      %v1755 = vunpack.c.l.b16 %v1283
      %v1756 = vunpack.c.l.b16 %v1284
      %v1757 = vunpack.c.l.b16 %v1285
      %v1758 = vunpack.c.l.b16 %v1286
      %v1759 = vunpack.c.l.b16 %v1287
      %v1760 = vunpack.c.l.b16 %v1288
      %v1761 = vunpack.c.l.b16 %v1289
      %v1762 = vunpack.c.l.b16 %v1290
      %v1763 = vunpack.c.l.b16 %v1291
      %v1764 = vunpack.c.l.b16 %v1292
      %v1765 = vunpack.c.l.b16 %v1293
      %v1766 = vunpack.c.l.b16 %v1294
      %v1767 = vunpack.c.l.b16 %v1295
      %v1768 = vunpack.c.l.b16 %v1296
      %v1769 = vunpack.c.l.b16 %v1297
      %v1770 = vunpack.c.l.b16 %v1298
      %v1771 = vunpack.c.l.b16 %v1299
      %v1772 = vunpack.c.l.b16 %v1300
      %v1773 = vunpack.c.l.b16 %v1301
      %v1774 = vunpack.c.l.b16 %v1302
      %v1775 = vunpack.c.l.b16 %v1303
      %v1776 = vunpack.c.l.b16 %v1304
      %v1777 = vunpack.c.l.b16 %v1305
      %v1778 = vunpack.c.l.b16 %v1306
      %v1779 = vunpack.c.l.b16 %v1307
      %v1780 = vunpack.c.l.b16 %v1308
      %v1781 = vunpack.c.l.b16 %v1309
      %v1782 = vunpack.c.l.b16 %v1310
      %v1783 = vunpack.c.l.b16 %v1311
      %v1784 = vunpack.c.l.b16 %v1312
      %v1785 = vunpack.c.l.b16 %v1313
      %v1786 = vunpack.c.l.b16 %v1314
      %v1787 = vunpack.c.l.b16 %v1315
      %v1788 = vunpack.c.l.b16 %v1316
      %v1789 = vunpack.c.l.b16 %v1317
      %v1790 = vunpack.c.l.b16 %v1318
      %v1791 = vunpack.c.l.b16 %v1319
      %v1792 = vunpack.c.l.b16 %v1320
      %v1793 = vunpack.c.l.b16 %v1321
      %v1794 = vunpack.c.l.b16 %v1322
      %v1795 = vunpack.c.l.b16 %v1323
      %v1796 = vunpack.c.l.b16 %v1324
      %v1797 = vunpack.c.l.b16 %v1325
      %v1798 = vunpack.c.l.b16 %v1326
      %v1799 = vunpack.c.l.b16 %v1327
      %v1800 = vunpack.c.l.b16 %v1328
      %v1801 = vunpack.c.l.b16 %v1329
      %v1802 = vunpack.c.l.b16 %v1330
      %v1803 = vunpack.c.l.b16 %v1331
      %v1804 = vunpack.c.l.b16 %v1332
      %v1805 = vunpack.c.l.b16 %v1333
      %v1806 = vunpack.c.l.b16 %v1334
      %v1807 = vunpack.c.l.b16 %v1335
      %v1808 = vunpack.c.l.b16 %v1336
      %v1809 = vunpack.c.l.b16 %v1337
      %v1810 = vunpack.c.l.b16 %v1338
      %v1811 = vunpack.c.l.b16 %v1339
      %v1812 = vunpack.c.l.b16 %v1340
      %v1813 = vunpack.c.l.b16 %v1341
      %v1814 = vunpack.c.l.b16 %v1342
      %v1815 = vunpack.c.l.b16 %v1343
      %v1816 = vunpack.c.l.b16 %v1344
      %v1817 = vunpack.c.l.b16 %v1345
      %v1818 = vunpack.c.l.b16 %v1346
      %v1819 = vunpack.c.l.b16 %v1347
      %v1820 = vunpack.c.l.b16 %v1348
      %v1821 = vunpack.c.l.b16 %v1349
      %v1822 = vunpack.c.l.b16 %v1350
      %v1823 = vunpack.c.l.b16 %v1351
      %v1824 = vunpack.c.l.b16 %v1352
      %v1825 = vunpack.c.l.b16 %v1353
      %v1826 = vunpack.c.l.b16 %v1354
      %v1827 = vunpack.c.l.b16 %v1355
      %v1828 = vunpack.c.l.b16 %v1356
      %v1829 = vunpack.c.l.b16 %v1357
      %v1830 = vunpack.c.l.b16 %v1358
      %v1831 = vunpack.c.l.b16 %v1359
      %v1832 = vunpack.c.l.b16 %v1360
      %v1833 = vunpack.c.l.b16 %v1361
      %v1834 = vunpack.c.l.b16 %v1362
      %v1835 = vunpack.c.l.b16 %v1363
      %v1836 = vunpack.c.l.b16 %v1364
      %v1837 = vunpack.c.l.b16 %v1365
      %v1838 = vunpack.c.l.b16 %v1366
      %v1839 = vunpack.c.l.b16 %v1367
      %v1840 = vunpack.c.l.b16 %v1368
      %v1841 = vunpack.c.l.b16 %v1369
      %v1842 = vunpack.c.l.b16 %v1370
      %v1843 = vunpack.c.l.b16 %v1371
      %v1844 = vunpack.c.l.b16 %v1372
      %v1845 = vunpack.c.l.b16 %v1373
      %v1846 = vunpack.c.l.b16 %v1374
      %v1847 = vunpack.c.l.b16 %v1375
      %v1848 = vunpack.c.l.b16 %v1376
      %v1849 = vunpack.c.l.b16 %v1377
      %v1850 = vunpack.c.l.b16 %v1378
      %v1851 = vunpack.c.l.b16 %v1379
      %v1852 = vunpack.c.l.b16 %v1380
      %v1853 = vunpack.c.l.b16 %v1381
      %v1854 = vunpack.c.l.b16 %v1382
      %v1855 = vunpack.c.l.b16 %v1383
      %v1856 = vunpack.c.l.b16 %v1384
      %v1857 = vunpack.c.l.b16 %v1385
      %v1858 = vunpack.c.l.b16 %v1386
      %v1859 = vunpack.c.l.b16 %v1387
      %v1860 = vunpack.c.l.b16 %v1388
      %v1861 = vunpack.c.l.b16 %v1389
      %v1862 = vunpack.c.l.b16 %v1390
      %v1863 = vunpack.c.l.b16 %v1391
      %v1864 = vunpack.c.l.b16 %v1392
      %v1865 = vunpack.c.l.b16 %v1393
      %v1866 = vunpack.c.l.b16 %v1394
      %v1867 = vunpack.c.l.b16 %v1395
      %v1868 = vunpack.c.l.b16 %v1396
      %v1869 = vunpack.c.l.b16 %v1397
      %v1870 = vunpack.c.l.b16 %v1398
      %v1871 = vunpack.c.l.b16 %v1399
      %v1872 = vunpack.c.l.b16 %v1400
      %v1873 = vunpack.c.l.b16 %v1401
      %v1874 = vunpack.c.l.b16 %v1402
      %v1875 = vunpack.c.l.b16 %v1403
      %v1876 = vunpack.c.l.b16 %v1404
      %v1877 = vunpack.c.l.b16 %v1405
      %v1878 = vunpack.c.l.b16 %v1406
      %v1879 = vunpack.c.l.b16 %v1407
      %v1880 = vunpack.c.l.b16 %v1408
      %v1881 = vunpack.c.l.b16 %v1409
      %v1882 = vunpack.c.l.b16 %v1410
      %v1883 = vunpack.c.l.b16 %v1411
      %v1884 = vunpack.c.l.b16 %v1412
      %v1885 = vunpack.c.l.b16 %v1413
      %v1886 = vunpack.c.l.b16 %v1414
      %v1887 = vunpack.c.l.b16 %v1415
      %v1888 = vunpack.c.l.b16 %v1416
      %v1889 = vunpack.c.l.b16 %v1417
      %v1890 = vunpack.c.l.b16 %v1418
      %v1891 = vunpack.c.l.b16 %v1419
      %v1892 = vunpack.c.l.b16 %v1420
      %v1893 = vunpack.c.l.b16 %v1421
      %v1894 = vunpack.c.l.b16 %v1422
      %v1895 = vpack.c.b16 %v1752, %v1751
      %v1896 = vpack.c.b16 %v1754, %v1753
      %v1897 = vpack.c.b16 %v1756, %v1755
      %v1898 = vpack.c.b16 %v1758, %v1757
      %v1899 = vpack.c.b16 %v1760, %v1759
      %v1900 = vpack.c.b16 %v1762, %v1761
      %v1901 = vpack.c.b16 %v1764, %v1763
      %v1902 = vpack.c.b16 %v1766, %v1765
      %v1903 = vpack.c.b16 %v1768, %v1767
      %v1904 = vpack.c.b16 %v1770, %v1769
      %v1905 = vpack.c.b16 %v1772, %v1771
      %v1906 = vpack.c.b16 %v1774, %v1773
      %v1907 = vpack.c.b16 %v1776, %v1775
      %v1908 = vpack.c.b16 %v1778, %v1777
      %v1909 = vpack.c.b16 %v1780, %v1779
      %v1910 = vpack.c.b16 %v1782, %v1781
      %v1911 = vpack.c.b16 %v1784, %v1783
      %v1912 = vpack.c.b16 %v1786, %v1785
      %v1913 = vpack.c.b16 %v1788, %v1787
      %v1914 = vpack.c.b16 %v1790, %v1789
      %v1915 = vpack.c.b16 %v1792, %v1791
      %v1916 = vpack.c.b16 %v1794, %v1793
      %v1917 = vpack.c.b16 %v1796, %v1795
      %v1918 = vpack.c.b16 %v1798, %v1797
      %v1919 = vpack.c.b16 %v1800, %v1799
      %v1920 = vpack.c.b16 %v1802, %v1801
      %v1921 = vpack.c.b16 %v1804, %v1803
      %v1922 = vpack.c.b16 %v1806, %v1805
      %v1923 = vpack.c.b16 %v1808, %v1807
      %v1924 = vpack.c.b16 %v1810, %v1809
      %v1925 = vpack.c.b16 %v1812, %v1811
      %v1926 = vpack.c.b16 %v1814, %v1813
      %v1927 = vpack.c.b16 %v1816, %v1815
      %v1928 = vpack.c.b16 %v1818, %v1817
      %v1929 = vpack.c.b16 %v1820, %v1819
      %v1930 = vpack.c.b16 %v1822, %v1821
      %v1931 = vpack.c.b16 %v1824, %v1823
      %v1932 = vpack.c.b16 %v1826, %v1825
      %v1933 = vpack.c.b16 %v1828, %v1827
      %v1934 = vpack.c.b16 %v1830, %v1829
      %v1935 = vpack.c.b16 %v1832, %v1831
      %v1936 = vpack.c.b16 %v1834, %v1833
      %v1937 = vpack.c.b16 %v1836, %v1835
      %v1938 = vpack.c.b16 %v1838, %v1837
      %v1939 = vpack.c.b16 %v1840, %v1839
      %v1940 = vpack.c.b16 %v1842, %v1841
      %v1941 = vpack.c.b16 %v1844, %v1843
      %v1942 = vpack.c.b16 %v1846, %v1845
      %v1943 = vpack.c.b16 %v1848, %v1847
      %v1944 = vpack.c.b16 %v1850, %v1849
      %v1945 = vpack.c.b16 %v1852, %v1851
      %v1946 = vpack.c.b16 %v1854, %v1853
      %v1947 = vpack.c.b16 %v1856, %v1855
      %v1948 = vpack.c.b16 %v1858, %v1857
      %v1949 = vpack.c.b16 %v1860, %v1859
      %v1950 = vpack.c.b16 %v1862, %v1861
      %v1951 = vpack.c.b16 %v1864, %v1863
      %v1952 = vpack.c.b16 %v1866, %v1865
      %v1953 = vpack.c.b16 %v1868, %v1867
      %v1954 = vpack.c.b16 %v1870, %v1869
      %v1955 = vpack.c.b16 %v1872, %v1871
      %v1956 = vpack.c.b16 %v1874, %v1873
      %v1957 = vpack.c.b16 %v1876, %v1875
      %v1958 = vpack.c.b16 %v1878, %v1877
      %v1959 = vpack.c.b16 %v1880, %v1879
      %v1960 = vpack.c.b16 %v1882, %v1881
      %v1961 = vpack.c.b16 %v1884, %v1883
      %v1962 = vpack.c.b16 %v1886, %v1885
      %v1963 = vpack.c.b16 %v1888, %v1887
      %v1964 = vpack.c.b16 %v1890, %v1889
      %v1965 = vpack.c.b16 %v1892, %v1891
      %v1966 = vpack.c.b16 %v1894, %v1893
      %2039 = vmatprep.subr.bf16.mxu0 0
      %2040 = vmatpush1.bf16.msra.mxu0 %v1902
      %2041 = vmatprep.subr.bf16.mxu0 0
      %2042 = vmatpush1.bf16.msra.mxu0 %v1901
      %2043 = vmatprep.subr.bf16.mxu0 0
      %2044 = vmatpush1.bf16.msra.mxu0 %v1900
      %2045 = vmatprep.subr.bf16.mxu0 0
      %2046 = vmatpush1.bf16.msra.mxu0 %v1899
      %2047 = vmatprep.subr.bf16.mxu0 0
      %2048 = vmatpush1.bf16.msra.mxu0 %v1898
      %2049 = vmatprep.subr.bf16.mxu0 0
      %2050 = vmatpush1.bf16.msra.mxu0 %v1897
      %2051 = vmatprep.subr.bf16.mxu0 0
      %2052 = vmatpush1.bf16.msra.mxu0 %v1896
      %2053 = vmatprep.subr.bf16.mxu0 0
      %2054 = vmatpush1.bf16.msra.mxu0 %v1895
      %2055 = vmatprep.subr.bf16.mxu0 0
      %2056 = vmatpush2.bf16.msra.mxu0 %v1910
      %2057 = vmatprep.subr.bf16.mxu0 0
      %2058 = vmatpush2.bf16.msra.mxu0 %v1909
      %2059 = vmatprep.subr.bf16.mxu0 0
      %2060 = vmatpush2.bf16.msra.mxu0 %v1908
      %2061 = vmatprep.subr.bf16.mxu0 0
      %2062 = vmatpush2.bf16.msra.mxu0 %v1907
      %2063 = vmatprep.subr.bf16.mxu0 0
      %2064 = vmatpush2.bf16.msra.mxu0 %v1906
      %2065 = vmatprep.subr.bf16.mxu0 0
      %2066 = vmatpush2.bf16.msra.mxu0 %v1905
      %2067 = vmatprep.subr.bf16.mxu0 0
      %2068 = vmatpush2.bf16.msra.mxu0 %v1904
      %2069 = vmatprep.subr.bf16.mxu0 0
      %2070 = vmatpush2.bf16.msra.mxu0 %v1903
      %2071 = vmatprep.mubr.bf16.mxu0 %v1536
      %2072 = vmatmul.mubr.bf16.gmra.mxu0 %v1535
      %v2073 = vpop.f32.mrf.mxu0
      %v2074 = vadd.f32 0.0, %v2073
      %v2075 = vpop.f32.mrf.mxu0
      %v2076 = vpop.f32.mrf.mxu0
      %v2077 = vadd.f32 0.0, %v2076
      %v2078 = vpop.f32.mrf.mxu0
      %2079 = vmatprep.mubr.bf16.mxu0 %v1545
      %2080 = vmatmul.mubr.bf16.gmra.mxu0 %v1544
      %v2081 = vpop.f32.mrf.mxu0
      %v2082 = vadd.f32 0.0, %v2081
      %v2083 = vpop.f32.mrf.mxu0
      %v2084 = vpop.f32.mrf.mxu0
      %v2085 = vadd.f32 0.0, %v2084
      %v2086 = vpop.f32.mrf.mxu0
      %2087 = vmatprep.mubr.bf16.mxu0 %v1554
      %2088 = vmatmul.mubr.bf16.gmra.mxu0 %v1553
      %v2089 = vpop.f32.mrf.mxu0
      %v2090 = vadd.f32 0.0, %v2089
      %v2091 = vpop.f32.mrf.mxu0
      %v2092 = vpop.f32.mrf.mxu0
      %v2093 = vadd.f32 0.0, %v2092
      %v2094 = vpop.f32.mrf.mxu0
      %2095 = vmatprep.mubr.bf16.mxu0 %v1563
      %2096 = vmatmul.mubr.bf16.gmra.mxu0 %v1562
      %v2097 = vpop.f32.mrf.mxu0
      %v2098 = vadd.f32 0.0, %v2097
      %v2099 = vpop.f32.mrf.mxu0
      %v2100 = vpop.f32.mrf.mxu0
      %v2101 = vadd.f32 0.0, %v2100
      %v2102 = vpop.f32.mrf.mxu0
      %2103 = vdwg.mxu0
      %2104 = vmatprep.subr.bf16.mxu0 0
      %2105 = vmatpush1.bf16.msra.mxu0 %v1918
      %2106 = vmatprep.subr.bf16.mxu0 0
      %2107 = vmatpush1.bf16.msra.mxu0 %v1917
      %2108 = vmatprep.subr.bf16.mxu0 0
      %2109 = vmatpush1.bf16.msra.mxu0 %v1916
      %2110 = vmatprep.subr.bf16.mxu0 0
      %2111 = vmatpush1.bf16.msra.mxu0 %v1915
      %2112 = vmatprep.subr.bf16.mxu0 0
      %2113 = vmatpush1.bf16.msra.mxu0 %v1914
      %2114 = vmatprep.subr.bf16.mxu0 0
      %2115 = vmatpush1.bf16.msra.mxu0 %v1913
      %2116 = vmatprep.subr.bf16.mxu0 0
      %2117 = vmatpush1.bf16.msra.mxu0 %v1912
      %2118 = vmatprep.subr.bf16.mxu0 0
      %2119 = vmatpush1.bf16.msra.mxu0 %v1911
      %2120 = vmatprep.subr.bf16.mxu0 0
      %2121 = vmatpush2.bf16.msra.mxu0 %v1926
      %2122 = vmatprep.subr.bf16.mxu0 0
      %2123 = vmatpush2.bf16.msra.mxu0 %v1925
      %2124 = vmatprep.subr.bf16.mxu0 0
      %2125 = vmatpush2.bf16.msra.mxu0 %v1924
      %2126 = vmatprep.subr.bf16.mxu0 0
      %2127 = vmatpush2.bf16.msra.mxu0 %v1923
      %2128 = vmatprep.subr.bf16.mxu0 0
      %2129 = vmatpush2.bf16.msra.mxu0 %v1922
      %2130 = vmatprep.subr.bf16.mxu0 0
      %2131 = vmatpush2.bf16.msra.mxu0 %v1921
      %2132 = vmatprep.subr.bf16.mxu0 0
      %2133 = vmatpush2.bf16.msra.mxu0 %v1920
      %2134 = vmatprep.subr.bf16.mxu0 0
      %2135 = vmatpush2.bf16.msra.mxu0 %v1919
      %2136 = vmatprep.mubr.bf16.mxu0 %v1538
      %2137 = vmatmul.mubr.bf16.gmra.mxu0 %v1537
      %v2138 = vpop.f32.mrf.mxu0
      %v2139 = vadd.f32 %v2074, %v2138
      %v2140 = vpop.f32.mrf.mxu0
      %v2141 = vpop.f32.mrf.mxu0
      %v2142 = vadd.f32 %v2077, %v2141
      %v2143 = vpop.f32.mrf.mxu0
      %2144 = vmatprep.mubr.bf16.mxu0 %v1547
      %2145 = vmatmul.mubr.bf16.gmra.mxu0 %v1546
      %v2146 = vpop.f32.mrf.mxu0
      %v2147 = vadd.f32 %v2082, %v2146
      %v2148 = vpop.f32.mrf.mxu0
      %v2149 = vpop.f32.mrf.mxu0
      %v2150 = vadd.f32 %v2085, %v2149
      %v2151 = vpop.f32.mrf.mxu0
      %2152 = vmatprep.mubr.bf16.mxu0 %v1556
      %2153 = vmatmul.mubr.bf16.gmra.mxu0 %v1555
      %v2154 = vpop.f32.mrf.mxu0
      %v2155 = vadd.f32 %v2090, %v2154
      %v2156 = vpop.f32.mrf.mxu0
      %v2157 = vpop.f32.mrf.mxu0
      %v2158 = vadd.f32 %v2093, %v2157
      %v2159 = vpop.f32.mrf.mxu0
      %2160 = vmatprep.mubr.bf16.mxu0 %v1565
      %2161 = vmatmul.mubr.bf16.gmra.mxu0 %v1564
      %v2162 = vpop.f32.mrf.mxu0
      %v2163 = vadd.f32 %v2098, %v2162
      %v2164 = vpop.f32.mrf.mxu0
      %v2165 = vpop.f32.mrf.mxu0
      %v2166 = vadd.f32 %v2101, %v2165
      %v2167 = vpop.f32.mrf.mxu0
      %2168 = vdwg.mxu0
      %2169 = vmatprep.subr.bf16.mxu0 0
      %2170 = vmatpush1.bf16.msra.mxu0 %v1934
      %2171 = vmatprep.subr.bf16.mxu0 0
      %2172 = vmatpush1.bf16.msra.mxu0 %v1933
      %2173 = vmatprep.subr.bf16.mxu0 0
      %2174 = vmatpush1.bf16.msra.mxu0 %v1932
      %2175 = vmatprep.subr.bf16.mxu0 0
      %2176 = vmatpush1.bf16.msra.mxu0 %v1931
      %2177 = vmatprep.subr.bf16.mxu0 0
      %2178 = vmatpush1.bf16.msra.mxu0 %v1930
      %2179 = vmatprep.subr.bf16.mxu0 0
      %2180 = vmatpush1.bf16.msra.mxu0 %v1929
      %2181 = vmatprep.subr.bf16.mxu0 0
      %2182 = vmatpush1.bf16.msra.mxu0 %v1928
      %2183 = vmatprep.subr.bf16.mxu0 0
      %2184 = vmatpush1.bf16.msra.mxu0 %v1927
      %2185 = vmatprep.subr.bf16.mxu0 0
      %2186 = vmatpush2.bf16.msra.mxu0 %v1942
      %2187 = vmatprep.subr.bf16.mxu0 0
      %2188 = vmatpush2.bf16.msra.mxu0 %v1941
      %2189 = vmatprep.subr.bf16.mxu0 0
      %2190 = vmatpush2.bf16.msra.mxu0 %v1940
      %2191 = vmatprep.subr.bf16.mxu0 0
      %2192 = vmatpush2.bf16.msra.mxu0 %v1939
      %2193 = vmatprep.subr.bf16.mxu0 0
      %2194 = vmatpush2.bf16.msra.mxu0 %v1938
      %2195 = vmatprep.subr.bf16.mxu0 0
      %2196 = vmatpush2.bf16.msra.mxu0 %v1937
      %2197 = vmatprep.subr.bf16.mxu0 0
      %2198 = vmatpush2.bf16.msra.mxu0 %v1936
      %2199 = vmatprep.subr.bf16.mxu0 0
      %2200 = vmatpush2.bf16.msra.mxu0 %v1935
      %2201 = vmatprep.mubr.bf16.mxu0 %v1540
      %2202 = vmatmul.mubr.bf16.gmra.mxu0 %v1539
      %v2203 = vpop.f32.mrf.mxu0
      %v2204 = vadd.f32 %v2139, %v2203
      %v2205 = vpop.f32.mrf.mxu0
      %v2206 = vpop.f32.mrf.mxu0
      %v2207 = vadd.f32 %v2142, %v2206
      %v2208 = vpop.f32.mrf.mxu0
      %2209 = vmatprep.mubr.bf16.mxu0 %v1549
      %2210 = vmatmul.mubr.bf16.gmra.mxu0 %v1548
      %v2211 = vpop.f32.mrf.mxu0
      %v2212 = vadd.f32 %v2147, %v2211
      %v2213 = vpop.f32.mrf.mxu0
      %v2214 = vpop.f32.mrf.mxu0
      %v2215 = vadd.f32 %v2150, %v2214
      %v2216 = vpop.f32.mrf.mxu0
      %2217 = vmatprep.mubr.bf16.mxu0 %v1558
      %2218 = vmatmul.mubr.bf16.gmra.mxu0 %v1557
      %v2219 = vpop.f32.mrf.mxu0
      %v2220 = vadd.f32 %v2155, %v2219
      %v2221 = vpop.f32.mrf.mxu0
      %v2222 = vpop.f32.mrf.mxu0
      %v2223 = vadd.f32 %v2158, %v2222
      %v2224 = vpop.f32.mrf.mxu0
      %2225 = vmatprep.mubr.bf16.mxu0 %v1567
      %2226 = vmatmul.mubr.bf16.gmra.mxu0 %v1566
      %v2227 = vpop.f32.mrf.mxu0
      %v2228 = vadd.f32 %v2163, %v2227
      %v2229 = vpop.f32.mrf.mxu0
      %v2230 = vpop.f32.mrf.mxu0
      %v2231 = vadd.f32 %v2166, %v2230
      %v2232 = vpop.f32.mrf.mxu0
      %2233 = vdwg.mxu0
      %2234 = vmatprep.subr.bf16.mxu0 0
      %2235 = vmatpush1.bf16.msra.mxu0 %v1950
      %2236 = vmatprep.subr.bf16.mxu0 0
      %2237 = vmatpush1.bf16.msra.mxu0 %v1949
      %2238 = vmatprep.subr.bf16.mxu0 0
      %2239 = vmatpush1.bf16.msra.mxu0 %v1948
      %2240 = vmatprep.subr.bf16.mxu0 0
      %2241 = vmatpush1.bf16.msra.mxu0 %v1947
      %2242 = vmatprep.subr.bf16.mxu0 0
      %2243 = vmatpush1.bf16.msra.mxu0 %v1946
      %2244 = vmatprep.subr.bf16.mxu0 0
      %2245 = vmatpush1.bf16.msra.mxu0 %v1945
      %2246 = vmatprep.subr.bf16.mxu0 0
      %2247 = vmatpush1.bf16.msra.mxu0 %v1944
      %2248 = vmatprep.subr.bf16.mxu0 0
      %2249 = vmatpush1.bf16.msra.mxu0 %v1943
      %2250 = vmatprep.subr.bf16.mxu0 0
      %2251 = vmatpush2.bf16.msra.mxu0 %v1958
      %2252 = vmatprep.subr.bf16.mxu0 0
      %2253 = vmatpush2.bf16.msra.mxu0 %v1957
      %2254 = vmatprep.subr.bf16.mxu0 0
      %2255 = vmatpush2.bf16.msra.mxu0 %v1956
      %2256 = vmatprep.subr.bf16.mxu0 0
      %2257 = vmatpush2.bf16.msra.mxu0 %v1955
      %2258 = vmatprep.subr.bf16.mxu0 0
      %2259 = vmatpush2.bf16.msra.mxu0 %v1954
      %2260 = vmatprep.subr.bf16.mxu0 0
      %2261 = vmatpush2.bf16.msra.mxu0 %v1953
      %2262 = vmatprep.subr.bf16.mxu0 0
      %2263 = vmatpush2.bf16.msra.mxu0 %v1952
      %2264 = vmatprep.subr.bf16.mxu0 0
      %2265 = vmatpush2.bf16.msra.mxu0 %v1951
      %2266 = vmatprep.mubr.bf16.mxu0 %v1542
      %2267 = vmatmul.mubr.bf16.gmra.mxu0 %v1541
      %v2268 = vpop.f32.mrf.mxu0
      %v2269 = vadd.f32 %v2204, %v2268
      %v2270 = vpop.f32.mrf.mxu0
      %v2271 = vpop.f32.mrf.mxu0
      %v2272 = vadd.f32 %v2207, %v2271
      %v2273 = vpop.f32.mrf.mxu0
      %2274 = vmatprep.mubr.bf16.mxu0 %v1551
      %2275 = vmatmul.mubr.bf16.gmra.mxu0 %v1550
      %v2276 = vpop.f32.mrf.mxu0
      %v2277 = vadd.f32 %v2212, %v2276
      %v2278 = vpop.f32.mrf.mxu0
      %v2279 = vpop.f32.mrf.mxu0
      %v2280 = vadd.f32 %v2215, %v2279
      %v2281 = vpop.f32.mrf.mxu0
      %2282 = vmatprep.mubr.bf16.mxu0 %v1560
      %2283 = vmatmul.mubr.bf16.gmra.mxu0 %v1559
      %v2284 = vpop.f32.mrf.mxu0
      %v2285 = vadd.f32 %v2220, %v2284
      %v2286 = vpop.f32.mrf.mxu0
      %v2287 = vpop.f32.mrf.mxu0
      %v2288 = vadd.f32 %v2223, %v2287
      %v2289 = vpop.f32.mrf.mxu0
      %2290 = vmatprep.mubr.bf16.mxu0 %v1569
      %2291 = vmatmul.mubr.bf16.gmra.mxu0 %v1568
      %v2292 = vpop.f32.mrf.mxu0
      %v2293 = vadd.f32 %v2228, %v2292
      %v2294 = vpop.f32.mrf.mxu0
      %v2295 = vpop.f32.mrf.mxu0
      %v2296 = vadd.f32 %v2231, %v2295
      %v2297 = vpop.f32.mrf.mxu0
      %2298 = vdwg.mxu0
      %2299 = vmatprep.subr.bf16.mxu0 0
      %2300 = vmatpush1.bf16.msra.mxu0 %v1966
      %2301 = vmatprep.subr.bf16.mxu0 0
      %2302 = vmatpush1.bf16.msra.mxu0 %v1965
      %2303 = vmatprep.subr.bf16.mxu0 0
      %2304 = vmatpush1.bf16.msra.mxu0 %v1964
      %2305 = vmatprep.subr.bf16.mxu0 0
      %2306 = vmatpush1.bf16.msra.mxu0 %v1963
      %2307 = vmatprep.subr.bf16.mxu0 0
      %2308 = vmatpush1.bf16.msra.mxu0 %v1962
      %2309 = vmatprep.subr.bf16.mxu0 0
      %2310 = vmatpush1.bf16.msra.mxu0 %v1961
      %2311 = vmatprep.subr.bf16.mxu0 0
      %2312 = vmatpush1.bf16.msra.mxu0 %v1960
      %2313 = vmatprep.subr.bf16.mxu0 0
      %2314 = vmatpush1.bf16.msra.mxu0 %v1959
      %2315 = vmatprep.subr.bf16.mxu0 0
      %2316 = vmatpush2.bf16.msra.mxu0 0
      %2317 = vmatprep.subr.bf16.mxu0 0
      %2318 = vmatpush2.bf16.msra.mxu0 0
      %2319 = vmatprep.subr.bf16.mxu0 0
      %2320 = vmatpush2.bf16.msra.mxu0 0
      %2321 = vmatprep.subr.bf16.mxu0 0
      %2322 = vmatpush2.bf16.msra.mxu0 0
      %2323 = vmatprep.subr.bf16.mxu0 0
      %2324 = vmatpush2.bf16.msra.mxu0 0
      %2325 = vmatprep.subr.bf16.mxu0 0
      %2326 = vmatpush2.bf16.msra.mxu0 0
      %2327 = vmatprep.subr.bf16.mxu0 0
      %2328 = vmatpush2.bf16.msra.mxu0 0
      %2329 = vmatprep.subr.bf16.mxu0 0
      %2330 = vmatpush2.bf16.msra.mxu0 0
      %2331 = vmatprep.mubr.bf16.mxu0 0
      %2332 = vmatmul.mubr.bf16.gmra.mxu0 %v1543
      %v2333 = vpop.f32.mrf.mxu0
      %v2334 = vadd.f32 %v2269, %v2333
      %v2335 = vpop.f32.mrf.mxu0
      %v2336 = vpop.f32.mrf.mxu0
      %v2337 = vadd.f32 %v2272, %v2336
      %v2338 = vpop.f32.mrf.mxu0
      %2339 = vmatprep.mubr.bf16.mxu0 0
      %2340 = vmatmul.mubr.bf16.gmra.mxu0 %v1552
      %v2341 = vpop.f32.mrf.mxu0
      %v2342 = vadd.f32 %v2277, %v2341
      %v2343 = vpop.f32.mrf.mxu0
      %v2344 = vpop.f32.mrf.mxu0
      %v2345 = vadd.f32 %v2280, %v2344
      %v2346 = vpop.f32.mrf.mxu0
      %2347 = vmatprep.mubr.bf16.mxu0 0
      %2348 = vmatmul.mubr.bf16.gmra.mxu0 %v1561
      %v2349 = vpop.f32.mrf.mxu0
      %v2350 = vadd.f32 %v2285, %v2349
      %v2351 = vpop.f32.mrf.mxu0
      %v2352 = vpop.f32.mrf.mxu0
      %v2353 = vadd.f32 %v2288, %v2352
      %v2354 = vpop.f32.mrf.mxu0
      %2355 = vmatprep.mubr.bf16.mxu0 0
      %2356 = vmatmul.mubr.bf16.gmra.mxu0 %v1570
      %v2357 = vpop.f32.mrf.mxu0
      %v2358 = vadd.f32 %v2293, %v2357
      %v2359 = vpop.f32.mrf.mxu0
      %v2360 = vpop.f32.mrf.mxu0
      %v2361 = vadd.f32 %v2296, %v2360
      %v2362 = vpop.f32.mrf.mxu0
      %2363 = vdwg.mxu0
      %v2364 = vpack.c.bf16 %v2337, %v2334
      %v2365 = vpack.c.bf16 %v2345, %v2342
      %v2366 = vpack.c.bf16 %v2353, %v2350
      %v2367 = vpack.c.bf16 %v2361, %v2358
      %v2372 = vunpack.c.l.b16 %v2364
      %v2373 = vunpack.c.h.b16 %v2364
      %v2374 = vunpack.c.l.b16 %v2365
      %v2375 = vunpack.c.h.b16 %v2365
      %v2376 = vunpack.c.l.b16 %v2366
      %v2377 = vunpack.c.h.b16 %v2366
      %v2378 = vunpack.c.l.b16 %v2367
      %v2379 = vunpack.c.h.b16 %v2367
      %v2380 = vpack.c.b16 %v2372, %v2372
      %v2381 = vpack.c.b16 %v2373, %v2373
      %v2382 = vpack.c.b16 %v2374, %v2374
      %v2383 = vpack.c.b16 %v2375, %v2375
      %v2384 = vpack.c.b16 %v2376, %v2376
      %v2385 = vpack.c.b16 %v2377, %v2377
      %v2386 = vpack.c.b16 %v2378, %v2378
      %v2387 = vpack.c.b16 %v2379, %v2379
      %2396 = vst [vmem:[%s231] sm:$0xf] %v2380
      %2397 = vst [vmem:[%s231 + $0x4] sm:$0xf] %v2381
      %2398 = vst [vmem:[%s231 + $0x8] sm:$0xf] %v2382
      %2399 = vst [vmem:[%s231 + $0xc] sm:$0xf] %v2383
      %2400 = vst [vmem:[%s231 + $0x10] sm:$0xf] %v2384
      %2401 = vst [vmem:[%s231 + $0x14] sm:$0xf] %v2385
      %2402 = vst [vmem:[%s231 + $0x18] sm:$0xf] %v2386
      %2403 = vst [vmem:[%s231 + $0x1c] sm:$0xf] %v2387
      %v2404 = vadd.f32 %v2334, %v2337
      %v2405 = vadd.f32 %v2404, %v2342
      %v2406 = vadd.f32 %v2405, %v2345
      %v2407 = vadd.f32 %v2406, %v2350
      %v2408 = vadd.f32 %v2407, %v2353
      %v2409 = vadd.f32 %v2408, %v2358
      %v2410 = vadd.f32 %v2409, %v2361
      %v2411 = vrot.slane %v2410, 4
      %v2412 = vadd.f32 %v2410, %v2411
      %v2413 = vrot.slane %v2412, 2
      %v2414 = vadd.f32 %v2412, %v2413
      %v2415 = vrot.slane %v2414, 1
      %v2416 = vadd.f32 %v2414, %v2415
      %v2417 = vmul.f32 %v2334, %v2334
      %v2418 = vmul.f32 %v2337, %v2337
      %v2419 = vmul.f32 %v2342, %v2342
      %v2420 = vmul.f32 %v2345, %v2345
      %v2421 = vmul.f32 %v2350, %v2350
      %v2422 = vmul.f32 %v2353, %v2353
      %v2423 = vmul.f32 %v2358, %v2358
      %v2424 = vmul.f32 %v2361, %v2361
      %v2425 = vadd.f32 %v2417, %v2418
      %v2426 = vadd.f32 %v2425, %v2419
      %v2427 = vadd.f32 %v2426, %v2420
      %v2428 = vadd.f32 %v2427, %v2421
      %v2429 = vadd.f32 %v2428, %v2422
      %v2430 = vadd.f32 %v2429, %v2423
      %v2431 = vadd.f32 %v2430, %v2424
      %v2432 = vrot.slane %v2431, 4
      %v2433 = vadd.f32 %v2431, %v2432
      %v2434 = vrot.slane %v2433, 2
      %v2435 = vadd.f32 %v2433, %v2434
      %v2436 = vrot.slane %v2435, 1
      %v2437 = vadd.f32 %v2435, %v2436
      %vm2438 = vcmask 1040384
      %v2439 = vsel %vm2438, %v2416, %v2437
      %2440 = vst [vmem:[%s235] sm:$0x3] %v2439
      %p2441 = scmp.lt.s32.totalorder %s17, 1
      %s2442 = scalar_select %p2441, %s17, 1
      %s2443 = smul.addr %s2442, 8
      %s2444 = smul.addr %s2443, 4
      %s2445 = scalar_lea.vmem %s4, %s2444
      %p2446 = scmp.lt.s32.totalorder %s17, 1
      %s2447 = scalar_select %p2446, %s17, 1
      %s2448 = smul.addr %s2447, 2
      %s2449 = scalar_lea.vmem %s5, %s2448
      // Predicated region
      $region37: #{_lambda_.5} parent=35 // pred_check
        %p2450 = pneg %p124
      $region38: #{_lambda_.5} parent=35 // pred_check_branch
        %2452 = sbr.rel (%p2450) target = $region40
      $region39: #{_lambda_.5} parent=35 // pred_region
        _
      $region40: #{_lambda_.5} parent=35 // pred_fallthru
        _
      // Predicated region
      $region41: #{_lambda_.5} parent=35 // pred_check
        %p2453 = pneg %p150
      $region42: #{_lambda_.5} parent=35 // pred_check_branch
        %2455 = sbr.rel (%p2453) target = $region44
      $region43: #{_lambda_.5} parent=35 // pred_region
        _
      $region44: #{_lambda_.5} parent=35 // pred_fallthru
        _
    $region36: #{_lambda_.5} parent=5 // pred_fallthru
      _
    %p2456 = scmp.le.s32.totalorder 2, %s12
    // Predicated region
    $region45: #{_lambda_.5} parent=5 // pred_check
      %p2457 = pneg %p2456
    $region46: #{_lambda_.5} parent=5 // pred_check_branch
      %2459 = sbr.rel (%p2457) target = $region48
    $region47: #{_lambda_.5} parent=5 // pred_region
      %s2460 = ssub.s32 %s12, 2
      // Predicated region
      $region49: #{_lambda_.5} parent=47 // pred_check
        %p2461 = pneg %p130
      $region50: #{_lambda_.5} parent=47 // pred_check_branch
        %2463 = sbr.rel (%p2461) target = $region52
      $region51: #{_lambda_.5} parent=47 // pred_region
        %p2464 = scmp.lt.s32.totalorder %s18, 1
        %s2465 = scalar_select %p2464, %s18, 1
        %s2466 = smul.addr %s2465, 8
        %s2467 = smul.addr %s2466, 4
        %s2468 = scalar_lea.vmem %s4, %s2467
      $region52: #{_lambda_.5} parent=47 // pred_fallthru
        _
      // Predicated region
      $region53: #{_lambda_.5} parent=47 // pred_check
        %p2469 = pneg %p156
      $region54: #{_lambda_.5} parent=47 // pred_check_branch
        %2471 = sbr.rel (%p2469) target = $region56
      $region55: #{_lambda_.5} parent=47 // pred_region
        %p2472 = scmp.lt.s32.totalorder %s18, 1
        %s2473 = scalar_select %p2472, %s18, 1
        %s2474 = smul.addr %s2473, 2
        %s2475 = scalar_lea.vmem %s5, %s2474
      $region56: #{_lambda_.5} parent=47 // pred_fallthru
        _
    $region48: #{_lambda_.5} parent=5 // pred_fallthru
      _
  $region6: #{_lambda_.5} parent=0 // loop_footer
    %s16 = sadd.s32 1, %s12
  $region7: #{_lambda_.5} parent=0 // loop_footer_branch
    %11 = sbr.rel target = $region3
  $region8: #{_lambda_.5} parent=0 // loop_exit
    _

</llo_original>
